<compile_context>
chip_gen: v6e
topology: v6e:2x2x1
jax: 0.10.0
libtpu: 0.0.40
codegen_flags: <defaults>
</compile_context>

<pallas_src>
import functools
import math

import jax
import jax.numpy as jnp
from jax.experimental import pallas as pl
from jax.experimental.pallas import tpu as pltpu


# ----------------------------------------------------------------------------
# helpers
# ----------------------------------------------------------------------------
def _fold_bn(bn, eps=1e-5):
    """Eval-mode BN (running stats) -> per-channel (scale, shift) as (1, C) f32."""
    scale = bn['gamma'] / jnp.sqrt(bn['var'] + eps)
    shift = bn['beta'] - bn['mean'] * scale
    c = scale.shape[0]
    return (scale.reshape(1, c).astype(jnp.float32),
            shift.reshape(1, c).astype(jnp.float32))


def _pick_tm(m, cap=256):
    """Largest multiple-of-8 divisor of m that is <= cap (fallback: whole m)."""
    cap = min(cap, m)
    for t in range(cap - cap % 8, 7, -8):
        if m % t == 0:
            return t
    return m


# ----------------------------------------------------------------------------
# Fused 1x1-conv GEMM:
#   out = [residual +] [bn_out(+relu)]( [relu(bn_in(x))] @ W )
# K and N are single full blocks; only M is tiled.
# ----------------------------------------------------------------------------
def _gemm1x1_kernel(*refs, has_pro, has_epi, relu_out, has_res):
    x_ref, w_ref = refs[0], refs[1]
    pos = 2
    if has_pro:
        s_in = refs[pos][...]
        b_in = refs[pos + 1][...]
        pos += 2
        a = jnp.maximum(x_ref[...].astype(jnp.float32) * s_in + b_in, 0.0)
        a = a.astype(jnp.bfloat16)
    else:
        a = x_ref[...].astype(jnp.bfloat16)
    acc = jnp.dot(a, w_ref[...], preferred_element_type=jnp.float32)
    if has_epi:
        s_out = refs[pos][...]
        b_out = refs[pos + 1][...]
        pos += 2
        acc = acc * s_out + b_out
        if relu_out:
            acc = jnp.maximum(acc, 0.0)
    if has_res:
        acc = acc + refs[pos][...].astype(jnp.float32)
        pos += 1
    o_ref = refs[pos]
    o_ref[...] = acc.astype(o_ref.dtype)


def conv1x1_fused(x2d, w_io, bn_in=None, bn_out=None, relu_out=False,
                  residual=None, out_dtype=jnp.float32):
    m, k = x2d.shape
    k2, n = w_io.shape
    assert k == k2
    tm = _pick_tm(m)
    in_specs = [pl.BlockSpec((tm, k), lambda i: (i, 0)),
                pl.BlockSpec((k, n), lambda i: (0, 0))]   # weight: fetched once
    args = [x2d, w_io]
    if bn_in is not None:
        in_specs += [pl.BlockSpec((1, k), lambda i: (0, 0)),
                     pl.BlockSpec((1, k), lambda i: (0, 0))]
        args += [bn_in[0], bn_in[1]]
    if bn_out is not None:
        in_specs += [pl.BlockSpec((1, n), lambda i: (0, 0)),
                     pl.BlockSpec((1, n), lambda i: (0, 0))]
        args += [bn_out[0], bn_out[1]]
    if residual is not None:
        in_specs += [pl.BlockSpec((tm, n), lambda i: (i, 0))]
        args += [residual]
    kernel = functools.partial(_gemm1x1_kernel,
                               has_pro=bn_in is not None,
                               has_epi=bn_out is not None,
                               relu_out=relu_out,
                               has_res=residual is not None)
    return pl.pallas_call(
        kernel,
        out_shape=jax.ShapeDtypeStruct((m, n), out_dtype),
        grid=(m // tm,),
        in_specs=in_specs,
        out_specs=pl.BlockSpec((tm, n), lambda i: (i, 0)),
        compiler_params=pltpu.CompilerParams(
            dimension_semantics=("parallel",)),
    )(*args)


# ----------------------------------------------------------------------------
# Fused 3x3 conv (stride 1): 9-tap loop inside the kernel (no im2col in HBM),
# optional eval-BN(+ReLU) epilogue.  Input is the spatially zero-padded NHWC
# activation; weight is (9, Cin, Cout) bf16.
# ----------------------------------------------------------------------------
def _conv3x3_kernel(*refs, ho, wo, has_epi, relu_out):
    x_ref, w_ref = refs[0], refs[1]
    pos = 2
    cin = x_ref.shape[-1]
    cout = w_ref.shape[-1]
    acc = jnp.zeros((ho * wo, cout), jnp.float32)
    for t in range(9):
        dh, dw = t // 3, t % 3
        patch = x_ref[0, dh:dh + ho, dw:dw + wo, :]        # (ho, wo, cin) f32
        patch = patch.reshape(ho * wo, cin).astype(jnp.bfloat16)
        acc = acc + jnp.dot(patch, w_ref[t],
                            preferred_element_type=jnp.float32)
    if has_epi:
        s_out = refs[pos][...]
        b_out = refs[pos + 1][...]
        pos += 2
        acc = acc * s_out + b_out
        if relu_out:
            acc = jnp.maximum(acc, 0.0)
    o_ref = refs[pos]
    o_ref[...] = acc.reshape(1, ho, wo, cout).astype(o_ref.dtype)


def conv3x3_fused(x_nhwc, w_hwio, stride, bn_out=None, relu_out=False,
                  out_dtype=jnp.float32):
    if stride != 1:
        # TODO(synk): dedicated strided-tap kernel; stride>1 currently computes
        # the stride-1 conv (the per-channel epilogue commutes with spatial
        # subsampling, so it is exact) and subsamples.  Demo uses stride=1.
        y = conv3x3_fused(x_nhwc, w_hwio, 1, bn_out=bn_out,
                          relu_out=relu_out, out_dtype=out_dtype)
        return y[:, ::stride, ::stride, :]
    n, h, w, cin = x_nhwc.shape
    cout = w_hwio.shape[-1]
    xp = jnp.pad(x_nhwc, ((0, 0), (1, 1), (1, 1), (0, 0)))    # conv's zero pad
    w9 = w_hwio.reshape(9, cin, cout).astype(jnp.bfloat16)
    in_specs = [pl.BlockSpec((1, h + 2, w + 2, cin), lambda i: (i, 0, 0, 0)),
                pl.BlockSpec((9, cin, cout), lambda i: (0, 0, 0))]
    args = [xp, w9]
    if bn_out is not None:
        in_specs += [pl.BlockSpec((1, cout), lambda i: (0, 0)),
                     pl.BlockSpec((1, cout), lambda i: (0, 0))]
        args += [bn_out[0], bn_out[1]]
    kernel = functools.partial(_conv3x3_kernel, ho=h, wo=w,
                               has_epi=bn_out is not None, relu_out=relu_out)
    return pl.pallas_call(
        kernel,
        out_shape=jax.ShapeDtypeStruct((n, h, w, cout), out_dtype),
        grid=(n,),
        in_specs=in_specs,
        out_specs=pl.BlockSpec((1, h, w, cout), lambda i: (i, 0, 0, 0)),
        compiler_params=pltpu.CompilerParams(
            dimension_semantics=("parallel",)),
    )(*args)


# ----------------------------------------------------------------------------
# PreActBottleneck forward (matches the PyTorch module, eval-mode BN)
# ----------------------------------------------------------------------------
def preact_bottleneck_forward(params, x_nchw):
    x = jnp.transpose(x_nchw, (0, 2, 3, 1)).astype(jnp.float32)   # NCHW -> NHWC
    n, h, w, cin = x.shape
    stride = params['stride']
    planes = params['conv1'].shape[-1]
    cexp = params['conv3'].shape[-1]

    s1, b1 = _fold_bn(params['bn1'])
    s2, b2 = _fold_bn(params['bn2'])
    s3, b3 = _fold_bn(params['bn3'])

    x_bf = x.astype(jnp.bfloat16)

    # shortcut = conv_sc(relu(bn1(x)))   or   x (identity)
    if 'shortcut' in params:
        xs = x_bf[:, ::stride, ::stride, :]   # 1x1 stride == spatial subsample
        shortcut2d = conv1x1_fused(
            xs.reshape(-1, cin), params['shortcut'].astype(jnp.bfloat16),
            bn_in=(s1, b1), out_dtype=jnp.float32)
    else:
        shortcut2d = x.reshape(-1, cin)       # identity: cin == cexp, stride == 1

    # conv1 (1x1):  act2 = relu(bn2( relu(bn1(x)) @ W1 ))
    act2 = conv1x1_fused(
        x_bf.reshape(-1, cin), params['conv1'].astype(jnp.bfloat16),
        bn_in=(s1, b1), bn_out=(s2, b2), relu_out=True,
        out_dtype=jnp.float32).reshape(n, h, w, planes)

    # conv2 (3x3, stride):  act3 = relu(bn3( conv3x3(act2) ))
    act3 = conv3x3_fused(act2, params['conv2'], stride,
                         bn_out=(s3, b3), relu_out=True,
                         out_dtype=jnp.bfloat16)
    _, ho, wo, _ = act3.shape

    # conv3 (1x1):  out = act3 @ W3 + shortcut  (residual add fused in epilogue)
    out2d = conv1x1_fused(
        act3.reshape(-1, planes), params['conv3'].astype(jnp.bfloat16),
        residual=shortcut2d, out_dtype=jnp.float32)

    out = out2d.reshape(n, ho, wo, cexp)
    return jnp.transpose(out, (0, 3, 1, 2))                      # NHWC -> NCHW


# ----------------------------------------------------------------------------
# Parameter init (deterministic, synthetic) and pure-JAX reference
# ----------------------------------------------------------------------------
def _init_bn(key, c):
    k0, k1, k2, k3 = jax.random.split(key, 4)
    return {'gamma': (1.0 + 0.1 * jax.random.normal(k0, (c,))).astype(jnp.float32),
            'beta': (0.1 * jax.random.normal(k1, (c,))).astype(jnp.float32),
            'mean': (0.1 * jax.random.normal(k2, (c,))).astype(jnp.float32),
            'var': (1.0 + 0.1 * jax.random.uniform(k3, (c,))).astype(jnp.float32)}


def init_params(key, in_planes, planes, stride, expansion=4):
    ks = jax.random.split(key, 8)
    p = {'stride': stride,
         'bn1': _init_bn(ks[0], in_planes),
         'conv1': (jax.random.normal(ks[1], (in_planes, planes)) /
                   math.sqrt(in_planes)).astype(jnp.float32),
         'bn2': _init_bn(ks[2], planes),
         'conv2': (jax.random.normal(ks[3], (3, 3, planes, planes)) /
                   math.sqrt(9 * planes)).astype(jnp.float32),
         'bn3': _init_bn(ks[4], planes),
         'conv3': (jax.random.normal(ks[5], (planes, expansion * planes)) /
                   math.sqrt(planes)).astype(jnp.float32)}
    if stride != 1 or in_planes != expansion * planes:
        p['shortcut'] = (jax.random.normal(ks[6], (in_planes, expansion * planes)) /
                         math.sqrt(in_planes)).astype(jnp.float32)
    return p


def reference_forward(params, x_nchw):
    eps = 1e-5

    def bn(t, p):
        scale = p['gamma'] / jnp.sqrt(p['var'] + eps)
        shift = p['beta'] - p['mean'] * scale
        return t * scale[None, :, None, None] + shift[None, :, None, None]

    def conv(t, w_hwio, stride, pad):
        return jax.lax.conv_general_dilated(
            t, w_hwio, (stride, stride), ((pad, pad), (pad, pad)),
            dimension_numbers=('NCHW', 'HWIO', 'NCHW'),
            precision=jax.lax.Precision.HIGHEST)

    stride = params['stride']
    out = jax.nn.relu(bn(x_nchw, params['bn1']))
    if 'shortcut' in params:
        shortcut = conv(out, params['shortcut'][None, None], stride, 0)
    else:
        shortcut = x_nchw
    out = conv(out, params['conv1'][None, None], 1, 0)
    out = conv(jax.nn.relu(bn(out, params['bn2'])), params['conv2'], stride, 1)
    out = conv(jax.nn.relu(bn(out, params['bn3'])), params['conv3'][None, None], 1, 0)
    return out + shortcut


# ----------------------------------------------------------------------------
if __name__ == "__main__":
    key = jax.random.PRNGKey(0)
    pkey, xkey = jax.random.split(key)

    # in_planes=64, planes=32 (expansion*planes=128 != 64 -> conv shortcut path),
    # stride=1, 16x16 spatial, batch 2.
    in_planes, planes, stride = 64, 32, 1
    params = init_params(pkey, in_planes, planes, stride)

    x = jax.random.normal(xkey, (2, in_planes, 16, 16), dtype=jnp.float32)  # NCHW

    fwd = jax.jit(lambda inp: preact_bottleneck_forward(params, inp))
    out = jax.block_until_ready(fwd(x))

    assert out.shape == (2, 4 * planes, 16, 16), out.shape
    assert bool(jnp.all(jnp.isfinite(out)))

    # correctness vs. pure-JAX reference (loose tolerance: bf16 MXU operands)
    ref = reference_forward(params, x)
    rel = float(jnp.max(jnp.abs(out - ref)) / (jnp.max(jnp.abs(ref)) + 1e-6))
    assert rel < 5e-2, f"max relative error {rel}"

    print("KERNEL_OK")
</pallas_src>

<mosaic_0001>
module attributes {stable_mosaic.version = 11 : i64} {
  func.func @_gemm1x1_kernel(%arg0: i32, %arg1: memref<256x64xbf16, #tpu.memory_space<vmem>>, %arg2: memref<64x32xbf16, #tpu.memory_space<vmem>>, %arg3: memref<1x64xf32, #tpu.memory_space<vmem>>, %arg4: memref<1x64xf32, #tpu.memory_space<vmem>>, %arg5: memref<1x32xf32, #tpu.memory_space<vmem>>, %arg6: memref<1x32xf32, #tpu.memory_space<vmem>>, %arg7: memref<256x32xf32, #tpu.memory_space<vmem>>) attributes {dimension_semantics = [#tpu.dimension_semantics<parallel>], iteration_bounds = array<i64: 2>, scalar_prefetch = 0 : i64, scratch_operands = 0 : i64, tpu.core_type = #tpu.core_type<tc>, window_params = [{transform_indices = @transform_0, window_bounds = array<i64: 256, 64>}, {pipeline_mode = #tpu.pipeline_mode<synchronous>, transform_indices = @transform_1, window_bounds = array<i64: 64, 32>}, {pipeline_mode = #tpu.pipeline_mode<synchronous>, transform_indices = @transform_2, window_bounds = array<i64: 1, 64>}, {pipeline_mode = #tpu.pipeline_mode<synchronous>, transform_indices = @transform_3, window_bounds = array<i64: 1, 64>}, {pipeline_mode = #tpu.pipeline_mode<synchronous>, transform_indices = @transform_4, window_bounds = array<i64: 1, 32>}, {pipeline_mode = #tpu.pipeline_mode<synchronous>, transform_indices = @transform_5, window_bounds = array<i64: 1, 32>}, {transform_indices = @transform_6, window_bounds = array<i64: 256, 32>}]} {
    %c0 = arith.constant 0 : index
    %c0_0 = arith.constant 0 : index
    %0 = vector.load %arg3[%c0, %c0_0] : memref<1x64xf32, #tpu.memory_space<vmem>>, vector<1x64xf32>
    %c0_1 = arith.constant 0 : index
    %c0_2 = arith.constant 0 : index
    %1 = vector.load %arg4[%c0_1, %c0_2] : memref<1x64xf32, #tpu.memory_space<vmem>>, vector<1x64xf32>
    %c0_3 = arith.constant 0 : index
    %c0_4 = arith.constant 0 : index
    %2 = vector.load %arg1[%c0_3, %c0_4] : memref<256x64xbf16, #tpu.memory_space<vmem>>, vector<256x64xbf16>
    %3 = arith.extf %2 : vector<256x64xbf16> to vector<256x64xf32>
    %4 = vector.broadcast %0 : vector<1x64xf32> to vector<256x64xf32>
    %5 = arith.mulf %3, %4 : vector<256x64xf32>
    %6 = vector.broadcast %1 : vector<1x64xf32> to vector<256x64xf32>
    %7 = arith.addf %5, %6 : vector<256x64xf32>
    %cst = arith.constant 0.000000e+00 : f32
    %8 = vector.broadcast %cst : f32 to vector<256x64xf32>
    %9 = arith.maximumf %7, %8 : vector<256x64xf32>
    %10 = arith.truncf %9 : vector<256x64xf32> to vector<256x64xbf16>
    %c0_5 = arith.constant 0 : index
    %c0_6 = arith.constant 0 : index
    %11 = vector.load %arg2[%c0_5, %c0_6] : memref<64x32xbf16, #tpu.memory_space<vmem>>, vector<64x32xbf16>
    %cst_7 = arith.constant dense<0.000000e+00> : vector<256x32xf32>
    %12 = tpu.matmul %10, %11, %cst_7 {dimension_numbers = #tpu.dot_dimension_numbers<[1], [0], [0], [1], [0, 0, 1, 1], [], []>} : vector<256x64xbf16>, vector<64x32xbf16>, vector<256x32xf32> -> vector<256x32xf32>
    %c0_8 = arith.constant 0 : index
    %c0_9 = arith.constant 0 : index
    %13 = vector.load %arg5[%c0_8, %c0_9] : memref<1x32xf32, #tpu.memory_space<vmem>>, vector<1x32xf32>
    %c0_10 = arith.constant 0 : index
    %c0_11 = arith.constant 0 : index
    %14 = vector.load %arg6[%c0_10, %c0_11] : memref<1x32xf32, #tpu.memory_space<vmem>>, vector<1x32xf32>
    %15 = vector.broadcast %13 : vector<1x32xf32> to vector<256x32xf32>
    %16 = arith.mulf %12, %15 : vector<256x32xf32>
    %17 = vector.broadcast %14 : vector<1x32xf32> to vector<256x32xf32>
    %18 = arith.addf %16, %17 : vector<256x32xf32>
    %cst_12 = arith.constant 0.000000e+00 : f32
    %19 = vector.broadcast %cst_12 : f32 to vector<256x32xf32>
    %20 = arith.maximumf %18, %19 : vector<256x32xf32>
    %c0_13 = arith.constant 0 : index
    %c0_14 = arith.constant 0 : index
    %21 = vector.load %arg7[%c0_13, %c0_14] : memref<256x32xf32, #tpu.memory_space<vmem>>, vector<256x32xf32>
    tpu.vector_store %arg7[%c0_13, %c0_14], %20 {strides = array<i32>} : memref<256x32xf32, #tpu.memory_space<vmem>>, vector<256x32xf32>,
    return
  }
  func.func @transform_0(%arg0: i32) -> (i32, i32) {
    %c0_i32 = arith.constant 0 : i32
    %c0_i32_0 = arith.constant 0 : i32
    return %arg0, %c0_i32 : i32, i32
  }
  func.func @transform_1(%arg0: i32) -> (i32, i32) {
    %c0_i32 = arith.constant 0 : i32
    %c0_i32_0 = arith.constant 0 : i32
    %c0_i32_1 = arith.constant 0 : i32
    return %c0_i32, %c0_i32_0 : i32, i32
  }
  func.func @transform_2(%arg0: i32) -> (i32, i32) {
    %c0_i32 = arith.constant 0 : i32
    %c0_i32_0 = arith.constant 0 : i32
    %c0_i32_1 = arith.constant 0 : i32
    return %c0_i32, %c0_i32_0 : i32, i32
  }
  func.func @transform_3(%arg0: i32) -> (i32, i32) {
    %c0_i32 = arith.constant 0 : i32
    %c0_i32_0 = arith.constant 0 : i32
    %c0_i32_1 = arith.constant 0 : i32
    return %c0_i32, %c0_i32_0 : i32, i32
  }
  func.func @transform_4(%arg0: i32) -> (i32, i32) {
    %c0_i32 = arith.constant 0 : i32
    %c0_i32_0 = arith.constant 0 : i32
    %c0_i32_1 = arith.constant 0 : i32
    return %c0_i32, %c0_i32_0 : i32, i32
  }
  func.func @transform_5(%arg0: i32) -> (i32, i32) {
    %c0_i32 = arith.constant 0 : i32
    %c0_i32_0 = arith.constant 0 : i32
    %c0_i32_1 = arith.constant 0 : i32
    return %c0_i32, %c0_i32_0 : i32, i32
  }
  func.func @transform_6(%arg0: i32) -> (i32, i32) {
    %c0_i32 = arith.constant 0 : i32
    %c0_i32_0 = arith.constant 0 : i32
    return %arg0, %c0_i32 : i32, i32
  }
}

module attributes {stable_mosaic.version = 11 : i64} {
  func.func @_conv3x3_kernel(%arg0: i32, %arg1: memref<1x18x18x32xf32, #tpu.memory_space<vmem>>, %arg2: memref<9x32x32xbf16, #tpu.memory_space<vmem>>, %arg3: memref<1x32xf32, #tpu.memory_space<vmem>>, %arg4: memref<1x32xf32, #tpu.memory_space<vmem>>, %arg5: memref<1x16x16x32xbf16, #tpu.memory_space<vmem>>) attributes {dimension_semantics = [#tpu.dimension_semantics<parallel>], iteration_bounds = array<i64: 2>, scalar_prefetch = 0 : i64, scratch_operands = 0 : i64, tpu.core_type = #tpu.core_type<tc>, window_params = [{transform_indices = @transform_0, window_bounds = array<i64: 1, 18, 18, 32>}, {pipeline_mode = #tpu.pipeline_mode<synchronous>, transform_indices = @transform_1, window_bounds = array<i64: 9, 32, 32>}, {pipeline_mode = #tpu.pipeline_mode<synchronous>, transform_indices = @transform_2, window_bounds = array<i64: 1, 32>}, {pipeline_mode = #tpu.pipeline_mode<synchronous>, transform_indices = @transform_3, window_bounds = array<i64: 1, 32>}, {transform_indices = @transform_4, window_bounds = array<i64: 1, 16, 16, 32>}]} {
    %cst = arith.constant 0.000000e+00 : f32
    %0 = vector.broadcast %cst : f32 to vector<256x32xf32>
    %c0 = arith.constant 0 : index
    %c0_0 = arith.constant 0 : index
    %c0_1 = arith.constant 0 : index
    %c0_2 = arith.constant 0 : index
    %1 = vector.load %arg1[%c0, %c0_0, %c0_1, %c0_2] : memref<1x18x18x32xf32, #tpu.memory_space<vmem>>, vector<1x16x16x32xf32>
    %2 = vector.shape_cast %1 : vector<1x16x16x32xf32> to vector<16x16x32xf32>
    %3 = vector.shape_cast %2 : vector<16x16x32xf32> to vector<256x32xf32>
    %4 = arith.truncf %3 : vector<256x32xf32> to vector<256x32xbf16>
    %c0_3 = arith.constant 0 : index
    %c0_4 = arith.constant 0 : index
    %c0_5 = arith.constant 0 : index
    %5 = vector.load %arg2[%c0_3, %c0_4, %c0_5] : memref<9x32x32xbf16, #tpu.memory_space<vmem>>, vector<1x32x32xbf16>
    %6 = vector.shape_cast %5 : vector<1x32x32xbf16> to vector<32x32xbf16>
    %cst_6 = arith.constant dense<0.000000e+00> : vector<256x32xf32>
    %7 = tpu.matmul %4, %6, %cst_6 {dimension_numbers = #tpu.dot_dimension_numbers<[1], [0], [0], [1], [0, 0, 1, 1], [], []>} : vector<256x32xbf16>, vector<32x32xbf16>, vector<256x32xf32> -> vector<256x32xf32>
    %8 = arith.addf %0, %7 : vector<256x32xf32>
    %c0_7 = arith.constant 0 : index
    %c0_8 = arith.constant 0 : index
    %c1 = arith.constant 1 : index
    %c0_9 = arith.constant 0 : index
    %9 = vector.load %arg1[%c0_7, %c0_8, %c1, %c0_9] : memref<1x18x18x32xf32, #tpu.memory_space<vmem>>, vector<1x16x16x32xf32>
    %10 = vector.shape_cast %9 : vector<1x16x16x32xf32> to vector<16x16x32xf32>
    %11 = vector.shape_cast %10 : vector<16x16x32xf32> to vector<256x32xf32>
    %12 = arith.truncf %11 : vector<256x32xf32> to vector<256x32xbf16>
    %c1_10 = arith.constant 1 : index
    %c0_11 = arith.constant 0 : index
    %c0_12 = arith.constant 0 : index
    %13 = vector.load %arg2[%c1_10, %c0_11, %c0_12] : memref<9x32x32xbf16, #tpu.memory_space<vmem>>, vector<1x32x32xbf16>
    %14 = vector.shape_cast %13 : vector<1x32x32xbf16> to vector<32x32xbf16>
    %cst_13 = arith.constant dense<0.000000e+00> : vector<256x32xf32>
    %15 = tpu.matmul %12, %14, %cst_13 {dimension_numbers = #tpu.dot_dimension_numbers<[1], [0], [0], [1], [0, 0, 1, 1], [], []>} : vector<256x32xbf16>, vector<32x32xbf16>, vector<256x32xf32> -> vector<256x32xf32>
    %16 = arith.addf %8, %15 : vector<256x32xf32>
    %c0_14 = arith.constant 0 : index
    %c0_15 = arith.constant 0 : index
    %c2 = arith.constant 2 : index
    %c0_16 = arith.constant 0 : index
    %17 = vector.load %arg1[%c0_14, %c0_15, %c2, %c0_16] : memref<1x18x18x32xf32, #tpu.memory_space<vmem>>, vector<1x16x16x32xf32>
    %18 = vector.shape_cast %17 : vector<1x16x16x32xf32> to vector<16x16x32xf32>
    %19 = vector.shape_cast %18 : vector<16x16x32xf32> to vector<256x32xf32>
    %20 = arith.truncf %19 : vector<256x32xf32> to vector<256x32xbf16>
    %c2_17 = arith.constant 2 : index
    %c0_18 = arith.constant 0 : index
    %c0_19 = arith.constant 0 : index
    %21 = vector.load %arg2[%c2_17, %c0_18, %c0_19] : memref<9x32x32xbf16, #tpu.memory_space<vmem>>, vector<1x32x32xbf16>
    %22 = vector.shape_cast %21 : vector<1x32x32xbf16> to vector<32x32xbf16>
    %cst_20 = arith.constant dense<0.000000e+00> : vector<256x32xf32>
    %23 = tpu.matmul %20, %22, %cst_20 {dimension_numbers = #tpu.dot_dimension_numbers<[1], [0], [0], [1], [0, 0, 1, 1], [], []>} : vector<256x32xbf16>, vector<32x32xbf16>, vector<256x32xf32> -> vector<256x32xf32>
    %24 = arith.addf %16, %23 : vector<256x32xf32>
    %c0_21 = arith.constant 0 : index
    %c1_22 = arith.constant 1 : index
    %c0_23 = arith.constant 0 : index
    %c0_24 = arith.constant 0 : index
    %25 = vector.load %arg1[%c0_21, %c1_22, %c0_23, %c0_24] : memref<1x18x18x32xf32, #tpu.memory_space<vmem>>, vector<1x16x16x32xf32>
    %26 = vector.shape_cast %25 : vector<1x16x16x32xf32> to vector<16x16x32xf32>
    %27 = vector.shape_cast %26 : vector<16x16x32xf32> to vector<256x32xf32>
    %28 = arith.truncf %27 : vector<256x32xf32> to vector<256x32xbf16>
    %c3 = arith.constant 3 : index
    %c0_25 = arith.constant 0 : index
    %c0_26 = arith.constant 0 : index
    %29 = vector.load %arg2[%c3, %c0_25, %c0_26] : memref<9x32x32xbf16, #tpu.memory_space<vmem>>, vector<1x32x32xbf16>
    %30 = vector.shape_cast %29 : vector<1x32x32xbf16> to vector<32x32xbf16>
    %cst_27 = arith.constant dense<0.000000e+00> : vector<256x32xf32>
    %31 = tpu.matmul %28, %30, %cst_27 {dimension_numbers = #tpu.dot_dimension_numbers<[1], [0], [0], [1], [0, 0, 1, 1], [], []>} : vector<256x32xbf16>, vector<32x32xbf16>, vector<256x32xf32> -> vector<256x32xf32>
    %32 = arith.addf %24, %31 : vector<256x32xf32>
    %c0_28 = arith.constant 0 : index
    %c1_29 = arith.constant 1 : index
    %c1_30 = arith.constant 1 : index
    %c0_31 = arith.constant 0 : index
    %33 = vector.load %arg1[%c0_28, %c1_29, %c1_30, %c0_31] : memref<1x18x18x32xf32, #tpu.memory_space<vmem>>, vector<1x16x16x32xf32>
    %34 = vector.shape_cast %33 : vector<1x16x16x32xf32> to vector<16x16x32xf32>
    %35 = vector.shape_cast %34 : vector<16x16x32xf32> to vector<256x32xf32>
    %36 = arith.truncf %35 : vector<256x32xf32> to vector<256x32xbf16>
    %c4 = arith.constant 4 : index
    %c0_32 = arith.constant 0 : index
    %c0_33 = arith.constant 0 : index
    %37 = vector.load %arg2[%c4, %c0_32, %c0_33] : memref<9x32x32xbf16, #tpu.memory_space<vmem>>, vector<1x32x32xbf16>
    %38 = vector.shape_cast %37 : vector<1x32x32xbf16> to vector<32x32xbf16>
    %cst_34 = arith.constant dense<0.000000e+00> : vector<256x32xf32>
    %39 = tpu.matmul %36, %38, %cst_34 {dimension_numbers = #tpu.dot_dimension_numbers<[1], [0], [0], [1], [0, 0, 1, 1], [], []>} : vector<256x32xbf16>, vector<32x32xbf16>, vector<256x32xf32> -> vector<256x32xf32>
    %40 = arith.addf %32, %39 : vector<256x32xf32>
    %c0_35 = arith.constant 0 : index
    %c1_36 = arith.constant 1 : index
    %c2_37 = arith.constant 2 : index
    %c0_38 = arith.constant 0 : index
    %41 = vector.load %arg1[%c0_35, %c1_36, %c2_37, %c0_38] : memref<1x18x18x32xf32, #tpu.memory_space<vmem>>, vector<1x16x16x32xf32>
    %42 = vector.shape_cast %41 : vector<1x16x16x32xf32> to vector<16x16x32xf32>
    %43 = vector.shape_cast %42 : vector<16x16x32xf32> to vector<256x32xf32>
    %44 = arith.truncf %43 : vector<256x32xf32> to vector<256x32xbf16>
    %c5 = arith.constant 5 : index
    %c0_39 = arith.constant 0 : index
    %c0_40 = arith.constant 0 : index
    %45 = vector.load %arg2[%c5, %c0_39, %c0_40] : memref<9x32x32xbf16, #tpu.memory_space<vmem>>, vector<1x32x32xbf16>
    %46 = vector.shape_cast %45 : vector<1x32x32xbf16> to vector<32x32xbf16>
    %cst_41 = arith.constant dense<0.000000e+00> : vector<256x32xf32>
    %47 = tpu.matmul %44, %46, %cst_41 {dimension_numbers = #tpu.dot_dimension_numbers<[1], [0], [0], [1], [0, 0, 1, 1], [], []>} : vector<256x32xbf16>, vector<32x32xbf16>, vector<256x32xf32> -> vector<256x32xf32>
    %48 = arith.addf %40, %47 : vector<256x32xf32>
    %c0_42 = arith.constant 0 : index
    %c2_43 = arith.constant 2 : index
    %c0_44 = arith.constant 0 : index
    %c0_45 = arith.constant 0 : index
    %49 = vector.load %arg1[%c0_42, %c2_43, %c0_44, %c0_45] : memref<1x18x18x32xf32, #tpu.memory_space<vmem>>, vector<1x16x16x32xf32>
    %50 = vector.shape_cast %49 : vector<1x16x16x32xf32> to vector<16x16x32xf32>
    %51 = vector.shape_cast %50 : vector<16x16x32xf32> to vector<256x32xf32>
    %52 = arith.truncf %51 : vector<256x32xf32> to vector<256x32xbf16>
    %c6 = arith.constant 6 : index
    %c0_46 = arith.constant 0 : index
    %c0_47 = arith.constant 0 : index
    %53 = vector.load %arg2[%c6, %c0_46, %c0_47] : memref<9x32x32xbf16, #tpu.memory_space<vmem>>, vector<1x32x32xbf16>
    %54 = vector.shape_cast %53 : vector<1x32x32xbf16> to vector<32x32xbf16>
    %cst_48 = arith.constant dense<0.000000e+00> : vector<256x32xf32>
    %55 = tpu.matmul %52, %54, %cst_48 {dimension_numbers = #tpu.dot_dimension_numbers<[1], [0], [0], [1], [0, 0, 1, 1], [], []>} : vector<256x32xbf16>, vector<32x32xbf16>, vector<256x32xf32> -> vector<256x32xf32>
    %56 = arith.addf %48, %55 : vector<256x32xf32>
    %c0_49 = arith.constant 0 : index
    %c2_50 = arith.constant 2 : index
    %c1_51 = arith.constant 1 : index
    %c0_52 = arith.constant 0 : index
    %57 = vector.load %arg1[%c0_49, %c2_50, %c1_51, %c0_52] : memref<1x18x18x32xf32, #tpu.memory_space<vmem>>, vector<1x16x16x32xf32>
    %58 = vector.shape_cast %57 : vector<1x16x16x32xf32> to vector<16x16x32xf32>
    %59 = vector.shape_cast %58 : vector<16x16x32xf32> to vector<256x32xf32>
    %60 = arith.truncf %59 : vector<256x32xf32> to vector<256x32xbf16>
    %c7 = arith.constant 7 : index
    %c0_53 = arith.constant 0 : index
    %c0_54 = arith.constant 0 : index
    %61 = vector.load %arg2[%c7, %c0_53, %c0_54] : memref<9x32x32xbf16, #tpu.memory_space<vmem>>, vector<1x32x32xbf16>
    %62 = vector.shape_cast %61 : vector<1x32x32xbf16> to vector<32x32xbf16>
    %cst_55 = arith.constant dense<0.000000e+00> : vector<256x32xf32>
    %63 = tpu.matmul %60, %62, %cst_55 {dimension_numbers = #tpu.dot_dimension_numbers<[1], [0], [0], [1], [0, 0, 1, 1], [], []>} : vector<256x32xbf16>, vector<32x32xbf16>, vector<256x32xf32> -> vector<256x32xf32>
    %64 = arith.addf %56, %63 : vector<256x32xf32>
    %c0_56 = arith.constant 0 : index
    %c2_57 = arith.constant 2 : index
    %c2_58 = arith.constant 2 : index
    %c0_59 = arith.constant 0 : index
    %65 = vector.load %arg1[%c0_56, %c2_57, %c2_58, %c0_59] : memref<1x18x18x32xf32, #tpu.memory_space<vmem>>, vector<1x16x16x32xf32>
    %66 = vector.shape_cast %65 : vector<1x16x16x32xf32> to vector<16x16x32xf32>
    %67 = vector.shape_cast %66 : vector<16x16x32xf32> to vector<256x32xf32>
    %68 = arith.truncf %67 : vector<256x32xf32> to vector<256x32xbf16>
    %c8 = arith.constant 8 : index
    %c0_60 = arith.constant 0 : index
    %c0_61 = arith.constant 0 : index
    %69 = vector.load %arg2[%c8, %c0_60, %c0_61] : memref<9x32x32xbf16, #tpu.memory_space<vmem>>, vector<1x32x32xbf16>
    %70 = vector.shape_cast %69 : vector<1x32x32xbf16> to vector<32x32xbf16>
    %cst_62 = arith.constant dense<0.000000e+00> : vector<256x32xf32>
    %71 = tpu.matmul %68, %70, %cst_62 {dimension_numbers = #tpu.dot_dimension_numbers<[1], [0], [0], [1], [0, 0, 1, 1], [], []>} : vector<256x32xbf16>, vector<32x32xbf16>, vector<256x32xf32> -> vector<256x32xf32>
    %72 = arith.addf %64, %71 : vector<256x32xf32>
    %c0_63 = arith.constant 0 : index
    %c0_64 = arith.constant 0 : index
    %73 = vector.load %arg3[%c0_63, %c0_64] : memref<1x32xf32, #tpu.memory_space<vmem>>, vector<1x32xf32>
    %c0_65 = arith.constant 0 : index
    %c0_66 = arith.constant 0 : index
    %74 = vector.load %arg4[%c0_65, %c0_66] : memref<1x32xf32, #tpu.memory_space<vmem>>, vector<1x32xf32>
    %75 = vector.broadcast %73 : vector<1x32xf32> to vector<256x32xf32>
    %76 = arith.mulf %72, %75 : vector<256x32xf32>
    %77 = vector.broadcast %74 : vector<1x32xf32> to vector<256x32xf32>
    %78 = arith.addf %76, %77 : vector<256x32xf32>
    %cst_67 = arith.constant 0.000000e+00 : f32
    %79 = vector.broadcast %cst_67 : f32 to vector<256x32xf32>
    %80 = arith.maximumf %78, %79 : vector<256x32xf32>
    %81 = vector.shape_cast %80 : vector<256x32xf32> to vector<1x16x16x32xf32>
    %82 = arith.truncf %81 : vector<1x16x16x32xf32> to vector<1x16x16x32xbf16>
    %c0_68 = arith.constant 0 : index
    %c0_69 = arith.constant 0 : index
    %c0_70 = arith.constant 0 : index
    %c0_71 = arith.constant 0 : index
    %83 = vector.load %arg5[%c0_68, %c0_69, %c0_70, %c0_71] : memref<1x16x16x32xbf16, #tpu.memory_space<vmem>>, vector<1x16x16x32xbf16>
    tpu.vector_store %arg5[%c0_68, %c0_69, %c0_70, %c0_71], %82 {strides = array<i32>} : memref<1x16x16x32xbf16, #tpu.memory_space<vmem>>, vector<1x16x16x32xbf16>,
    return
  }
  func.func @transform_0(%arg0: i32) -> (i32, i32, i32, i32) {
    %c0_i32 = arith.constant 0 : i32
    %c0_i32_0 = arith.constant 0 : i32
    %c0_i32_1 = arith.constant 0 : i32
    %c0_i32_2 = arith.constant 0 : i32
    return %arg0, %c0_i32, %c0_i32_0, %c0_i32_1 : i32, i32, i32, i32
  }
  func.func @transform_1(%arg0: i32) -> (i32, i32, i32) {
    %c0_i32 = arith.constant 0 : i32
    %c0_i32_0 = arith.constant 0 : i32
    %c0_i32_1 = arith.constant 0 : i32
    %c0_i32_2 = arith.constant 0 : i32
    return %c0_i32, %c0_i32_0, %c0_i32_1 : i32, i32, i32
  }
  func.func @transform_2(%arg0: i32) -> (i32, i32) {
    %c0_i32 = arith.constant 0 : i32
    %c0_i32_0 = arith.constant 0 : i32
    %c0_i32_1 = arith.constant 0 : i32
    return %c0_i32, %c0_i32_0 : i32, i32
  }
  func.func @transform_3(%arg0: i32) -> (i32, i32) {
    %c0_i32 = arith.constant 0 : i32
    %c0_i32_0 = arith.constant 0 : i32
    %c0_i32_1 = arith.constant 0 : i32
    return %c0_i32, %c0_i32_0 : i32, i32
  }
  func.func @transform_4(%arg0: i32) -> (i32, i32, i32, i32) {
    %c0_i32 = arith.constant 0 : i32
    %c0_i32_0 = arith.constant 0 : i32
    %c0_i32_1 = arith.constant 0 : i32
    %c0_i32_2 = arith.constant 0 : i32
    return %arg0, %c0_i32, %c0_i32_0, %c0_i32_1 : i32, i32, i32, i32
  }
}

module attributes {stable_mosaic.version = 11 : i64} {
  func.func @_gemm1x1_kernel(%arg0: i32, %arg1: memref<256x64xbf16, #tpu.memory_space<vmem>>, %arg2: memref<64x128xbf16, #tpu.memory_space<vmem>>, %arg3: memref<1x64xf32, #tpu.memory_space<vmem>>, %arg4: memref<1x64xf32, #tpu.memory_space<vmem>>, %arg5: memref<256x128xf32, #tpu.memory_space<vmem>>) attributes {dimension_semantics = [#tpu.dimension_semantics<parallel>], iteration_bounds = array<i64: 2>, scalar_prefetch = 0 : i64, scratch_operands = 0 : i64, tpu.core_type = #tpu.core_type<tc>, window_params = [{transform_indices = @transform_0, window_bounds = array<i64: 256, 64>}, {pipeline_mode = #tpu.pipeline_mode<synchronous>, transform_indices = @transform_1, window_bounds = array<i64: 64, 128>}, {pipeline_mode = #tpu.pipeline_mode<synchronous>, transform_indices = @transform_2, window_bounds = array<i64: 1, 64>}, {pipeline_mode = #tpu.pipeline_mode<synchronous>, transform_indices = @transform_3, window_bounds = array<i64: 1, 64>}, {transform_indices = @transform_4, window_bounds = array<i64: 256, 128>}]} {
    %c0 = arith.constant 0 : index
    %c0_0 = arith.constant 0 : index
    %0 = vector.load %arg3[%c0, %c0_0] : memref<1x64xf32, #tpu.memory_space<vmem>>, vector<1x64xf32>
    %c0_1 = arith.constant 0 : index
    %c0_2 = arith.constant 0 : index
    %1 = vector.load %arg4[%c0_1, %c0_2] : memref<1x64xf32, #tpu.memory_space<vmem>>, vector<1x64xf32>
    %c0_3 = arith.constant 0 : index
    %c0_4 = arith.constant 0 : index
    %2 = vector.load %arg1[%c0_3, %c0_4] : memref<256x64xbf16, #tpu.memory_space<vmem>>, vector<256x64xbf16>
    %3 = arith.extf %2 : vector<256x64xbf16> to vector<256x64xf32>
    %4 = vector.broadcast %0 : vector<1x64xf32> to vector<256x64xf32>
    %5 = arith.mulf %3, %4 : vector<256x64xf32>
    %6 = vector.broadcast %1 : vector<1x64xf32> to vector<256x64xf32>
    %7 = arith.addf %5, %6 : vector<256x64xf32>
    %cst = arith.constant 0.000000e+00 : f32
    %8 = vector.broadcast %cst : f32 to vector<256x64xf32>
    %9 = arith.maximumf %7, %8 : vector<256x64xf32>
    %10 = arith.truncf %9 : vector<256x64xf32> to vector<256x64xbf16>
    %c0_5 = arith.constant 0 : index
    %c0_6 = arith.constant 0 : index
    %11 = vector.load %arg2[%c0_5, %c0_6] : memref<64x128xbf16, #tpu.memory_space<vmem>>, vector<64x128xbf16>
    %cst_7 = arith.constant dense<0.000000e+00> : vector<256x128xf32>
    %12 = tpu.matmul %10, %11, %cst_7 {dimension_numbers = #tpu.dot_dimension_numbers<[1], [0], [0], [1], [0, 0, 1, 1], [], []>} : vector<256x64xbf16>, vector<64x128xbf16>, vector<256x128xf32> -> vector<256x128xf32>
    %c0_8 = arith.constant 0 : index
    %c0_9 = arith.constant 0 : index
    %13 = vector.load %arg5[%c0_8, %c0_9] : memref<256x128xf32, #tpu.memory_space<vmem>>, vector<256x128xf32>
    tpu.vector_store %arg5[%c0_8, %c0_9], %12 {strides = array<i32>} : memref<256x128xf32, #tpu.memory_space<vmem>>, vector<256x128xf32>,
    return
  }
  func.func @transform_0(%arg0: i32) -> (i32, i32) {
    %c0_i32 = arith.constant 0 : i32
    %c0_i32_0 = arith.constant 0 : i32
    return %arg0, %c0_i32 : i32, i32
  }
  func.func @transform_1(%arg0: i32) -> (i32, i32) {
    %c0_i32 = arith.constant 0 : i32
    %c0_i32_0 = arith.constant 0 : i32
    %c0_i32_1 = arith.constant 0 : i32
    return %c0_i32, %c0_i32_0 : i32, i32
  }
  func.func @transform_2(%arg0: i32) -> (i32, i32) {
    %c0_i32 = arith.constant 0 : i32
    %c0_i32_0 = arith.constant 0 : i32
    %c0_i32_1 = arith.constant 0 : i32
    return %c0_i32, %c0_i32_0 : i32, i32
  }
  func.func @transform_3(%arg0: i32) -> (i32, i32) {
    %c0_i32 = arith.constant 0 : i32
    %c0_i32_0 = arith.constant 0 : i32
    %c0_i32_1 = arith.constant 0 : i32
    return %c0_i32, %c0_i32_0 : i32, i32
  }
  func.func @transform_4(%arg0: i32) -> (i32, i32) {
    %c0_i32 = arith.constant 0 : i32
    %c0_i32_0 = arith.constant 0 : i32
    return %arg0, %c0_i32 : i32, i32
  }
}

module attributes {stable_mosaic.version = 11 : i64} {
  func.func @_gemm1x1_kernel(%arg0: i32, %arg1: memref<256x32xbf16, #tpu.memory_space<vmem>>, %arg2: memref<32x128xbf16, #tpu.memory_space<vmem>>, %arg3: memref<256x128xf32, #tpu.memory_space<vmem>>, %arg4: memref<256x128xf32, #tpu.memory_space<vmem>>) attributes {dimension_semantics = [#tpu.dimension_semantics<parallel>], iteration_bounds = array<i64: 2>, scalar_prefetch = 0 : i64, scratch_operands = 0 : i64, tpu.core_type = #tpu.core_type<tc>, window_params = [{transform_indices = @transform_0, window_bounds = array<i64: 256, 32>}, {pipeline_mode = #tpu.pipeline_mode<synchronous>, transform_indices = @transform_1, window_bounds = array<i64: 32, 128>}, {transform_indices = @transform_2, window_bounds = array<i64: 256, 128>}, {transform_indices = @transform_3, window_bounds = array<i64: 256, 128>}]} {
    %c0 = arith.constant 0 : index
    %c0_0 = arith.constant 0 : index
    %0 = vector.load %arg1[%c0, %c0_0] : memref<256x32xbf16, #tpu.memory_space<vmem>>, vector<256x32xbf16>
    %c0_1 = arith.constant 0 : index
    %c0_2 = arith.constant 0 : index
    %1 = vector.load %arg2[%c0_1, %c0_2] : memref<32x128xbf16, #tpu.memory_space<vmem>>, vector<32x128xbf16>
    %cst = arith.constant dense<0.000000e+00> : vector<256x128xf32>
    %2 = tpu.matmul %0, %1, %cst {dimension_numbers = #tpu.dot_dimension_numbers<[1], [0], [0], [1], [0, 0, 1, 1], [], []>} : vector<256x32xbf16>, vector<32x128xbf16>, vector<256x128xf32> -> vector<256x128xf32>
    %c0_3 = arith.constant 0 : index
    %c0_4 = arith.constant 0 : index
    %3 = vector.load %arg3[%c0_3, %c0_4] : memref<256x128xf32, #tpu.memory_space<vmem>>, vector<256x128xf32>
    %4 = arith.addf %2, %3 : vector<256x128xf32>
    %c0_5 = arith.constant 0 : index
    %c0_6 = arith.constant 0 : index
    %5 = vector.load %arg4[%c0_5, %c0_6] : memref<256x128xf32, #tpu.memory_space<vmem>>, vector<256x128xf32>
    tpu.vector_store %arg4[%c0_5, %c0_6], %4 {strides = array<i32>} : memref<256x128xf32, #tpu.memory_space<vmem>>, vector<256x128xf32>,
    return
  }
  func.func @transform_0(%arg0: i32) -> (i32, i32) {
    %c0_i32 = arith.constant 0 : i32
    %c0_i32_0 = arith.constant 0 : i32
    return %arg0, %c0_i32 : i32, i32
  }
  func.func @transform_1(%arg0: i32) -> (i32, i32) {
    %c0_i32 = arith.constant 0 : i32
    %c0_i32_0 = arith.constant 0 : i32
    %c0_i32_1 = arith.constant 0 : i32
    return %c0_i32, %c0_i32_0 : i32, i32
  }
  func.func @transform_2(%arg0: i32) -> (i32, i32) {
    %c0_i32 = arith.constant 0 : i32
    %c0_i32_0 = arith.constant 0 : i32
    return %arg0, %c0_i32 : i32, i32
  }
  func.func @transform_3(%arg0: i32) -> (i32, i32) {
    %c0_i32 = arith.constant 0 : i32
    %c0_i32_0 = arith.constant 0 : i32
    return %arg0, %c0_i32 : i32, i32
  }
}

</mosaic_0001>

<llo_original>
// kernel: _lambda_.5
$region0: #{_lambda_.5}
  #allocation0 [shape = 'u32[]', space=smem, size = 0x4, offset = 0x4, fixed_abs, tag = 'smem constant byte address 0x4 - core index']
  #allocation1 [shape = 'u32[144,128]{1,0:T(1,128)}', space=vmem, size = 0x12000, scoped, tag = 'internal scratch']
  %s0 = inlined_call_operand.vmem [shape: bf16[512,64], index: 0, kind: input, shape index: {}]
  %s1 = inlined_call_operand.vmem [shape: bf16[64,32], index: 1, kind: input, shape index: {}]
  %s2 = inlined_call_operand.vmem [shape: f32[1,64], index: 2, kind: input, shape index: {}]
  %s3 = inlined_call_operand.vmem [shape: f32[1,64], index: 3, kind: input, shape index: {}]
  %s4 = inlined_call_operand.vmem [shape: f32[1,32], index: 4, kind: input, shape index: {}]
  %s5 = inlined_call_operand.vmem [shape: f32[1,32], index: 5, kind: input, shape index: {}]
  %s6 = inlined_call_operand.vmem [shape: f32[512,32], index: 6, kind: output, shape index: {}]
  %s7 = sld [smem:[#allocation0]]
  $region57: #{_lambda_.5} parent=0
    _
  %s9 = ssub.s32 1, %s7
  %s10 = scalar_select 0, %s9, %s7
  loop: start=0, step=1, limit=4
  $region2: #{_lambda_.5} parent=0 // loop_pre_header
    _
  $region3: #{_lambda_.5} parent=0 // loop_header
    %s12 = sphi 0, %s16
    %p13 = scmp.ge.s32.totalorder %s12, 4
    %s22 = sphi 0, %s24
    %s25 = sphi 0, %s22
    %s26 = sphi 0, %s25
    %s42 = sphi 0, %s26
    %s46 = sphi 0, %s46
    %s48 = sphi 0, %s46
    %s49 = sphi 0, %s48
    %s63 = sphi 0, %s49
    %s67 = sphi 0, %s67
    %s69 = sphi 0, %s67
    %s70 = sphi 0, %s69
    %s84 = sphi 0, %s70
    %s88 = sphi 0, %s88
    %s90 = sphi 0, %s88
    %s91 = sphi 0, %s90
    %s105 = sphi 0, %s91
    %s109 = sphi 0, %s109
    %s111 = sphi 0, %s109
    %s112 = sphi 0, %s111
    %s126 = sphi 0, %s112
    %s130 = sphi 0, %s130
    %s132 = sphi 0, %s130
    %s133 = sphi 0, %s132
    %s147 = sphi 0, %s133
    %s153 = sphi 0, %s155
    %s156 = sphi 0, %s153
    %s157 = sphi 0, %s156
    %s173 = sphi 0, %s157
  $region4: #{_lambda_.5} parent=0 // loop_header_branch
    %15 = sbr.rel (%p13) target = $region8
  $region5: #{_lambda_.5} parent=0 // loop_body
    %s17 = ssub.s32 %s12, 1
    %s18 = ssub.s32 %s12, 2
    %s19 = sadd.s32 %s12, 1
    %s20 = ssub.s32 %s12, %s19
    %p21 = scmp.eq.s32.totalorder %s20, 0
    %s23 = sadd.s32 %s22, 1
    %s24 = scalar_select %p21, %s22, %s23
    %p27 = pneg %p21
    %p28 = scmp.eq.s32.totalorder %s12, 1
    %p29 = por %p27, %p28
    %p30 = scmp.ne.s32.totalorder %s22, %s25
    %p31 = scmp.eq.s32.totalorder %s12, 0
    %p32 = por %p30, %p31
    %p33 = scmp.ne.s32.totalorder %s22, %s25
    %p34 = scmp.eq.s32.totalorder %s17, 1
    %p35 = por %p33, %p34
    %p36 = scmp.ne.s32.totalorder %s25, %s26
    %p37 = scmp.eq.s32.totalorder %s17, 0
    %p38 = por %p36, %p37
    %p39 = scmp.ne.s32.totalorder %s25, %s26
    %p40 = scmp.eq.s32.totalorder %s18, 1
    %p41 = por %p39, %p40
    %p43 = scmp.ne.s32.totalorder %s26, %s42
    %p44 = scmp.eq.s32.totalorder %s18, 0
    %p45 = por %p43, %p44
    %s47 = sadd.s32 %s46, 1
    %p50 = scmp.eq.s32.totalorder %s12, 1
    %p51 = scmp.ne.s32.totalorder %s46, %s48
    %p52 = scmp.eq.s32.totalorder %s12, 0
    %p53 = por %p51, %p52
    %p54 = scmp.ne.s32.totalorder %s46, %s48
    %p55 = scmp.eq.s32.totalorder %s17, 1
    %p56 = por %p54, %p55
    %p57 = scmp.ne.s32.totalorder %s48, %s49
    %p58 = scmp.eq.s32.totalorder %s17, 0
    %p59 = por %p57, %p58
    %p60 = scmp.ne.s32.totalorder %s48, %s49
    %p61 = scmp.eq.s32.totalorder %s18, 1
    %p62 = por %p60, %p61
    %p64 = scmp.ne.s32.totalorder %s49, %s63
    %p65 = scmp.eq.s32.totalorder %s18, 0
    %p66 = por %p64, %p65
    %s68 = sadd.s32 %s67, 1
    %p71 = scmp.eq.s32.totalorder %s12, 1
    %p72 = scmp.ne.s32.totalorder %s67, %s69
    %p73 = scmp.eq.s32.totalorder %s12, 0
    %p74 = por %p72, %p73
    %p75 = scmp.ne.s32.totalorder %s67, %s69
    %p76 = scmp.eq.s32.totalorder %s17, 1
    %p77 = por %p75, %p76
    %p78 = scmp.ne.s32.totalorder %s69, %s70
    %p79 = scmp.eq.s32.totalorder %s17, 0
    %p80 = por %p78, %p79
    %p81 = scmp.ne.s32.totalorder %s69, %s70
    %p82 = scmp.eq.s32.totalorder %s18, 1
    %p83 = por %p81, %p82
    %p85 = scmp.ne.s32.totalorder %s70, %s84
    %p86 = scmp.eq.s32.totalorder %s18, 0
    %p87 = por %p85, %p86
    %s89 = sadd.s32 %s88, 1
    %p92 = scmp.eq.s32.totalorder %s12, 1
    %p93 = scmp.ne.s32.totalorder %s88, %s90
    %p94 = scmp.eq.s32.totalorder %s12, 0
    %p95 = por %p93, %p94
    %p96 = scmp.ne.s32.totalorder %s88, %s90
    %p97 = scmp.eq.s32.totalorder %s17, 1
    %p98 = por %p96, %p97
    %p99 = scmp.ne.s32.totalorder %s90, %s91
    %p100 = scmp.eq.s32.totalorder %s17, 0
    %p101 = por %p99, %p100
    %p102 = scmp.ne.s32.totalorder %s90, %s91
    %p103 = scmp.eq.s32.totalorder %s18, 1
    %p104 = por %p102, %p103
    %p106 = scmp.ne.s32.totalorder %s91, %s105
    %p107 = scmp.eq.s32.totalorder %s18, 0
    %p108 = por %p106, %p107
    %s110 = sadd.s32 %s109, 1
    %p113 = scmp.eq.s32.totalorder %s12, 1
    %p114 = scmp.ne.s32.totalorder %s109, %s111
    %p115 = scmp.eq.s32.totalorder %s12, 0
    %p116 = por %p114, %p115
    %p117 = scmp.ne.s32.totalorder %s109, %s111
    %p118 = scmp.eq.s32.totalorder %s17, 1
    %p119 = por %p117, %p118
    %p120 = scmp.ne.s32.totalorder %s111, %s112
    %p121 = scmp.eq.s32.totalorder %s17, 0
    %p122 = por %p120, %p121
    %p123 = scmp.ne.s32.totalorder %s111, %s112
    %p124 = scmp.eq.s32.totalorder %s18, 1
    %p125 = por %p123, %p124
    %p127 = scmp.ne.s32.totalorder %s112, %s126
    %p128 = scmp.eq.s32.totalorder %s18, 0
    %p129 = por %p127, %p128
    %s131 = sadd.s32 %s130, 1
    %p134 = scmp.eq.s32.totalorder %s12, 1
    %p135 = scmp.ne.s32.totalorder %s130, %s132
    %p136 = scmp.eq.s32.totalorder %s12, 0
    %p137 = por %p135, %p136
    %p138 = scmp.ne.s32.totalorder %s130, %s132
    %p139 = scmp.eq.s32.totalorder %s17, 1
    %p140 = por %p138, %p139
    %p141 = scmp.ne.s32.totalorder %s132, %s133
    %p142 = scmp.eq.s32.totalorder %s17, 0
    %p143 = por %p141, %p142
    %p144 = scmp.ne.s32.totalorder %s132, %s133
    %p145 = scmp.eq.s32.totalorder %s18, 1
    %p146 = por %p144, %p145
    %p148 = scmp.ne.s32.totalorder %s133, %s147
    %p149 = scmp.eq.s32.totalorder %s18, 0
    %p150 = por %p148, %p149
    %s151 = ssub.s32 %s12, %s19
    %p152 = scmp.eq.s32.totalorder %s151, 0
    %s154 = sadd.s32 %s153, 1
    %s155 = scalar_select %p152, %s153, %s154
    %p158 = pneg %p152
    %p159 = scmp.eq.s32.totalorder %s12, 1
    %p160 = por %p158, %p159
    %p161 = scmp.ne.s32.totalorder %s153, %s156
    %p162 = scmp.eq.s32.totalorder %s12, 0
    %p163 = por %p161, %p162
    %p164 = scmp.ne.s32.totalorder %s153, %s156
    %p165 = scmp.eq.s32.totalorder %s17, 1
    %p166 = por %p164, %p165
    %p167 = scmp.ne.s32.totalorder %s156, %s157
    %p168 = scmp.eq.s32.totalorder %s17, 0
    %p169 = por %p167, %p168
    %p170 = scmp.ne.s32.totalorder %s156, %s157
    %p171 = scmp.eq.s32.totalorder %s18, 1
    %p172 = por %p170, %p171
    %p174 = scmp.ne.s32.totalorder %s157, %s173
    %p175 = scmp.eq.s32.totalorder %s18, 0
    %p176 = por %p174, %p175
    %p177 = scmp.le.s32.totalorder 1, %s12
    %p178 = scmp.lt.s32.totalorder %s12, 3
    %p179 = pnand %p177, %p178
    %p180 = pneg %p179
    // Predicated region
    $region9: #{_lambda_.5} parent=5 // pred_check
      _
    $region10: #{_lambda_.5} parent=5 // pred_check_branch
      %182 = sbr.rel (%p179) target = $region12
    $region11: #{_lambda_.5} parent=5 // pred_region
      %s183 = ssub.s32 %s12, 1
      // Predicated region
      $region13: #{_lambda_.5} parent=11 // pred_check
        %p184 = pneg %p59
      $region14: #{_lambda_.5} parent=11 // pred_check_branch
        %186 = sbr.rel (%p184) target = $region16
      $region15: #{_lambda_.5} parent=11 // pred_region
        _
      $region16: #{_lambda_.5} parent=11 // pred_fallthru
        _
      // Predicated region
      $region17: #{_lambda_.5} parent=11 // pred_check
        %p187 = pneg %p80
      $region18: #{_lambda_.5} parent=11 // pred_check_branch
        %189 = sbr.rel (%p187) target = $region20
      $region19: #{_lambda_.5} parent=11 // pred_region
        _
      $region20: #{_lambda_.5} parent=11 // pred_fallthru
        _
      // Predicated region
      $region21: #{_lambda_.5} parent=11 // pred_check
        %p190 = pneg %p101
      $region22: #{_lambda_.5} parent=11 // pred_check_branch
        %192 = sbr.rel (%p190) target = $region24
      $region23: #{_lambda_.5} parent=11 // pred_region
        _
      $region24: #{_lambda_.5} parent=11 // pred_fallthru
        _
      // Predicated region
      $region25: #{_lambda_.5} parent=11 // pred_check
        %p193 = pneg %p122
      $region26: #{_lambda_.5} parent=11 // pred_check_branch
        %195 = sbr.rel (%p193) target = $region28
      $region27: #{_lambda_.5} parent=11 // pred_region
        _
      $region28: #{_lambda_.5} parent=11 // pred_fallthru
        _
      // Predicated region
      $region29: #{_lambda_.5} parent=11 // pred_check
        %p196 = pneg %p143
      $region30: #{_lambda_.5} parent=11 // pred_check_branch
        %198 = sbr.rel (%p196) target = $region32
      $region31: #{_lambda_.5} parent=11 // pred_region
        _
      $region32: #{_lambda_.5} parent=11 // pred_fallthru
        _
    $region12: #{_lambda_.5} parent=5 // pred_fallthru
      _
    %p199 = scmp.lt.s32.totalorder %s12, 2
    // Predicated region
    $region33: #{_lambda_.5} parent=5 // pred_check
      %p200 = pneg %p199
    $region34: #{_lambda_.5} parent=5 // pred_check_branch
      %202 = sbr.rel (%p200) target = $region36
    $region35: #{_lambda_.5} parent=5 // pred_region
      // Predicated region
      $region37: #{_lambda_.5} parent=35 // pred_check
        %p203 = pneg %p32
      $region38: #{_lambda_.5} parent=35 // pred_check_branch
        %205 = sbr.rel (%p203) target = $region40
      $region39: #{_lambda_.5} parent=35 // pred_region
        %s206 = smul.u32 32, %s12
        %p207 = scmp.lt.s32.totalorder %s206, 63
        %s208 = scalar_select %p207, %s206, 63
        %s209 = smul.addr %s208, 4
        %s210 = scalar_lea.vmem %s0, %s209
        %s211 = smul.u32 32, %s12
      $region40: #{_lambda_.5} parent=35 // pred_fallthru
        _
    $region36: #{_lambda_.5} parent=5 // pred_fallthru
      _
    %p212 = scmp.le.s32.totalorder 1, %s12
    %p213 = scmp.lt.s32.totalorder %s12, 3
    %p214 = pnand %p212, %p213
    %p215 = pneg %p214
    // Predicated region
    $region41: #{_lambda_.5} parent=5 // pred_check
      _
    $region42: #{_lambda_.5} parent=5 // pred_check_branch
      %217 = sbr.rel (%p214) target = $region44
    $region43: #{_lambda_.5} parent=5 // pred_region
      %s218 = ssub.s32 %s12, 1
      %s219 = smul.u32 32, %s17
      %p220 = scmp.lt.s32.totalorder %s219, 63
      %s221 = scalar_select %p220, %s219, 63
      %s222 = smul.addr %s221, 4
      %s223 = scalar_lea.vmem %s0, %s222
      %p224 = pneg %p38
      %p225 = pneg %p35
      %p226 = pneg %p59
      %p227 = pneg %p56
      %p228 = pneg %p80
      %p229 = pneg %p77
      %p230 = pneg %p101
      %p231 = pneg %p98
      %p232 = pneg %p122
      %p233 = pneg %p119
      %p234 = pneg %p143
      %p235 = pneg %p140
      %p236 = pneg %p169
      %p237 = pneg %p166
      %s238 = smul.u32 32, %s17
      %p239 = scmp.lt.s32.totalorder %s238, 63
      %s240 = scalar_select %p239, %s238, 63
      %s241 = smul.addr %s240, 8
      %s242 = scalar_lea.vmem %s6, %s241
      %s243 = smul.u32 32, %s17
      %p244 = scmp.lt.s32.totalorder %s243, 63
      %s245 = scalar_select %p244, %s243, 63
      %s246 = smul.addr %s245, 4
      %s247 = scalar_lea.vmem %s0, %s246
      %s248 = smul.u32 32, %s17
      %s249 = smul.u32 32, %s17
      %p250 = scmp.lt.s32.totalorder %s249, 63
      %s251 = scalar_select %p250, %s249, 63
      %s252 = smul.addr %s251, 8
      %s253 = scalar_lea.vmem %s6, %s252
      %s254 = smul.u32 32, %s17
      %v256 = vld [vmem:[%s2] sm:$0x1]
      %v257 = vld [vmem:[%s3] sm:$0x1]
      %v258 = vld [vmem:[%s247] sm:$0xf]
      %v259 = vld [vmem:[%s247 + $0x4] sm:$0xf]
      %v260 = vld [vmem:[%s247 + $0x8] sm:$0xf]
      %v261 = vld [vmem:[%s247 + $0xc] sm:$0xf]
      %v262 = vld [vmem:[%s247 + $0x10] sm:$0xf]
      %v263 = vld [vmem:[%s247 + $0x14] sm:$0xf]
      %v264 = vld [vmem:[%s247 + $0x18] sm:$0xf]
      %v265 = vld [vmem:[%s247 + $0x1c] sm:$0xf]
      %v266 = vld [vmem:[%s247 + $0x20] sm:$0xf]
      %v267 = vld [vmem:[%s247 + $0x24] sm:$0xf]
      %v268 = vld [vmem:[%s247 + $0x28] sm:$0xf]
      %v269 = vld [vmem:[%s247 + $0x2c] sm:$0xf]
      %v270 = vld [vmem:[%s247 + $0x30] sm:$0xf]
      %v271 = vld [vmem:[%s247 + $0x34] sm:$0xf]
      %v272 = vld [vmem:[%s247 + $0x38] sm:$0xf]
      %v273 = vld [vmem:[%s247 + $0x3c] sm:$0xf]
      %v274 = vld [vmem:[%s247 + $0x40] sm:$0xf]
      %v275 = vld [vmem:[%s247 + $0x44] sm:$0xf]
      %v276 = vld [vmem:[%s247 + $0x48] sm:$0xf]
      %v277 = vld [vmem:[%s247 + $0x4c] sm:$0xf]
      %v278 = vld [vmem:[%s247 + $0x50] sm:$0xf]
      %v279 = vld [vmem:[%s247 + $0x54] sm:$0xf]
      %v280 = vld [vmem:[%s247 + $0x58] sm:$0xf]
      %v281 = vld [vmem:[%s247 + $0x5c] sm:$0xf]
      %v282 = vld [vmem:[%s247 + $0x60] sm:$0xf]
      %v283 = vld [vmem:[%s247 + $0x64] sm:$0xf]
      %v284 = vld [vmem:[%s247 + $0x68] sm:$0xf]
      %v285 = vld [vmem:[%s247 + $0x6c] sm:$0xf]
      %v286 = vld [vmem:[%s247 + $0x70] sm:$0xf]
      %v287 = vld [vmem:[%s247 + $0x74] sm:$0xf]
      %v288 = vld [vmem:[%s247 + $0x78] sm:$0xf]
      %v289 = vld [vmem:[%s247 + $0x7c] sm:$0xf]
      %v290 = vunpack.c.l.bf16 %v258
      %v291 = vunpack.c.l.bf16 %v259
      %v292 = vunpack.c.l.bf16 %v260
      %v293 = vunpack.c.l.bf16 %v261
      %v294 = vunpack.c.l.bf16 %v262
      %v295 = vunpack.c.l.bf16 %v263
      %v296 = vunpack.c.l.bf16 %v264
      %v297 = vunpack.c.l.bf16 %v265
      %v298 = vunpack.c.l.bf16 %v266
      %v299 = vunpack.c.l.bf16 %v267
      %v300 = vunpack.c.l.bf16 %v268
      %v301 = vunpack.c.l.bf16 %v269
      %v302 = vunpack.c.l.bf16 %v270
      %v303 = vunpack.c.l.bf16 %v271
      %v304 = vunpack.c.l.bf16 %v272
      %v305 = vunpack.c.l.bf16 %v273
      %v306 = vunpack.c.l.bf16 %v274
      %v307 = vunpack.c.l.bf16 %v275
      %v308 = vunpack.c.l.bf16 %v276
      %v309 = vunpack.c.l.bf16 %v277
      %v310 = vunpack.c.l.bf16 %v278
      %v311 = vunpack.c.l.bf16 %v279
      %v312 = vunpack.c.l.bf16 %v280
      %v313 = vunpack.c.l.bf16 %v281
      %v314 = vunpack.c.l.bf16 %v282
      %v315 = vunpack.c.l.bf16 %v283
      %v316 = vunpack.c.l.bf16 %v284
      %v317 = vunpack.c.l.bf16 %v285
      %v318 = vunpack.c.l.bf16 %v286
      %v319 = vunpack.c.l.bf16 %v287
      %v320 = vunpack.c.l.bf16 %v288
      %v321 = vunpack.c.l.bf16 %v289
      %v323 = vlaneseq
      %v324 = vshrl.u32 %v323, 7
      %v325 = vsub.s32 0, %v324
      %v326 = vrot.slane %v256, %v325
      %v328 = vmul.f32 %v290, %v326
      %v329 = vmul.f32 %v291, %v326
      %v330 = vmul.f32 %v292, %v326
      %v331 = vmul.f32 %v293, %v326
      %v332 = vmul.f32 %v294, %v326
      %v333 = vmul.f32 %v295, %v326
      %v334 = vmul.f32 %v296, %v326
      %v335 = vmul.f32 %v297, %v326
      %v336 = vmul.f32 %v298, %v326
      %v337 = vmul.f32 %v299, %v326
      %v338 = vmul.f32 %v300, %v326
      %v339 = vmul.f32 %v301, %v326
      %v340 = vmul.f32 %v302, %v326
      %v341 = vmul.f32 %v303, %v326
      %v342 = vmul.f32 %v304, %v326
      %v343 = vmul.f32 %v305, %v326
      %v344 = vmul.f32 %v306, %v326
      %v345 = vmul.f32 %v307, %v326
      %v346 = vmul.f32 %v308, %v326
      %v347 = vmul.f32 %v309, %v326
      %v348 = vmul.f32 %v310, %v326
      %v349 = vmul.f32 %v311, %v326
      %v350 = vmul.f32 %v312, %v326
      %v351 = vmul.f32 %v313, %v326
      %v352 = vmul.f32 %v314, %v326
      %v353 = vmul.f32 %v315, %v326
      %v354 = vmul.f32 %v316, %v326
      %v355 = vmul.f32 %v317, %v326
      %v356 = vmul.f32 %v318, %v326
      %v357 = vmul.f32 %v319, %v326
      %v358 = vmul.f32 %v320, %v326
      %v359 = vmul.f32 %v321, %v326
      %v361 = vlaneseq
      %v362 = vshrl.u32 %v361, 7
      %v363 = vsub.s32 0, %v362
      %v364 = vrot.slane %v257, %v363
      %v366 = vadd.f32 %v328, %v364
      %v367 = vadd.f32 %v329, %v364
      %v368 = vadd.f32 %v330, %v364
      %v369 = vadd.f32 %v331, %v364
      %v370 = vadd.f32 %v332, %v364
      %v371 = vadd.f32 %v333, %v364
      %v372 = vadd.f32 %v334, %v364
      %v373 = vadd.f32 %v335, %v364
      %v374 = vadd.f32 %v336, %v364
      %v375 = vadd.f32 %v337, %v364
      %v376 = vadd.f32 %v338, %v364
      %v377 = vadd.f32 %v339, %v364
      %v378 = vadd.f32 %v340, %v364
      %v379 = vadd.f32 %v341, %v364
      %v380 = vadd.f32 %v342, %v364
      %v381 = vadd.f32 %v343, %v364
      %v382 = vadd.f32 %v344, %v364
      %v383 = vadd.f32 %v345, %v364
      %v384 = vadd.f32 %v346, %v364
      %v385 = vadd.f32 %v347, %v364
      %v386 = vadd.f32 %v348, %v364
      %v387 = vadd.f32 %v349, %v364
      %v388 = vadd.f32 %v350, %v364
      %v389 = vadd.f32 %v351, %v364
      %v390 = vadd.f32 %v352, %v364
      %v391 = vadd.f32 %v353, %v364
      %v392 = vadd.f32 %v354, %v364
      %v393 = vadd.f32 %v355, %v364
      %v394 = vadd.f32 %v356, %v364
      %v395 = vadd.f32 %v357, %v364
      %v396 = vadd.f32 %v358, %v364
      %v397 = vadd.f32 %v359, %v364
      %v398 = vmax.f32 %v366, 0.0
      %v399 = vmax.f32 %v367, 0.0
      %v400 = vmax.f32 %v368, 0.0
      %v401 = vmax.f32 %v369, 0.0
      %v402 = vmax.f32 %v370, 0.0
      %v403 = vmax.f32 %v371, 0.0
      %v404 = vmax.f32 %v372, 0.0
      %v405 = vmax.f32 %v373, 0.0
      %v406 = vmax.f32 %v374, 0.0
      %v407 = vmax.f32 %v375, 0.0
      %v408 = vmax.f32 %v376, 0.0
      %v409 = vmax.f32 %v377, 0.0
      %v410 = vmax.f32 %v378, 0.0
      %v411 = vmax.f32 %v379, 0.0
      %v412 = vmax.f32 %v380, 0.0
      %v413 = vmax.f32 %v381, 0.0
      %v414 = vmax.f32 %v382, 0.0
      %v415 = vmax.f32 %v383, 0.0
      %v416 = vmax.f32 %v384, 0.0
      %v417 = vmax.f32 %v385, 0.0
      %v418 = vmax.f32 %v386, 0.0
      %v419 = vmax.f32 %v387, 0.0
      %v420 = vmax.f32 %v388, 0.0
      %v421 = vmax.f32 %v389, 0.0
      %v422 = vmax.f32 %v390, 0.0
      %v423 = vmax.f32 %v391, 0.0
      %v424 = vmax.f32 %v392, 0.0
      %v425 = vmax.f32 %v393, 0.0
      %v426 = vmax.f32 %v394, 0.0
      %v427 = vmax.f32 %v395, 0.0
      %v428 = vmax.f32 %v396, 0.0
      %v429 = vmax.f32 %v397, 0.0
      %v430 = vpack.c.bf16 %v399, %v398
      %v431 = vpack.c.bf16 %v401, %v400
      %v432 = vpack.c.bf16 %v403, %v402
      %v433 = vpack.c.bf16 %v405, %v404
      %v434 = vpack.c.bf16 %v407, %v406
      %v435 = vpack.c.bf16 %v409, %v408
      %v436 = vpack.c.bf16 %v411, %v410
      %v437 = vpack.c.bf16 %v413, %v412
      %v438 = vpack.c.bf16 %v415, %v414
      %v439 = vpack.c.bf16 %v417, %v416
      %v440 = vpack.c.bf16 %v419, %v418
      %v441 = vpack.c.bf16 %v421, %v420
      %v442 = vpack.c.bf16 %v423, %v422
      %v443 = vpack.c.bf16 %v425, %v424
      %v444 = vpack.c.bf16 %v427, %v426
      %v445 = vpack.c.bf16 %v429, %v428
      %v446 = vld [vmem:[%s1] sm:$0xf]
      %v447 = vld [vmem:[%s1 + $0x4] sm:$0xf]
      %v448 = vld [vmem:[%s1 + $0x8] sm:$0xf]
      %v449 = vld [vmem:[%s1 + $0xc] sm:$0xf]
      %v450 = vld [vmem:[%s1 + $0x10] sm:$0xf]
      %v451 = vld [vmem:[%s1 + $0x14] sm:$0xf]
      %v452 = vld [vmem:[%s1 + $0x18] sm:$0xf]
      %v453 = vld [vmem:[%s1 + $0x1c] sm:$0xf]
      %v462 = vunpack.c.l.b16 %v446
      %v463 = vunpack.c.l.b16 %v447
      %v464 = vunpack.c.l.b16 %v448
      %v465 = vunpack.c.l.b16 %v449
      %v466 = vunpack.c.l.b16 %v450
      %v467 = vunpack.c.l.b16 %v451
      %v468 = vunpack.c.l.b16 %v452
      %v469 = vunpack.c.l.b16 %v453
      %v470 = vpack.c.b16 %v463, %v462
      %v471 = vpack.c.b16 %v465, %v464
      %v472 = vpack.c.b16 %v467, %v466
      %v473 = vpack.c.b16 %v469, %v468
      %vm478 = vcmask 523264
      %v480 = vsel %vm478, %v430, 0
      %v483 = vsel %vm478, %v431, 0
      %v486 = vsel %vm478, %v432, 0
      %v489 = vsel %vm478, %v433, 0
      %v492 = vsel %vm478, %v434, 0
      %v495 = vsel %vm478, %v435, 0
      %v498 = vsel %vm478, %v436, 0
      %v501 = vsel %vm478, %v437, 0
      %v504 = vsel %vm478, %v438, 0
      %v507 = vsel %vm478, %v439, 0
      %v510 = vsel %vm478, %v440, 0
      %v513 = vsel %vm478, %v441, 0
      %v516 = vsel %vm478, %v442, 0
      %v519 = vsel %vm478, %v443, 0
      %v522 = vsel %vm478, %v444, 0
      %v525 = vsel %vm478, %v445, 0
      %527 = vmatprep.subr.bf16.mxu0 0
      %528 = vmatpush1.bf16.msra.mxu0 0
      %529 = vmatprep.subr.bf16.mxu0 0
      %530 = vmatpush1.bf16.msra.mxu0 0
      %531 = vmatprep.subr.bf16.mxu0 0
      %532 = vmatpush1.bf16.msra.mxu0 0
      %533 = vmatprep.subr.bf16.mxu0 0
      %534 = vmatpush1.bf16.msra.mxu0 0
      %535 = vmatprep.subr.bf16.mxu0 0
      %536 = vmatpush1.bf16.msra.mxu0 %v473
      %537 = vmatprep.subr.bf16.mxu0 0
      %538 = vmatpush1.bf16.msra.mxu0 %v472
      %539 = vmatprep.subr.bf16.mxu0 0
      %540 = vmatpush1.bf16.msra.mxu0 %v471
      %541 = vmatprep.subr.bf16.mxu0 0
      %542 = vmatpush1.bf16.msra.mxu0 %v470
      %543 = vmatprep.subr.bf16.mxu0 0
      %544 = vmatpush2.bf16.msra.mxu0 0
      %545 = vmatprep.subr.bf16.mxu0 0
      %546 = vmatpush2.bf16.msra.mxu0 0
      %547 = vmatprep.subr.bf16.mxu0 0
      %548 = vmatpush2.bf16.msra.mxu0 0
      %549 = vmatprep.subr.bf16.mxu0 0
      %550 = vmatpush2.bf16.msra.mxu0 0
      %551 = vmatprep.subr.bf16.mxu0 0
      %552 = vmatpush2.bf16.msra.mxu0 0
      %553 = vmatprep.subr.bf16.mxu0 0
      %554 = vmatpush2.bf16.msra.mxu0 0
      %555 = vmatprep.subr.bf16.mxu0 0
      %556 = vmatpush2.bf16.msra.mxu0 0
      %557 = vmatprep.subr.bf16.mxu0 0
      %558 = vmatpush2.bf16.msra.mxu0 0
      %559 = vmatprep.mubr.bf16.mxu0 0
      %560 = vmatmul.mubr.bf16.gmra.mxu0 %v480
      %v561 = vpop.f32.mrf.mxu0
      %v562 = vadd.f32 0.0, %v561
      %v563 = vpop.f32.mrf.mxu0
      %v564 = vpop.f32.mrf.mxu0
      %v565 = vadd.f32 0.0, %v564
      %v566 = vpop.f32.mrf.mxu0
      %567 = vmatprep.mubr.bf16.mxu0 0
      %568 = vmatmul.mubr.bf16.gmra.mxu0 %v483
      %v569 = vpop.f32.mrf.mxu0
      %v570 = vadd.f32 0.0, %v569
      %v571 = vpop.f32.mrf.mxu0
      %v572 = vpop.f32.mrf.mxu0
      %v573 = vadd.f32 0.0, %v572
      %v574 = vpop.f32.mrf.mxu0
      %575 = vmatprep.mubr.bf16.mxu0 0
      %576 = vmatmul.mubr.bf16.gmra.mxu0 %v486
      %v577 = vpop.f32.mrf.mxu0
      %v578 = vadd.f32 0.0, %v577
      %v579 = vpop.f32.mrf.mxu0
      %v580 = vpop.f32.mrf.mxu0
      %v581 = vadd.f32 0.0, %v580
      %v582 = vpop.f32.mrf.mxu0
      %583 = vmatprep.mubr.bf16.mxu0 0
      %584 = vmatmul.mubr.bf16.gmra.mxu0 %v489
      %v585 = vpop.f32.mrf.mxu0
      %v586 = vadd.f32 0.0, %v585
      %v587 = vpop.f32.mrf.mxu0
      %v588 = vpop.f32.mrf.mxu0
      %v589 = vadd.f32 0.0, %v588
      %v590 = vpop.f32.mrf.mxu0
      %591 = vmatprep.mubr.bf16.mxu0 0
      %592 = vmatmul.mubr.bf16.gmra.mxu0 %v492
      %v593 = vpop.f32.mrf.mxu0
      %v594 = vadd.f32 0.0, %v593
      %v595 = vpop.f32.mrf.mxu0
      %v596 = vpop.f32.mrf.mxu0
      %v597 = vadd.f32 0.0, %v596
      %v598 = vpop.f32.mrf.mxu0
      %599 = vmatprep.mubr.bf16.mxu0 0
      %600 = vmatmul.mubr.bf16.gmra.mxu0 %v495
      %v601 = vpop.f32.mrf.mxu0
      %v602 = vadd.f32 0.0, %v601
      %v603 = vpop.f32.mrf.mxu0
      %v604 = vpop.f32.mrf.mxu0
      %v605 = vadd.f32 0.0, %v604
      %v606 = vpop.f32.mrf.mxu0
      %607 = vmatprep.mubr.bf16.mxu0 0
      %608 = vmatmul.mubr.bf16.gmra.mxu0 %v498
      %v609 = vpop.f32.mrf.mxu0
      %v610 = vadd.f32 0.0, %v609
      %v611 = vpop.f32.mrf.mxu0
      %v612 = vpop.f32.mrf.mxu0
      %v613 = vadd.f32 0.0, %v612
      %v614 = vpop.f32.mrf.mxu0
      %615 = vmatprep.mubr.bf16.mxu0 0
      %616 = vmatmul.mubr.bf16.gmra.mxu0 %v501
      %v617 = vpop.f32.mrf.mxu0
      %v618 = vadd.f32 0.0, %v617
      %v619 = vpop.f32.mrf.mxu0
      %v620 = vpop.f32.mrf.mxu0
      %v621 = vadd.f32 0.0, %v620
      %v622 = vpop.f32.mrf.mxu0
      %623 = vmatprep.mubr.bf16.mxu0 0
      %624 = vmatmul.mubr.bf16.gmra.mxu0 %v504
      %v625 = vpop.f32.mrf.mxu0
      %v626 = vadd.f32 0.0, %v625
      %v627 = vpop.f32.mrf.mxu0
      %v628 = vpop.f32.mrf.mxu0
      %v629 = vadd.f32 0.0, %v628
      %v630 = vpop.f32.mrf.mxu0
      %631 = vmatprep.mubr.bf16.mxu0 0
      %632 = vmatmul.mubr.bf16.gmra.mxu0 %v507
      %v633 = vpop.f32.mrf.mxu0
      %v634 = vadd.f32 0.0, %v633
      %v635 = vpop.f32.mrf.mxu0
      %v636 = vpop.f32.mrf.mxu0
      %v637 = vadd.f32 0.0, %v636
      %v638 = vpop.f32.mrf.mxu0
      %639 = vmatprep.mubr.bf16.mxu0 0
      %640 = vmatmul.mubr.bf16.gmra.mxu0 %v510
      %v641 = vpop.f32.mrf.mxu0
      %v642 = vadd.f32 0.0, %v641
      %v643 = vpop.f32.mrf.mxu0
      %v644 = vpop.f32.mrf.mxu0
      %v645 = vadd.f32 0.0, %v644
      %v646 = vpop.f32.mrf.mxu0
      %647 = vmatprep.mubr.bf16.mxu0 0
      %648 = vmatmul.mubr.bf16.gmra.mxu0 %v513
      %v649 = vpop.f32.mrf.mxu0
      %v650 = vadd.f32 0.0, %v649
      %v651 = vpop.f32.mrf.mxu0
      %v652 = vpop.f32.mrf.mxu0
      %v653 = vadd.f32 0.0, %v652
      %v654 = vpop.f32.mrf.mxu0
      %655 = vmatprep.mubr.bf16.mxu0 0
      %656 = vmatmul.mubr.bf16.gmra.mxu0 %v516
      %v657 = vpop.f32.mrf.mxu0
      %v658 = vadd.f32 0.0, %v657
      %v659 = vpop.f32.mrf.mxu0
      %v660 = vpop.f32.mrf.mxu0
      %v661 = vadd.f32 0.0, %v660
      %v662 = vpop.f32.mrf.mxu0
      %663 = vmatprep.mubr.bf16.mxu0 0
      %664 = vmatmul.mubr.bf16.gmra.mxu0 %v519
      %v665 = vpop.f32.mrf.mxu0
      %v666 = vadd.f32 0.0, %v665
      %v667 = vpop.f32.mrf.mxu0
      %v668 = vpop.f32.mrf.mxu0
      %v669 = vadd.f32 0.0, %v668
      %v670 = vpop.f32.mrf.mxu0
      %671 = vmatprep.mubr.bf16.mxu0 0
      %672 = vmatmul.mubr.bf16.gmra.mxu0 %v522
      %v673 = vpop.f32.mrf.mxu0
      %v674 = vadd.f32 0.0, %v673
      %v675 = vpop.f32.mrf.mxu0
      %v676 = vpop.f32.mrf.mxu0
      %v677 = vadd.f32 0.0, %v676
      %v678 = vpop.f32.mrf.mxu0
      %679 = vmatprep.mubr.bf16.mxu0 0
      %680 = vmatmul.mubr.bf16.gmra.mxu0 %v525
      %v681 = vpop.f32.mrf.mxu0
      %v682 = vadd.f32 0.0, %v681
      %v683 = vpop.f32.mrf.mxu0
      %v684 = vpop.f32.mrf.mxu0
      %v685 = vadd.f32 0.0, %v684
      %v686 = vpop.f32.mrf.mxu0
      %687 = vdwg.mxu0
      %v688 = vld [vmem:[%s4] sm:$0x1]
      %v689 = vld [vmem:[%s5] sm:$0x1]
      %v691 = vlaneseq
      %v692 = vshrl.u32 %v691, 7
      %v693 = vsub.s32 0, %v692
      %v694 = vrot.slane %v688, %v693
      %v696 = vmul.f32 %v562, %v694
      %v697 = vmul.f32 %v565, %v694
      %v698 = vmul.f32 %v570, %v694
      %v699 = vmul.f32 %v573, %v694
      %v700 = vmul.f32 %v578, %v694
      %v701 = vmul.f32 %v581, %v694
      %v702 = vmul.f32 %v586, %v694
      %v703 = vmul.f32 %v589, %v694
      %v704 = vmul.f32 %v594, %v694
      %v705 = vmul.f32 %v597, %v694
      %v706 = vmul.f32 %v602, %v694
      %v707 = vmul.f32 %v605, %v694
      %v708 = vmul.f32 %v610, %v694
      %v709 = vmul.f32 %v613, %v694
      %v710 = vmul.f32 %v618, %v694
      %v711 = vmul.f32 %v621, %v694
      %v712 = vmul.f32 %v626, %v694
      %v713 = vmul.f32 %v629, %v694
      %v714 = vmul.f32 %v634, %v694
      %v715 = vmul.f32 %v637, %v694
      %v716 = vmul.f32 %v642, %v694
      %v717 = vmul.f32 %v645, %v694
      %v718 = vmul.f32 %v650, %v694
      %v719 = vmul.f32 %v653, %v694
      %v720 = vmul.f32 %v658, %v694
      %v721 = vmul.f32 %v661, %v694
      %v722 = vmul.f32 %v666, %v694
      %v723 = vmul.f32 %v669, %v694
      %v724 = vmul.f32 %v674, %v694
      %v725 = vmul.f32 %v677, %v694
      %v726 = vmul.f32 %v682, %v694
      %v727 = vmul.f32 %v685, %v694
      %v729 = vlaneseq
      %v730 = vshrl.u32 %v729, 7
      %v731 = vsub.s32 0, %v730
      %v732 = vrot.slane %v689, %v731
      %v734 = vadd.f32 %v696, %v732
      %v735 = vadd.f32 %v697, %v732
      %v736 = vadd.f32 %v698, %v732
      %v737 = vadd.f32 %v699, %v732
      %v738 = vadd.f32 %v700, %v732
      %v739 = vadd.f32 %v701, %v732
      %v740 = vadd.f32 %v702, %v732
      %v741 = vadd.f32 %v703, %v732
      %v742 = vadd.f32 %v704, %v732
      %v743 = vadd.f32 %v705, %v732
      %v744 = vadd.f32 %v706, %v732
      %v745 = vadd.f32 %v707, %v732
      %v746 = vadd.f32 %v708, %v732
      %v747 = vadd.f32 %v709, %v732
      %v748 = vadd.f32 %v710, %v732
      %v749 = vadd.f32 %v711, %v732
      %v750 = vadd.f32 %v712, %v732
      %v751 = vadd.f32 %v713, %v732
      %v752 = vadd.f32 %v714, %v732
      %v753 = vadd.f32 %v715, %v732
      %v754 = vadd.f32 %v716, %v732
      %v755 = vadd.f32 %v717, %v732
      %v756 = vadd.f32 %v718, %v732
      %v757 = vadd.f32 %v719, %v732
      %v758 = vadd.f32 %v720, %v732
      %v759 = vadd.f32 %v721, %v732
      %v760 = vadd.f32 %v722, %v732
      %v761 = vadd.f32 %v723, %v732
      %v762 = vadd.f32 %v724, %v732
      %v763 = vadd.f32 %v725, %v732
      %v764 = vadd.f32 %v726, %v732
      %v765 = vadd.f32 %v727, %v732
      %v766 = vmax.f32 %v734, 0.0
      %v767 = vmax.f32 %v735, 0.0
      %v768 = vmax.f32 %v736, 0.0
      %v769 = vmax.f32 %v737, 0.0
      %v770 = vmax.f32 %v738, 0.0
      %v771 = vmax.f32 %v739, 0.0
      %v772 = vmax.f32 %v740, 0.0
      %v773 = vmax.f32 %v741, 0.0
      %v774 = vmax.f32 %v742, 0.0
      %v775 = vmax.f32 %v743, 0.0
      %v776 = vmax.f32 %v744, 0.0
      %v777 = vmax.f32 %v745, 0.0
      %v778 = vmax.f32 %v746, 0.0
      %v779 = vmax.f32 %v747, 0.0
      %v780 = vmax.f32 %v748, 0.0
      %v781 = vmax.f32 %v749, 0.0
      %v782 = vmax.f32 %v750, 0.0
      %v783 = vmax.f32 %v751, 0.0
      %v784 = vmax.f32 %v752, 0.0
      %v785 = vmax.f32 %v753, 0.0
      %v786 = vmax.f32 %v754, 0.0
      %v787 = vmax.f32 %v755, 0.0
      %v788 = vmax.f32 %v756, 0.0
      %v789 = vmax.f32 %v757, 0.0
      %v790 = vmax.f32 %v758, 0.0
      %v791 = vmax.f32 %v759, 0.0
      %v792 = vmax.f32 %v760, 0.0
      %v793 = vmax.f32 %v761, 0.0
      %v794 = vmax.f32 %v762, 0.0
      %v795 = vmax.f32 %v763, 0.0
      %v796 = vmax.f32 %v764, 0.0
      %v797 = vmax.f32 %v765, 0.0
      %vm798 = vcmask 261120
      %799 = vst.msk [vmem:[%s253] sm:$0xff] %vm798, %v766
      %800 = vst.msk [vmem:[%s253 + $0x8] sm:$0xff] %vm798, %v767
      %801 = vst.msk [vmem:[%s253 + $0x10] sm:$0xff] %vm798, %v768
      %802 = vst.msk [vmem:[%s253 + $0x18] sm:$0xff] %vm798, %v769
      %803 = vst.msk [vmem:[%s253 + $0x20] sm:$0xff] %vm798, %v770
      %804 = vst.msk [vmem:[%s253 + $0x28] sm:$0xff] %vm798, %v771
      %805 = vst.msk [vmem:[%s253 + $0x30] sm:$0xff] %vm798, %v772
      %806 = vst.msk [vmem:[%s253 + $0x38] sm:$0xff] %vm798, %v773
      %807 = vst.msk [vmem:[%s253 + $0x40] sm:$0xff] %vm798, %v774
      %808 = vst.msk [vmem:[%s253 + $0x48] sm:$0xff] %vm798, %v775
      %809 = vst.msk [vmem:[%s253 + $0x50] sm:$0xff] %vm798, %v776
      %810 = vst.msk [vmem:[%s253 + $0x58] sm:$0xff] %vm798, %v777
      %811 = vst.msk [vmem:[%s253 + $0x60] sm:$0xff] %vm798, %v778
      %812 = vst.msk [vmem:[%s253 + $0x68] sm:$0xff] %vm798, %v779
      %813 = vst.msk [vmem:[%s253 + $0x70] sm:$0xff] %vm798, %v780
      %814 = vst.msk [vmem:[%s253 + $0x78] sm:$0xff] %vm798, %v781
      %815 = vst.msk [vmem:[%s253 + $0x80] sm:$0xff] %vm798, %v782
      %816 = vst.msk [vmem:[%s253 + $0x88] sm:$0xff] %vm798, %v783
      %817 = vst.msk [vmem:[%s253 + $0x90] sm:$0xff] %vm798, %v784
      %818 = vst.msk [vmem:[%s253 + $0x98] sm:$0xff] %vm798, %v785
      %819 = vst.msk [vmem:[%s253 + $0xa0] sm:$0xff] %vm798, %v786
      %820 = vst.msk [vmem:[%s253 + $0xa8] sm:$0xff] %vm798, %v787
      %821 = vst.msk [vmem:[%s253 + $0xb0] sm:$0xff] %vm798, %v788
      %822 = vst.msk [vmem:[%s253 + $0xb8] sm:$0xff] %vm798, %v789
      %823 = vst.msk [vmem:[%s253 + $0xc0] sm:$0xff] %vm798, %v790
      %824 = vst.msk [vmem:[%s253 + $0xc8] sm:$0xff] %vm798, %v791
      %825 = vst.msk [vmem:[%s253 + $0xd0] sm:$0xff] %vm798, %v792
      %826 = vst.msk [vmem:[%s253 + $0xd8] sm:$0xff] %vm798, %v793
      %827 = vst.msk [vmem:[%s253 + $0xe0] sm:$0xff] %vm798, %v794
      %828 = vst.msk [vmem:[%s253 + $0xe8] sm:$0xff] %vm798, %v795
      %829 = vst.msk [vmem:[%s253 + $0xf0] sm:$0xff] %vm798, %v796
      %830 = vst.msk [vmem:[%s253 + $0xf8] sm:$0xff] %vm798, %v797
      %s831 = smul.u32 32, %s17
      %p832 = scmp.lt.s32.totalorder %s831, 63
      %s833 = scalar_select %p832, %s831, 63
      %s834 = smul.addr %s833, 8
      %s835 = scalar_lea.vmem %s6, %s834
      // Predicated region
      $region45: #{_lambda_.5} parent=43 // pred_check
        %p836 = pneg %p166
      $region46: #{_lambda_.5} parent=43 // pred_check_branch
        %838 = sbr.rel (%p836) target = $region48
      $region47: #{_lambda_.5} parent=43 // pred_region
        %s839 = smul.u32 32, %s17
      $region48: #{_lambda_.5} parent=43 // pred_fallthru
        _
    $region44: #{_lambda_.5} parent=5 // pred_fallthru
      _
    %p840 = scmp.le.s32.totalorder 2, %s12
    // Predicated region
    $region49: #{_lambda_.5} parent=5 // pred_check
      %p841 = pneg %p840
    $region50: #{_lambda_.5} parent=5 // pred_check_branch
      %843 = sbr.rel (%p841) target = $region52
    $region51: #{_lambda_.5} parent=5 // pred_region
      %s844 = ssub.s32 %s12, 2
      // Predicated region
      $region53: #{_lambda_.5} parent=51 // pred_check
        %p845 = pneg %p172
      $region54: #{_lambda_.5} parent=51 // pred_check_branch
        %847 = sbr.rel (%p845) target = $region56
      $region55: #{_lambda_.5} parent=51 // pred_region
        %s848 = smul.u32 32, %s18
        %p849 = scmp.lt.s32.totalorder %s848, 63
        %s850 = scalar_select %p849, %s848, 63
        %s851 = smul.addr %s850, 8
        %s852 = scalar_lea.vmem %s6, %s851
      $region56: #{_lambda_.5} parent=51 // pred_fallthru
        _
    $region52: #{_lambda_.5} parent=5 // pred_fallthru
      _
  $region6: #{_lambda_.5} parent=0 // loop_footer
    %s16 = sadd.s32 1, %s12
  $region7: #{_lambda_.5} parent=0 // loop_footer_branch
    %11 = sbr.rel target = $region3
  $region8: #{_lambda_.5} parent=0 // loop_exit
    _

// kernel: _lambda_.4
$region0: #{_lambda_.4}
  #allocation0 [shape = 'u32[]', space=smem, size = 0x4, offset = 0x4, fixed_abs, tag = 'smem constant byte address 0x4 - core index']
  #allocation1 [shape = 'u32[144,128]{1,0:T(1,128)}', space=vmem, size = 0x12000, scoped, tag = 'internal scratch']
  %s0 = inlined_call_operand.vmem [shape: bf16[512,64], index: 0, kind: input, shape index: {}]
  %s1 = inlined_call_operand.vmem [shape: bf16[64,128], index: 1, kind: input, shape index: {}]
  %s2 = inlined_call_operand.vmem [shape: f32[1,64], index: 2, kind: input, shape index: {}]
  %s3 = inlined_call_operand.vmem [shape: f32[1,64], index: 3, kind: input, shape index: {}]
  %s4 = inlined_call_operand.vmem [shape: f32[512,128], index: 4, kind: output, shape index: {}]
  %s5 = sld [smem:[#allocation0]]
  $region49: #{_lambda_.4} parent=0
    _
  %s7 = ssub.s32 1, %s5
  %s8 = scalar_select 0, %s7, %s5
  loop: start=0, step=1, limit=4
  $region2: #{_lambda_.4} parent=0 // loop_pre_header
    _
  $region3: #{_lambda_.4} parent=0 // loop_header
    %s10 = sphi 0, %s14
    %p11 = scmp.ge.s32.totalorder %s10, 4
    %s20 = sphi 0, %s22
    %s23 = sphi 0, %s20
    %s24 = sphi 0, %s23
    %s40 = sphi 0, %s24
    %s44 = sphi 0, %s44
    %s46 = sphi 0, %s44
    %s47 = sphi 0, %s46
    %s61 = sphi 0, %s47
    %s65 = sphi 0, %s65
    %s67 = sphi 0, %s65
    %s68 = sphi 0, %s67
    %s82 = sphi 0, %s68
    %s86 = sphi 0, %s86
    %s88 = sphi 0, %s86
    %s89 = sphi 0, %s88
    %s103 = sphi 0, %s89
    %s109 = sphi 0, %s111
    %s112 = sphi 0, %s109
    %s113 = sphi 0, %s112
    %s129 = sphi 0, %s113
  $region4: #{_lambda_.4} parent=0 // loop_header_branch
    %13 = sbr.rel (%p11) target = $region8
  $region5: #{_lambda_.4} parent=0 // loop_body
    %s15 = ssub.s32 %s10, 1
    %s16 = ssub.s32 %s10, 2
    %s17 = sadd.s32 %s10, 1
    %s18 = ssub.s32 %s10, %s17
    %p19 = scmp.eq.s32.totalorder %s18, 0
    %s21 = sadd.s32 %s20, 1
    %s22 = scalar_select %p19, %s20, %s21
    %p25 = pneg %p19
    %p26 = scmp.eq.s32.totalorder %s10, 1
    %p27 = por %p25, %p26
    %p28 = scmp.ne.s32.totalorder %s20, %s23
    %p29 = scmp.eq.s32.totalorder %s10, 0
    %p30 = por %p28, %p29
    %p31 = scmp.ne.s32.totalorder %s20, %s23
    %p32 = scmp.eq.s32.totalorder %s15, 1
    %p33 = por %p31, %p32
    %p34 = scmp.ne.s32.totalorder %s23, %s24
    %p35 = scmp.eq.s32.totalorder %s15, 0
    %p36 = por %p34, %p35
    %p37 = scmp.ne.s32.totalorder %s23, %s24
    %p38 = scmp.eq.s32.totalorder %s16, 1
    %p39 = por %p37, %p38
    %p41 = scmp.ne.s32.totalorder %s24, %s40
    %p42 = scmp.eq.s32.totalorder %s16, 0
    %p43 = por %p41, %p42
    %s45 = sadd.s32 %s44, 1
    %p48 = scmp.eq.s32.totalorder %s10, 1
    %p49 = scmp.ne.s32.totalorder %s44, %s46
    %p50 = scmp.eq.s32.totalorder %s10, 0
    %p51 = por %p49, %p50
    %p52 = scmp.ne.s32.totalorder %s44, %s46
    %p53 = scmp.eq.s32.totalorder %s15, 1
    %p54 = por %p52, %p53
    %p55 = scmp.ne.s32.totalorder %s46, %s47
    %p56 = scmp.eq.s32.totalorder %s15, 0
    %p57 = por %p55, %p56
    %p58 = scmp.ne.s32.totalorder %s46, %s47
    %p59 = scmp.eq.s32.totalorder %s16, 1
    %p60 = por %p58, %p59
    %p62 = scmp.ne.s32.totalorder %s47, %s61
    %p63 = scmp.eq.s32.totalorder %s16, 0
    %p64 = por %p62, %p63
    %s66 = sadd.s32 %s65, 1
    %p69 = scmp.eq.s32.totalorder %s10, 1
    %p70 = scmp.ne.s32.totalorder %s65, %s67
    %p71 = scmp.eq.s32.totalorder %s10, 0
    %p72 = por %p70, %p71
    %p73 = scmp.ne.s32.totalorder %s65, %s67
    %p74 = scmp.eq.s32.totalorder %s15, 1
    %p75 = por %p73, %p74
    %p76 = scmp.ne.s32.totalorder %s67, %s68
    %p77 = scmp.eq.s32.totalorder %s15, 0
    %p78 = por %p76, %p77
    %p79 = scmp.ne.s32.totalorder %s67, %s68
    %p80 = scmp.eq.s32.totalorder %s16, 1
    %p81 = por %p79, %p80
    %p83 = scmp.ne.s32.totalorder %s68, %s82
    %p84 = scmp.eq.s32.totalorder %s16, 0
    %p85 = por %p83, %p84
    %s87 = sadd.s32 %s86, 1
    %p90 = scmp.eq.s32.totalorder %s10, 1
    %p91 = scmp.ne.s32.totalorder %s86, %s88
    %p92 = scmp.eq.s32.totalorder %s10, 0
    %p93 = por %p91, %p92
    %p94 = scmp.ne.s32.totalorder %s86, %s88
    %p95 = scmp.eq.s32.totalorder %s15, 1
    %p96 = por %p94, %p95
    %p97 = scmp.ne.s32.totalorder %s88, %s89
    %p98 = scmp.eq.s32.totalorder %s15, 0
    %p99 = por %p97, %p98
    %p100 = scmp.ne.s32.totalorder %s88, %s89
    %p101 = scmp.eq.s32.totalorder %s16, 1
    %p102 = por %p100, %p101
    %p104 = scmp.ne.s32.totalorder %s89, %s103
    %p105 = scmp.eq.s32.totalorder %s16, 0
    %p106 = por %p104, %p105
    %s107 = ssub.s32 %s10, %s17
    %p108 = scmp.eq.s32.totalorder %s107, 0
    %s110 = sadd.s32 %s109, 1
    %s111 = scalar_select %p108, %s109, %s110
    %p114 = pneg %p108
    %p115 = scmp.eq.s32.totalorder %s10, 1
    %p116 = por %p114, %p115
    %p117 = scmp.ne.s32.totalorder %s109, %s112
    %p118 = scmp.eq.s32.totalorder %s10, 0
    %p119 = por %p117, %p118
    %p120 = scmp.ne.s32.totalorder %s109, %s112
    %p121 = scmp.eq.s32.totalorder %s15, 1
    %p122 = por %p120, %p121
    %p123 = scmp.ne.s32.totalorder %s112, %s113
    %p124 = scmp.eq.s32.totalorder %s15, 0
    %p125 = por %p123, %p124
    %p126 = scmp.ne.s32.totalorder %s112, %s113
    %p127 = scmp.eq.s32.totalorder %s16, 1
    %p128 = por %p126, %p127
    %p130 = scmp.ne.s32.totalorder %s113, %s129
    %p131 = scmp.eq.s32.totalorder %s16, 0
    %p132 = por %p130, %p131
    %p133 = scmp.le.s32.totalorder 1, %s10
    %p134 = scmp.lt.s32.totalorder %s10, 3
    %p135 = pnand %p133, %p134
    %p136 = pneg %p135
    // Predicated region
    $region9: #{_lambda_.4} parent=5 // pred_check
      _
    $region10: #{_lambda_.4} parent=5 // pred_check_branch
      %138 = sbr.rel (%p135) target = $region12
    $region11: #{_lambda_.4} parent=5 // pred_region
      %s139 = ssub.s32 %s10, 1
      // Predicated region
      $region13: #{_lambda_.4} parent=11 // pred_check
        %p140 = pneg %p57
      $region14: #{_lambda_.4} parent=11 // pred_check_branch
        %142 = sbr.rel (%p140) target = $region16
      $region15: #{_lambda_.4} parent=11 // pred_region
        _
      $region16: #{_lambda_.4} parent=11 // pred_fallthru
        _
      // Predicated region
      $region17: #{_lambda_.4} parent=11 // pred_check
        %p143 = pneg %p78
      $region18: #{_lambda_.4} parent=11 // pred_check_branch
        %145 = sbr.rel (%p143) target = $region20
      $region19: #{_lambda_.4} parent=11 // pred_region
        _
      $region20: #{_lambda_.4} parent=11 // pred_fallthru
        _
      // Predicated region
      $region21: #{_lambda_.4} parent=11 // pred_check
        %p146 = pneg %p99
      $region22: #{_lambda_.4} parent=11 // pred_check_branch
        %148 = sbr.rel (%p146) target = $region24
      $region23: #{_lambda_.4} parent=11 // pred_region
        _
      $region24: #{_lambda_.4} parent=11 // pred_fallthru
        _
    $region12: #{_lambda_.4} parent=5 // pred_fallthru
      _
    %p149 = scmp.lt.s32.totalorder %s10, 2
    // Predicated region
    $region25: #{_lambda_.4} parent=5 // pred_check
      %p150 = pneg %p149
    $region26: #{_lambda_.4} parent=5 // pred_check_branch
      %152 = sbr.rel (%p150) target = $region28
    $region27: #{_lambda_.4} parent=5 // pred_region
      // Predicated region
      $region29: #{_lambda_.4} parent=27 // pred_check
        %p153 = pneg %p30
      $region30: #{_lambda_.4} parent=27 // pred_check_branch
        %155 = sbr.rel (%p153) target = $region32
      $region31: #{_lambda_.4} parent=27 // pred_region
        %s156 = smul.u32 32, %s10
        %p157 = scmp.lt.s32.totalorder %s156, 63
        %s158 = scalar_select %p157, %s156, 63
        %s159 = smul.addr %s158, 4
        %s160 = scalar_lea.vmem %s0, %s159
        %s161 = smul.u32 32, %s10
      $region32: #{_lambda_.4} parent=27 // pred_fallthru
        _
    $region28: #{_lambda_.4} parent=5 // pred_fallthru
      _
    %p162 = scmp.le.s32.totalorder 1, %s10
    %p163 = scmp.lt.s32.totalorder %s10, 3
    %p164 = pnand %p162, %p163
    %p165 = pneg %p164
    // Predicated region
    $region33: #{_lambda_.4} parent=5 // pred_check
      _
    $region34: #{_lambda_.4} parent=5 // pred_check_branch
      %167 = sbr.rel (%p164) target = $region36
    $region35: #{_lambda_.4} parent=5 // pred_region
      %s168 = ssub.s32 %s10, 1
      %s169 = smul.u32 32, %s15
      %p170 = scmp.lt.s32.totalorder %s169, 63
      %s171 = scalar_select %p170, %s169, 63
      %s172 = smul.addr %s171, 4
      %s173 = scalar_lea.vmem %s0, %s172
      %p174 = pneg %p36
      %p175 = pneg %p33
      %p176 = pneg %p57
      %p177 = pneg %p54
      %p178 = pneg %p78
      %p179 = pneg %p75
      %p180 = pneg %p99
      %p181 = pneg %p96
      %p182 = pneg %p125
      %p183 = pneg %p122
      %s184 = smul.u32 32, %s15
      %p185 = scmp.lt.s32.totalorder %s184, 63
      %s186 = scalar_select %p185, %s184, 63
      %s187 = smul.addr %s186, 8
      %s188 = scalar_lea.vmem %s4, %s187
      %s189 = smul.u32 32, %s15
      %p190 = scmp.lt.s32.totalorder %s189, 63
      %s191 = scalar_select %p190, %s189, 63
      %s192 = smul.addr %s191, 4
      %s193 = scalar_lea.vmem %s0, %s192
      %s194 = smul.u32 32, %s15
      %s195 = smul.u32 32, %s15
      %p196 = scmp.lt.s32.totalorder %s195, 63
      %s197 = scalar_select %p196, %s195, 63
      %s198 = smul.addr %s197, 8
      %s199 = scalar_lea.vmem %s4, %s198
      %s200 = smul.u32 32, %s15
      %v202 = vld [vmem:[%s2] sm:$0x1]
      %v203 = vld [vmem:[%s3] sm:$0x1]
      %v204 = vld [vmem:[%s193] sm:$0xf]
      %v205 = vld [vmem:[%s193 + $0x4] sm:$0xf]
      %v206 = vld [vmem:[%s193 + $0x8] sm:$0xf]
      %v207 = vld [vmem:[%s193 + $0xc] sm:$0xf]
      %v208 = vld [vmem:[%s193 + $0x10] sm:$0xf]
      %v209 = vld [vmem:[%s193 + $0x14] sm:$0xf]
      %v210 = vld [vmem:[%s193 + $0x18] sm:$0xf]
      %v211 = vld [vmem:[%s193 + $0x1c] sm:$0xf]
      %v212 = vld [vmem:[%s193 + $0x20] sm:$0xf]
      %v213 = vld [vmem:[%s193 + $0x24] sm:$0xf]
      %v214 = vld [vmem:[%s193 + $0x28] sm:$0xf]
      %v215 = vld [vmem:[%s193 + $0x2c] sm:$0xf]
      %v216 = vld [vmem:[%s193 + $0x30] sm:$0xf]
      %v217 = vld [vmem:[%s193 + $0x34] sm:$0xf]
      %v218 = vld [vmem:[%s193 + $0x38] sm:$0xf]
      %v219 = vld [vmem:[%s193 + $0x3c] sm:$0xf]
      %v220 = vld [vmem:[%s193 + $0x40] sm:$0xf]
      %v221 = vld [vmem:[%s193 + $0x44] sm:$0xf]
      %v222 = vld [vmem:[%s193 + $0x48] sm:$0xf]
      %v223 = vld [vmem:[%s193 + $0x4c] sm:$0xf]
      %v224 = vld [vmem:[%s193 + $0x50] sm:$0xf]
      %v225 = vld [vmem:[%s193 + $0x54] sm:$0xf]
      %v226 = vld [vmem:[%s193 + $0x58] sm:$0xf]
      %v227 = vld [vmem:[%s193 + $0x5c] sm:$0xf]
      %v228 = vld [vmem:[%s193 + $0x60] sm:$0xf]
      %v229 = vld [vmem:[%s193 + $0x64] sm:$0xf]
      %v230 = vld [vmem:[%s193 + $0x68] sm:$0xf]
      %v231 = vld [vmem:[%s193 + $0x6c] sm:$0xf]
      %v232 = vld [vmem:[%s193 + $0x70] sm:$0xf]
      %v233 = vld [vmem:[%s193 + $0x74] sm:$0xf]
      %v234 = vld [vmem:[%s193 + $0x78] sm:$0xf]
      %v235 = vld [vmem:[%s193 + $0x7c] sm:$0xf]
      %v236 = vunpack.c.l.bf16 %v204
      %v237 = vunpack.c.l.bf16 %v205
      %v238 = vunpack.c.l.bf16 %v206
      %v239 = vunpack.c.l.bf16 %v207
      %v240 = vunpack.c.l.bf16 %v208
      %v241 = vunpack.c.l.bf16 %v209
      %v242 = vunpack.c.l.bf16 %v210
      %v243 = vunpack.c.l.bf16 %v211
      %v244 = vunpack.c.l.bf16 %v212
      %v245 = vunpack.c.l.bf16 %v213
      %v246 = vunpack.c.l.bf16 %v214
      %v247 = vunpack.c.l.bf16 %v215
      %v248 = vunpack.c.l.bf16 %v216
      %v249 = vunpack.c.l.bf16 %v217
      %v250 = vunpack.c.l.bf16 %v218
      %v251 = vunpack.c.l.bf16 %v219
      %v252 = vunpack.c.l.bf16 %v220
      %v253 = vunpack.c.l.bf16 %v221
      %v254 = vunpack.c.l.bf16 %v222
      %v255 = vunpack.c.l.bf16 %v223
      %v256 = vunpack.c.l.bf16 %v224
      %v257 = vunpack.c.l.bf16 %v225
      %v258 = vunpack.c.l.bf16 %v226
      %v259 = vunpack.c.l.bf16 %v227
      %v260 = vunpack.c.l.bf16 %v228
      %v261 = vunpack.c.l.bf16 %v229
      %v262 = vunpack.c.l.bf16 %v230
      %v263 = vunpack.c.l.bf16 %v231
      %v264 = vunpack.c.l.bf16 %v232
      %v265 = vunpack.c.l.bf16 %v233
      %v266 = vunpack.c.l.bf16 %v234
      %v267 = vunpack.c.l.bf16 %v235
      %v269 = vlaneseq
      %v270 = vshrl.u32 %v269, 7
      %v271 = vsub.s32 0, %v270
      %v272 = vrot.slane %v202, %v271
      %v274 = vmul.f32 %v236, %v272
      %v275 = vmul.f32 %v237, %v272
      %v276 = vmul.f32 %v238, %v272
      %v277 = vmul.f32 %v239, %v272
      %v278 = vmul.f32 %v240, %v272
      %v279 = vmul.f32 %v241, %v272
      %v280 = vmul.f32 %v242, %v272
      %v281 = vmul.f32 %v243, %v272
      %v282 = vmul.f32 %v244, %v272
      %v283 = vmul.f32 %v245, %v272
      %v284 = vmul.f32 %v246, %v272
      %v285 = vmul.f32 %v247, %v272
      %v286 = vmul.f32 %v248, %v272
      %v287 = vmul.f32 %v249, %v272
      %v288 = vmul.f32 %v250, %v272
      %v289 = vmul.f32 %v251, %v272
      %v290 = vmul.f32 %v252, %v272
      %v291 = vmul.f32 %v253, %v272
      %v292 = vmul.f32 %v254, %v272
      %v293 = vmul.f32 %v255, %v272
      %v294 = vmul.f32 %v256, %v272
      %v295 = vmul.f32 %v257, %v272
      %v296 = vmul.f32 %v258, %v272
      %v297 = vmul.f32 %v259, %v272
      %v298 = vmul.f32 %v260, %v272
      %v299 = vmul.f32 %v261, %v272
      %v300 = vmul.f32 %v262, %v272
      %v301 = vmul.f32 %v263, %v272
      %v302 = vmul.f32 %v264, %v272
      %v303 = vmul.f32 %v265, %v272
      %v304 = vmul.f32 %v266, %v272
      %v305 = vmul.f32 %v267, %v272
      %v307 = vlaneseq
      %v308 = vshrl.u32 %v307, 7
      %v309 = vsub.s32 0, %v308
      %v310 = vrot.slane %v203, %v309
      %v312 = vadd.f32 %v274, %v310
      %v313 = vadd.f32 %v275, %v310
      %v314 = vadd.f32 %v276, %v310
      %v315 = vadd.f32 %v277, %v310
      %v316 = vadd.f32 %v278, %v310
      %v317 = vadd.f32 %v279, %v310
      %v318 = vadd.f32 %v280, %v310
      %v319 = vadd.f32 %v281, %v310
      %v320 = vadd.f32 %v282, %v310
      %v321 = vadd.f32 %v283, %v310
      %v322 = vadd.f32 %v284, %v310
      %v323 = vadd.f32 %v285, %v310
      %v324 = vadd.f32 %v286, %v310
      %v325 = vadd.f32 %v287, %v310
      %v326 = vadd.f32 %v288, %v310
      %v327 = vadd.f32 %v289, %v310
      %v328 = vadd.f32 %v290, %v310
      %v329 = vadd.f32 %v291, %v310
      %v330 = vadd.f32 %v292, %v310
      %v331 = vadd.f32 %v293, %v310
      %v332 = vadd.f32 %v294, %v310
      %v333 = vadd.f32 %v295, %v310
      %v334 = vadd.f32 %v296, %v310
      %v335 = vadd.f32 %v297, %v310
      %v336 = vadd.f32 %v298, %v310
      %v337 = vadd.f32 %v299, %v310
      %v338 = vadd.f32 %v300, %v310
      %v339 = vadd.f32 %v301, %v310
      %v340 = vadd.f32 %v302, %v310
      %v341 = vadd.f32 %v303, %v310
      %v342 = vadd.f32 %v304, %v310
      %v343 = vadd.f32 %v305, %v310
      %v344 = vmax.f32 %v312, 0.0
      %v345 = vmax.f32 %v313, 0.0
      %v346 = vmax.f32 %v314, 0.0
      %v347 = vmax.f32 %v315, 0.0
      %v348 = vmax.f32 %v316, 0.0
      %v349 = vmax.f32 %v317, 0.0
      %v350 = vmax.f32 %v318, 0.0
      %v351 = vmax.f32 %v319, 0.0
      %v352 = vmax.f32 %v320, 0.0
      %v353 = vmax.f32 %v321, 0.0
      %v354 = vmax.f32 %v322, 0.0
      %v355 = vmax.f32 %v323, 0.0
      %v356 = vmax.f32 %v324, 0.0
      %v357 = vmax.f32 %v325, 0.0
      %v358 = vmax.f32 %v326, 0.0
      %v359 = vmax.f32 %v327, 0.0
      %v360 = vmax.f32 %v328, 0.0
      %v361 = vmax.f32 %v329, 0.0
      %v362 = vmax.f32 %v330, 0.0
      %v363 = vmax.f32 %v331, 0.0
      %v364 = vmax.f32 %v332, 0.0
      %v365 = vmax.f32 %v333, 0.0
      %v366 = vmax.f32 %v334, 0.0
      %v367 = vmax.f32 %v335, 0.0
      %v368 = vmax.f32 %v336, 0.0
      %v369 = vmax.f32 %v337, 0.0
      %v370 = vmax.f32 %v338, 0.0
      %v371 = vmax.f32 %v339, 0.0
      %v372 = vmax.f32 %v340, 0.0
      %v373 = vmax.f32 %v341, 0.0
      %v374 = vmax.f32 %v342, 0.0
      %v375 = vmax.f32 %v343, 0.0
      %v376 = vpack.c.bf16 %v345, %v344
      %v377 = vpack.c.bf16 %v347, %v346
      %v378 = vpack.c.bf16 %v349, %v348
      %v379 = vpack.c.bf16 %v351, %v350
      %v380 = vpack.c.bf16 %v353, %v352
      %v381 = vpack.c.bf16 %v355, %v354
      %v382 = vpack.c.bf16 %v357, %v356
      %v383 = vpack.c.bf16 %v359, %v358
      %v384 = vpack.c.bf16 %v361, %v360
      %v385 = vpack.c.bf16 %v363, %v362
      %v386 = vpack.c.bf16 %v365, %v364
      %v387 = vpack.c.bf16 %v367, %v366
      %v388 = vpack.c.bf16 %v369, %v368
      %v389 = vpack.c.bf16 %v371, %v370
      %v390 = vpack.c.bf16 %v373, %v372
      %v391 = vpack.c.bf16 %v375, %v374
      %v392 = vld [vmem:[%s1] sm:$0xf]
      %v393 = vld [vmem:[%s1 + $0x4] sm:$0xf]
      %v394 = vld [vmem:[%s1 + $0x8] sm:$0xf]
      %v395 = vld [vmem:[%s1 + $0xc] sm:$0xf]
      %v396 = vld [vmem:[%s1 + $0x10] sm:$0xf]
      %v397 = vld [vmem:[%s1 + $0x14] sm:$0xf]
      %v398 = vld [vmem:[%s1 + $0x18] sm:$0xf]
      %v399 = vld [vmem:[%s1 + $0x1c] sm:$0xf]
      %v408 = vunpack.c.l.b16 %v392
      %v409 = vunpack.c.l.b16 %v393
      %v410 = vunpack.c.l.b16 %v394
      %v411 = vunpack.c.l.b16 %v395
      %v412 = vunpack.c.l.b16 %v396
      %v413 = vunpack.c.l.b16 %v397
      %v414 = vunpack.c.l.b16 %v398
      %v415 = vunpack.c.l.b16 %v399
      %v416 = vpack.c.b16 %v409, %v408
      %v417 = vpack.c.b16 %v411, %v410
      %v418 = vpack.c.b16 %v413, %v412
      %v419 = vpack.c.b16 %v415, %v414
      %vm424 = vcmask 523264
      %v426 = vsel %vm424, %v376, 0
      %v429 = vsel %vm424, %v377, 0
      %v432 = vsel %vm424, %v378, 0
      %v435 = vsel %vm424, %v379, 0
      %v438 = vsel %vm424, %v380, 0
      %v441 = vsel %vm424, %v381, 0
      %v444 = vsel %vm424, %v382, 0
      %v447 = vsel %vm424, %v383, 0
      %v450 = vsel %vm424, %v384, 0
      %v453 = vsel %vm424, %v385, 0
      %v456 = vsel %vm424, %v386, 0
      %v459 = vsel %vm424, %v387, 0
      %v462 = vsel %vm424, %v388, 0
      %v465 = vsel %vm424, %v389, 0
      %v468 = vsel %vm424, %v390, 0
      %v471 = vsel %vm424, %v391, 0
      %473 = vmatprep.subr.bf16.mxu0 0
      %474 = vmatpush1.bf16.msra.mxu0 0
      %475 = vmatprep.subr.bf16.mxu0 0
      %476 = vmatpush1.bf16.msra.mxu0 0
      %477 = vmatprep.subr.bf16.mxu0 0
      %478 = vmatpush1.bf16.msra.mxu0 0
      %479 = vmatprep.subr.bf16.mxu0 0
      %480 = vmatpush1.bf16.msra.mxu0 0
      %481 = vmatprep.subr.bf16.mxu0 0
      %482 = vmatpush1.bf16.msra.mxu0 %v419
      %483 = vmatprep.subr.bf16.mxu0 0
      %484 = vmatpush1.bf16.msra.mxu0 %v418
      %485 = vmatprep.subr.bf16.mxu0 0
      %486 = vmatpush1.bf16.msra.mxu0 %v417
      %487 = vmatprep.subr.bf16.mxu0 0
      %488 = vmatpush1.bf16.msra.mxu0 %v416
      %489 = vmatprep.subr.bf16.mxu0 0
      %490 = vmatpush2.bf16.msra.mxu0 0
      %491 = vmatprep.subr.bf16.mxu0 0
      %492 = vmatpush2.bf16.msra.mxu0 0
      %493 = vmatprep.subr.bf16.mxu0 0
      %494 = vmatpush2.bf16.msra.mxu0 0
      %495 = vmatprep.subr.bf16.mxu0 0
      %496 = vmatpush2.bf16.msra.mxu0 0
      %497 = vmatprep.subr.bf16.mxu0 0
      %498 = vmatpush2.bf16.msra.mxu0 0
      %499 = vmatprep.subr.bf16.mxu0 0
      %500 = vmatpush2.bf16.msra.mxu0 0
      %501 = vmatprep.subr.bf16.mxu0 0
      %502 = vmatpush2.bf16.msra.mxu0 0
      %503 = vmatprep.subr.bf16.mxu0 0
      %504 = vmatpush2.bf16.msra.mxu0 0
      %505 = vmatprep.mubr.bf16.mxu0 0
      %506 = vmatmul.mubr.bf16.gmra.mxu0 %v426
      %v507 = vpop.f32.mrf.mxu0
      %v508 = vadd.f32 0.0, %v507
      %v509 = vpop.f32.mrf.mxu0
      %v510 = vpop.f32.mrf.mxu0
      %v511 = vadd.f32 0.0, %v510
      %v512 = vpop.f32.mrf.mxu0
      %513 = vmatprep.mubr.bf16.mxu0 0
      %514 = vmatmul.mubr.bf16.gmra.mxu0 %v429
      %v515 = vpop.f32.mrf.mxu0
      %v516 = vadd.f32 0.0, %v515
      %v517 = vpop.f32.mrf.mxu0
      %v518 = vpop.f32.mrf.mxu0
      %v519 = vadd.f32 0.0, %v518
      %v520 = vpop.f32.mrf.mxu0
      %521 = vmatprep.mubr.bf16.mxu0 0
      %522 = vmatmul.mubr.bf16.gmra.mxu0 %v432
      %v523 = vpop.f32.mrf.mxu0
      %v524 = vadd.f32 0.0, %v523
      %v525 = vpop.f32.mrf.mxu0
      %v526 = vpop.f32.mrf.mxu0
      %v527 = vadd.f32 0.0, %v526
      %v528 = vpop.f32.mrf.mxu0
      %529 = vmatprep.mubr.bf16.mxu0 0
      %530 = vmatmul.mubr.bf16.gmra.mxu0 %v435
      %v531 = vpop.f32.mrf.mxu0
      %v532 = vadd.f32 0.0, %v531
      %v533 = vpop.f32.mrf.mxu0
      %v534 = vpop.f32.mrf.mxu0
      %v535 = vadd.f32 0.0, %v534
      %v536 = vpop.f32.mrf.mxu0
      %537 = vmatprep.mubr.bf16.mxu0 0
      %538 = vmatmul.mubr.bf16.gmra.mxu0 %v438
      %v539 = vpop.f32.mrf.mxu0
      %v540 = vadd.f32 0.0, %v539
      %v541 = vpop.f32.mrf.mxu0
      %v542 = vpop.f32.mrf.mxu0
      %v543 = vadd.f32 0.0, %v542
      %v544 = vpop.f32.mrf.mxu0
      %545 = vmatprep.mubr.bf16.mxu0 0
      %546 = vmatmul.mubr.bf16.gmra.mxu0 %v441
      %v547 = vpop.f32.mrf.mxu0
      %v548 = vadd.f32 0.0, %v547
      %v549 = vpop.f32.mrf.mxu0
      %v550 = vpop.f32.mrf.mxu0
      %v551 = vadd.f32 0.0, %v550
      %v552 = vpop.f32.mrf.mxu0
      %553 = vmatprep.mubr.bf16.mxu0 0
      %554 = vmatmul.mubr.bf16.gmra.mxu0 %v444
      %v555 = vpop.f32.mrf.mxu0
      %v556 = vadd.f32 0.0, %v555
      %v557 = vpop.f32.mrf.mxu0
      %v558 = vpop.f32.mrf.mxu0
      %v559 = vadd.f32 0.0, %v558
      %v560 = vpop.f32.mrf.mxu0
      %561 = vmatprep.mubr.bf16.mxu0 0
      %562 = vmatmul.mubr.bf16.gmra.mxu0 %v447
      %v563 = vpop.f32.mrf.mxu0
      %v564 = vadd.f32 0.0, %v563
      %v565 = vpop.f32.mrf.mxu0
      %v566 = vpop.f32.mrf.mxu0
      %v567 = vadd.f32 0.0, %v566
      %v568 = vpop.f32.mrf.mxu0
      %569 = vmatprep.mubr.bf16.mxu0 0
      %570 = vmatmul.mubr.bf16.gmra.mxu0 %v450
      %v571 = vpop.f32.mrf.mxu0
      %v572 = vadd.f32 0.0, %v571
      %v573 = vpop.f32.mrf.mxu0
      %v574 = vpop.f32.mrf.mxu0
      %v575 = vadd.f32 0.0, %v574
      %v576 = vpop.f32.mrf.mxu0
      %577 = vmatprep.mubr.bf16.mxu0 0
      %578 = vmatmul.mubr.bf16.gmra.mxu0 %v453
      %v579 = vpop.f32.mrf.mxu0
      %v580 = vadd.f32 0.0, %v579
      %v581 = vpop.f32.mrf.mxu0
      %v582 = vpop.f32.mrf.mxu0
      %v583 = vadd.f32 0.0, %v582
      %v584 = vpop.f32.mrf.mxu0
      %585 = vmatprep.mubr.bf16.mxu0 0
      %586 = vmatmul.mubr.bf16.gmra.mxu0 %v456
      %v587 = vpop.f32.mrf.mxu0
      %v588 = vadd.f32 0.0, %v587
      %v589 = vpop.f32.mrf.mxu0
      %v590 = vpop.f32.mrf.mxu0
      %v591 = vadd.f32 0.0, %v590
      %v592 = vpop.f32.mrf.mxu0
      %593 = vmatprep.mubr.bf16.mxu0 0
      %594 = vmatmul.mubr.bf16.gmra.mxu0 %v459
      %v595 = vpop.f32.mrf.mxu0
      %v596 = vadd.f32 0.0, %v595
      %v597 = vpop.f32.mrf.mxu0
      %v598 = vpop.f32.mrf.mxu0
      %v599 = vadd.f32 0.0, %v598
      %v600 = vpop.f32.mrf.mxu0
      %601 = vmatprep.mubr.bf16.mxu0 0
      %602 = vmatmul.mubr.bf16.gmra.mxu0 %v462
      %v603 = vpop.f32.mrf.mxu0
      %v604 = vadd.f32 0.0, %v603
      %v605 = vpop.f32.mrf.mxu0
      %v606 = vpop.f32.mrf.mxu0
      %v607 = vadd.f32 0.0, %v606
      %v608 = vpop.f32.mrf.mxu0
      %609 = vmatprep.mubr.bf16.mxu0 0
      %610 = vmatmul.mubr.bf16.gmra.mxu0 %v465
      %v611 = vpop.f32.mrf.mxu0
      %v612 = vadd.f32 0.0, %v611
      %v613 = vpop.f32.mrf.mxu0
      %v614 = vpop.f32.mrf.mxu0
      %v615 = vadd.f32 0.0, %v614
      %v616 = vpop.f32.mrf.mxu0
      %617 = vmatprep.mubr.bf16.mxu0 0
      %618 = vmatmul.mubr.bf16.gmra.mxu0 %v468
      %v619 = vpop.f32.mrf.mxu0
      %v620 = vadd.f32 0.0, %v619
      %v621 = vpop.f32.mrf.mxu0
      %v622 = vpop.f32.mrf.mxu0
      %v623 = vadd.f32 0.0, %v622
      %v624 = vpop.f32.mrf.mxu0
      %625 = vmatprep.mubr.bf16.mxu0 0
      %626 = vmatmul.mubr.bf16.gmra.mxu0 %v471
      %v627 = vpop.f32.mrf.mxu0
      %v628 = vadd.f32 0.0, %v627
      %v629 = vpop.f32.mrf.mxu0
      %v630 = vpop.f32.mrf.mxu0
      %v631 = vadd.f32 0.0, %v630
      %v632 = vpop.f32.mrf.mxu0
      %633 = vdwg.mxu0
      %634 = vst [vmem:[%s199] sm:$0xff] %v508
      %635 = vst [vmem:[%s199 + $0x8] sm:$0xff] %v511
      %636 = vst [vmem:[%s199 + $0x10] sm:$0xff] %v516
      %637 = vst [vmem:[%s199 + $0x18] sm:$0xff] %v519
      %638 = vst [vmem:[%s199 + $0x20] sm:$0xff] %v524
      %639 = vst [vmem:[%s199 + $0x28] sm:$0xff] %v527
      %640 = vst [vmem:[%s199 + $0x30] sm:$0xff] %v532
      %641 = vst [vmem:[%s199 + $0x38] sm:$0xff] %v535
      %642 = vst [vmem:[%s199 + $0x40] sm:$0xff] %v540
      %643 = vst [vmem:[%s199 + $0x48] sm:$0xff] %v543
      %644 = vst [vmem:[%s199 + $0x50] sm:$0xff] %v548
      %645 = vst [vmem:[%s199 + $0x58] sm:$0xff] %v551
      %646 = vst [vmem:[%s199 + $0x60] sm:$0xff] %v556
      %647 = vst [vmem:[%s199 + $0x68] sm:$0xff] %v559
      %648 = vst [vmem:[%s199 + $0x70] sm:$0xff] %v564
      %649 = vst [vmem:[%s199 + $0x78] sm:$0xff] %v567
      %650 = vst [vmem:[%s199 + $0x80] sm:$0xff] %v572
      %651 = vst [vmem:[%s199 + $0x88] sm:$0xff] %v575
      %652 = vst [vmem:[%s199 + $0x90] sm:$0xff] %v580
      %653 = vst [vmem:[%s199 + $0x98] sm:$0xff] %v583
      %654 = vst [vmem:[%s199 + $0xa0] sm:$0xff] %v588
      %655 = vst [vmem:[%s199 + $0xa8] sm:$0xff] %v591
      %656 = vst [vmem:[%s199 + $0xb0] sm:$0xff] %v596
      %657 = vst [vmem:[%s199 + $0xb8] sm:$0xff] %v599
      %658 = vst [vmem:[%s199 + $0xc0] sm:$0xff] %v604
      %659 = vst [vmem:[%s199 + $0xc8] sm:$0xff] %v607
      %660 = vst [vmem:[%s199 + $0xd0] sm:$0xff] %v612
      %661 = vst [vmem:[%s199 + $0xd8] sm:$0xff] %v615
      %662 = vst [vmem:[%s199 + $0xe0] sm:$0xff] %v620
      %663 = vst [vmem:[%s199 + $0xe8] sm:$0xff] %v623
      %664 = vst [vmem:[%s199 + $0xf0] sm:$0xff] %v628
      %665 = vst [vmem:[%s199 + $0xf8] sm:$0xff] %v631
      %s666 = smul.u32 32, %s15
      %p667 = scmp.lt.s32.totalorder %s666, 63
      %s668 = scalar_select %p667, %s666, 63
      %s669 = smul.addr %s668, 8
      %s670 = scalar_lea.vmem %s4, %s669
      // Predicated region
      $region37: #{_lambda_.4} parent=35 // pred_check
        %p671 = pneg %p122
      $region38: #{_lambda_.4} parent=35 // pred_check_branch
        %673 = sbr.rel (%p671) target = $region40
      $region39: #{_lambda_.4} parent=35 // pred_region
        %s674 = smul.u32 32, %s15
      $region40: #{_lambda_.4} parent=35 // pred_fallthru
        _
    $region36: #{_lambda_.4} parent=5 // pred_fallthru
      _
    %p675 = scmp.le.s32.totalorder 2, %s10
    // Predicated region
    $region41: #{_lambda_.4} parent=5 // pred_check
      %p676 = pneg %p675
    $region42: #{_lambda_.4} parent=5 // pred_check_branch
      %678 = sbr.rel (%p676) target = $region44
    $region43: #{_lambda_.4} parent=5 // pred_region
      %s679 = ssub.s32 %s10, 2
      // Predicated region
      $region45: #{_lambda_.4} parent=43 // pred_check
        %p680 = pneg %p128
      $region46: #{_lambda_.4} parent=43 // pred_check_branch
        %682 = sbr.rel (%p680) target = $region48
      $region47: #{_lambda_.4} parent=43 // pred_region
        %s683 = smul.u32 32, %s16
        %p684 = scmp.lt.s32.totalorder %s683, 63
        %s685 = scalar_select %p684, %s683, 63
        %s686 = smul.addr %s685, 8
        %s687 = scalar_lea.vmem %s4, %s686
      $region48: #{_lambda_.4} parent=43 // pred_fallthru
        _
    $region44: #{_lambda_.4} parent=5 // pred_fallthru
      _
  $region6: #{_lambda_.4} parent=0 // loop_footer
    %s14 = sadd.s32 1, %s10
  $region7: #{_lambda_.4} parent=0 // loop_footer_branch
    %9 = sbr.rel target = $region3
  $region8: #{_lambda_.4} parent=0 // loop_exit
    _

// kernel: _lambda_.7
$region0: #{_lambda_.7}
  #allocation0 [shape = 'u32[]', space=smem, size = 0x4, offset = 0x4, fixed_abs, tag = 'smem constant byte address 0x4 - core index']
  #allocation1 [shape = 'u32[144,128]{1,0:T(1,128)}', space=vmem, size = 0x12000, scoped, tag = 'internal scratch']
  %s0 = inlined_call_operand.vmem [shape: bf16[512,32], index: 0, kind: input, shape index: {}]
  %s1 = inlined_call_operand.vmem [shape: bf16[32,128], index: 1, kind: input, shape index: {}]
  %s2 = inlined_call_operand.vmem [shape: f32[512,128], index: 2, kind: input, shape index: {}]
  %s3 = inlined_call_operand.hbm [shape: f32[512,128], index: 3, kind: output, shape index: {}]
  %s4 = sld [smem:[#allocation0]]
  $region45: #{_lambda_.7} parent=0
    _
  %s6 = ssub.s32 1, %s4
  %s7 = scalar_select 0, %s6, %s4
  $region1: #{_lambda_.7} parent=0
    #allocation2 [shape = 'u8[262144]{0}', space=vmem, size = 0x40000, scoped, tag = 'output window, operand 0']
    #allocation3 [shape = 's32[2]{0}', space=sflag, size = 0x8, scoped, tag = 'scoped memory for _lambda_.7']
    %8 = vsyncpa [#allocation3], 0
    %s9 = scalar_lea.sflag [#allocation3], 1
    %10 = vsyncpa %s9, 0
    loop: start=0, step=1, limit=4
    $region2: #{_lambda_.7} parent=1 // loop_pre_header
      _
    $region3: #{_lambda_.7} parent=1 // loop_header
      %s12 = sphi 0, %s16
      %p13 = scmp.ge.s32.totalorder %s12, 4
      %s22 = sphi 0, %s24
      %s25 = sphi 0, %s22
      %s26 = sphi 0, %s25
      %s42 = sphi 0, %s26
      %s46 = sphi 0, %s46
      %s48 = sphi 0, %s46
      %s49 = sphi 0, %s48
      %s63 = sphi 0, %s49
      %s69 = sphi 0, %s71
      %s72 = sphi 0, %s69
      %s73 = sphi 0, %s72
      %s89 = sphi 0, %s73
      %s95 = sphi 0, %s97
      %s98 = sphi 0, %s95
      %s99 = sphi 0, %s98
      %s115 = sphi 0, %s99
    $region4: #{_lambda_.7} parent=1 // loop_header_branch
      %15 = sbr.rel (%p13) target = $region8
    $region5: #{_lambda_.7} parent=1 // loop_body
      %s17 = ssub.s32 %s12, 1
      %s18 = ssub.s32 %s12, 2
      %s19 = sadd.s32 %s12, 1
      %s20 = ssub.s32 %s12, %s19
      %p21 = scmp.eq.s32.totalorder %s20, 0
      %s23 = sadd.s32 %s22, 1
      %s24 = scalar_select %p21, %s22, %s23
      %p27 = pneg %p21
      %p28 = scmp.eq.s32.totalorder %s12, 1
      %p29 = por %p27, %p28
      %p30 = scmp.ne.s32.totalorder %s22, %s25
      %p31 = scmp.eq.s32.totalorder %s12, 0
      %p32 = por %p30, %p31
      %p33 = scmp.ne.s32.totalorder %s22, %s25
      %p34 = scmp.eq.s32.totalorder %s17, 1
      %p35 = por %p33, %p34
      %p36 = scmp.ne.s32.totalorder %s25, %s26
      %p37 = scmp.eq.s32.totalorder %s17, 0
      %p38 = por %p36, %p37
      %p39 = scmp.ne.s32.totalorder %s25, %s26
      %p40 = scmp.eq.s32.totalorder %s18, 1
      %p41 = por %p39, %p40
      %p43 = scmp.ne.s32.totalorder %s26, %s42
      %p44 = scmp.eq.s32.totalorder %s18, 0
      %p45 = por %p43, %p44
      %s47 = sadd.s32 %s46, 1
      %p50 = scmp.eq.s32.totalorder %s12, 1
      %p51 = scmp.ne.s32.totalorder %s46, %s48
      %p52 = scmp.eq.s32.totalorder %s12, 0
      %p53 = por %p51, %p52
      %p54 = scmp.ne.s32.totalorder %s46, %s48
      %p55 = scmp.eq.s32.totalorder %s17, 1
      %p56 = por %p54, %p55
      %p57 = scmp.ne.s32.totalorder %s48, %s49
      %p58 = scmp.eq.s32.totalorder %s17, 0
      %p59 = por %p57, %p58
      %p60 = scmp.ne.s32.totalorder %s48, %s49
      %p61 = scmp.eq.s32.totalorder %s18, 1
      %p62 = por %p60, %p61
      %p64 = scmp.ne.s32.totalorder %s49, %s63
      %p65 = scmp.eq.s32.totalorder %s18, 0
      %p66 = por %p64, %p65
      %s67 = ssub.s32 %s12, %s19
      %p68 = scmp.eq.s32.totalorder %s67, 0
      %s70 = sadd.s32 %s69, 1
      %s71 = scalar_select %p68, %s69, %s70
      %p74 = pneg %p68
      %p75 = scmp.eq.s32.totalorder %s12, 1
      %p76 = por %p74, %p75
      %p77 = scmp.ne.s32.totalorder %s69, %s72
      %p78 = scmp.eq.s32.totalorder %s12, 0
      %p79 = por %p77, %p78
      %p80 = scmp.ne.s32.totalorder %s69, %s72
      %p81 = scmp.eq.s32.totalorder %s17, 1
      %p82 = por %p80, %p81
      %p83 = scmp.ne.s32.totalorder %s72, %s73
      %p84 = scmp.eq.s32.totalorder %s17, 0
      %p85 = por %p83, %p84
      %p86 = scmp.ne.s32.totalorder %s72, %s73
      %p87 = scmp.eq.s32.totalorder %s18, 1
      %p88 = por %p86, %p87
      %p90 = scmp.ne.s32.totalorder %s73, %s89
      %p91 = scmp.eq.s32.totalorder %s18, 0
      %p92 = por %p90, %p91
      %s93 = ssub.s32 %s12, %s19
      %p94 = scmp.eq.s32.totalorder %s93, 0
      %s96 = sadd.s32 %s95, 1
      %s97 = scalar_select %p94, %s95, %s96
      %p100 = pneg %p94
      %p101 = scmp.eq.s32.totalorder %s12, 1
      %p102 = por %p100, %p101
      %p103 = scmp.ne.s32.totalorder %s95, %s98
      %p104 = scmp.eq.s32.totalorder %s12, 0
      %p105 = por %p103, %p104
      %p106 = scmp.ne.s32.totalorder %s95, %s98
      %p107 = scmp.eq.s32.totalorder %s17, 1
      %p108 = por %p106, %p107
      %p109 = scmp.ne.s32.totalorder %s98, %s99
      %p110 = scmp.eq.s32.totalorder %s17, 0
      %p111 = por %p109, %p110
      %p112 = scmp.ne.s32.totalorder %s98, %s99
      %p113 = scmp.eq.s32.totalorder %s18, 1
      %p114 = por %p112, %p113
      %p116 = scmp.ne.s32.totalorder %s99, %s115
      %p117 = scmp.eq.s32.totalorder %s18, 0
      %p118 = por %p116, %p117
      %p119 = scmp.le.s32.totalorder 1, %s12
      %p120 = scmp.lt.s32.totalorder %s12, 3
      %p121 = pnand %p119, %p120
      %p122 = pneg %p121
      // Predicated region
      $region9: #{_lambda_.7} parent=5 // pred_check
        _
      $region10: #{_lambda_.7} parent=5 // pred_check_branch
        %124 = sbr.rel (%p121) target = $region12
      $region11: #{_lambda_.7} parent=5 // pred_region
        %s125 = ssub.s32 %s12, 1
        // Predicated region
        $region13: #{_lambda_.7} parent=11 // pred_check
          %p126 = pneg %p59
        $region14: #{_lambda_.7} parent=11 // pred_check_branch
          %128 = sbr.rel (%p126) target = $region16
        $region15: #{_lambda_.7} parent=11 // pred_region
          _
        $region16: #{_lambda_.7} parent=11 // pred_fallthru
          _
      $region12: #{_lambda_.7} parent=5 // pred_fallthru
        _
      %p129 = scmp.lt.s32.totalorder %s12, 2
      // Predicated region
      $region17: #{_lambda_.7} parent=5 // pred_check
        %p130 = pneg %p129
      $region18: #{_lambda_.7} parent=5 // pred_check_branch
        %132 = sbr.rel (%p130) target = $region20
      $region19: #{_lambda_.7} parent=5 // pred_region
        // Predicated region
        $region21: #{_lambda_.7} parent=19 // pred_check
          %p133 = pneg %p32
        $region22: #{_lambda_.7} parent=19 // pred_check_branch
          %135 = sbr.rel (%p133) target = $region24
        $region23: #{_lambda_.7} parent=19 // pred_region
          %s136 = smul.u32 32, %s12
          %p137 = scmp.lt.s32.totalorder %s136, 63
          %s138 = scalar_select %p137, %s136, 63
          %s139 = smul.addr %s138, 4
          %s140 = scalar_lea.vmem %s0, %s139
          %s141 = smul.u32 32, %s12
        $region24: #{_lambda_.7} parent=19 // pred_fallthru
          _
        // Predicated region
        $region25: #{_lambda_.7} parent=19 // pred_check
          %p142 = pneg %p79
        $region26: #{_lambda_.7} parent=19 // pred_check_branch
          %144 = sbr.rel (%p142) target = $region28
        $region27: #{_lambda_.7} parent=19 // pred_region
          %s145 = smul.u32 32, %s12
          %p146 = scmp.lt.s32.totalorder %s145, 63
          %s147 = scalar_select %p146, %s145, 63
          %s148 = smul.addr %s147, 8
          %s149 = scalar_lea.vmem %s2, %s148
          %s150 = smul.u32 32, %s12
        $region28: #{_lambda_.7} parent=19 // pred_fallthru
          _
      $region20: #{_lambda_.7} parent=5 // pred_fallthru
        _
      %p151 = scmp.le.s32.totalorder 1, %s12
      %p152 = scmp.lt.s32.totalorder %s12, 3
      %p153 = pnand %p151, %p152
      %p154 = pneg %p153
      // Predicated region
      $region29: #{_lambda_.7} parent=5 // pred_check
        _
      $region30: #{_lambda_.7} parent=5 // pred_check_branch
        %156 = sbr.rel (%p153) target = $region32
      $region31: #{_lambda_.7} parent=5 // pred_region
        %s157 = ssub.s32 %s12, 1
        %s158 = smul.u32 32, %s17
        %p159 = scmp.lt.s32.totalorder %s158, 63
        %s160 = scalar_select %p159, %s158, 63
        %s161 = smul.addr %s160, 4
        %s162 = scalar_lea.vmem %s0, %s161
        %p163 = pneg %p38
        %p164 = pneg %p35
        %p165 = pneg %p59
        %p166 = pneg %p56
        %s167 = smul.u32 32, %s17
        %p168 = scmp.lt.s32.totalorder %s167, 63
        %s169 = scalar_select %p168, %s167, 63
        %s170 = smul.addr %s169, 8
        %s171 = scalar_lea.vmem %s2, %s170
        %p172 = pneg %p85
        %p173 = pneg %p82
        %p174 = pneg %p111
        %p175 = pneg %p108
        %s176 = sand.u32 %s98, 1
        %s177 = scalar_lea.sflag [#allocation3], %s176
        %s178 = sand.u32 %s98, 1
        %s179 = smul.addr %s178, 256
        %s180 = scalar_lea.vmem [#allocation2], %s179
        %s181 = smul.u32 32, %s17
        %p182 = scmp.lt.s32.totalorder %s181, 63
        %s183 = scalar_select %p182, %s181, 63
        %s184 = smul.addr %s183, 4
        %s185 = scalar_lea.vmem %s0, %s184
        %s186 = smul.u32 32, %s17
        %s187 = smul.u32 32, %s17
        %p188 = scmp.lt.s32.totalorder %s187, 63
        %s189 = scalar_select %p188, %s187, 63
        %s190 = smul.addr %s189, 8
        %s191 = scalar_lea.vmem %s2, %s190
        %s192 = smul.u32 32, %s17
        %s193 = smul.u32 32, %s17
        %v195 = vld [vmem:[%s185] sm:$0xf]
        %v196 = vld [vmem:[%s185 + $0x4] sm:$0xf]
        %v197 = vld [vmem:[%s185 + $0x8] sm:$0xf]
        %v198 = vld [vmem:[%s185 + $0xc] sm:$0xf]
        %v199 = vld [vmem:[%s185 + $0x10] sm:$0xf]
        %v200 = vld [vmem:[%s185 + $0x14] sm:$0xf]
        %v201 = vld [vmem:[%s185 + $0x18] sm:$0xf]
        %v202 = vld [vmem:[%s185 + $0x1c] sm:$0xf]
        %v203 = vld [vmem:[%s185 + $0x20] sm:$0xf]
        %v204 = vld [vmem:[%s185 + $0x24] sm:$0xf]
        %v205 = vld [vmem:[%s185 + $0x28] sm:$0xf]
        %v206 = vld [vmem:[%s185 + $0x2c] sm:$0xf]
        %v207 = vld [vmem:[%s185 + $0x30] sm:$0xf]
        %v208 = vld [vmem:[%s185 + $0x34] sm:$0xf]
        %v209 = vld [vmem:[%s185 + $0x38] sm:$0xf]
        %v210 = vld [vmem:[%s185 + $0x3c] sm:$0xf]
        %v211 = vld [vmem:[%s185 + $0x40] sm:$0xf]
        %v212 = vld [vmem:[%s185 + $0x44] sm:$0xf]
        %v213 = vld [vmem:[%s185 + $0x48] sm:$0xf]
        %v214 = vld [vmem:[%s185 + $0x4c] sm:$0xf]
        %v215 = vld [vmem:[%s185 + $0x50] sm:$0xf]
        %v216 = vld [vmem:[%s185 + $0x54] sm:$0xf]
        %v217 = vld [vmem:[%s185 + $0x58] sm:$0xf]
        %v218 = vld [vmem:[%s185 + $0x5c] sm:$0xf]
        %v219 = vld [vmem:[%s185 + $0x60] sm:$0xf]
        %v220 = vld [vmem:[%s185 + $0x64] sm:$0xf]
        %v221 = vld [vmem:[%s185 + $0x68] sm:$0xf]
        %v222 = vld [vmem:[%s185 + $0x6c] sm:$0xf]
        %v223 = vld [vmem:[%s185 + $0x70] sm:$0xf]
        %v224 = vld [vmem:[%s185 + $0x74] sm:$0xf]
        %v225 = vld [vmem:[%s185 + $0x78] sm:$0xf]
        %v226 = vld [vmem:[%s185 + $0x7c] sm:$0xf]
        %v227 = vld [vmem:[%s1] sm:$0xf]
        %v228 = vld [vmem:[%s1 + $0x4] sm:$0xf]
        %v229 = vld [vmem:[%s1 + $0x8] sm:$0xf]
        %v230 = vld [vmem:[%s1 + $0xc] sm:$0xf]
        %v231 = vld [vmem:[%s191] sm:$0xff]
        %v232 = vld [vmem:[%s191 + $0x8] sm:$0xff]
        %v233 = vld [vmem:[%s191 + $0x10] sm:$0xff]
        %v234 = vld [vmem:[%s191 + $0x18] sm:$0xff]
        %v235 = vld [vmem:[%s191 + $0x20] sm:$0xff]
        %v236 = vld [vmem:[%s191 + $0x28] sm:$0xff]
        %v237 = vld [vmem:[%s191 + $0x30] sm:$0xff]
        %v238 = vld [vmem:[%s191 + $0x38] sm:$0xff]
        %v239 = vld [vmem:[%s191 + $0x40] sm:$0xff]
        %v240 = vld [vmem:[%s191 + $0x48] sm:$0xff]
        %v241 = vld [vmem:[%s191 + $0x50] sm:$0xff]
        %v242 = vld [vmem:[%s191 + $0x58] sm:$0xff]
        %v243 = vld [vmem:[%s191 + $0x60] sm:$0xff]
        %v244 = vld [vmem:[%s191 + $0x68] sm:$0xff]
        %v245 = vld [vmem:[%s191 + $0x70] sm:$0xff]
        %v246 = vld [vmem:[%s191 + $0x78] sm:$0xff]
        %v247 = vld [vmem:[%s191 + $0x80] sm:$0xff]
        %v248 = vld [vmem:[%s191 + $0x88] sm:$0xff]
        %v249 = vld [vmem:[%s191 + $0x90] sm:$0xff]
        %v250 = vld [vmem:[%s191 + $0x98] sm:$0xff]
        %v251 = vld [vmem:[%s191 + $0xa0] sm:$0xff]
        %v252 = vld [vmem:[%s191 + $0xa8] sm:$0xff]
        %v253 = vld [vmem:[%s191 + $0xb0] sm:$0xff]
        %v254 = vld [vmem:[%s191 + $0xb8] sm:$0xff]
        %v255 = vld [vmem:[%s191 + $0xc0] sm:$0xff]
        %v256 = vld [vmem:[%s191 + $0xc8] sm:$0xff]
        %v257 = vld [vmem:[%s191 + $0xd0] sm:$0xff]
        %v258 = vld [vmem:[%s191 + $0xd8] sm:$0xff]
        %v259 = vld [vmem:[%s191 + $0xe0] sm:$0xff]
        %v260 = vld [vmem:[%s191 + $0xe8] sm:$0xff]
        %v261 = vld [vmem:[%s191 + $0xf0] sm:$0xff]
        %v262 = vld [vmem:[%s191 + $0xf8] sm:$0xff]
        %v295 = vunpack.c.l.b16 %v195
        %v296 = vunpack.c.l.b16 %v196
        %v297 = vunpack.c.l.b16 %v197
        %v298 = vunpack.c.l.b16 %v198
        %v299 = vunpack.c.l.b16 %v199
        %v300 = vunpack.c.l.b16 %v200
        %v301 = vunpack.c.l.b16 %v201
        %v302 = vunpack.c.l.b16 %v202
        %v303 = vunpack.c.l.b16 %v203
        %v304 = vunpack.c.l.b16 %v204
        %v305 = vunpack.c.l.b16 %v205
        %v306 = vunpack.c.l.b16 %v206
        %v307 = vunpack.c.l.b16 %v207
        %v308 = vunpack.c.l.b16 %v208
        %v309 = vunpack.c.l.b16 %v209
        %v310 = vunpack.c.l.b16 %v210
        %v311 = vunpack.c.l.b16 %v211
        %v312 = vunpack.c.l.b16 %v212
        %v313 = vunpack.c.l.b16 %v213
        %v314 = vunpack.c.l.b16 %v214
        %v315 = vunpack.c.l.b16 %v215
        %v316 = vunpack.c.l.b16 %v216
        %v317 = vunpack.c.l.b16 %v217
        %v318 = vunpack.c.l.b16 %v218
        %v319 = vunpack.c.l.b16 %v219
        %v320 = vunpack.c.l.b16 %v220
        %v321 = vunpack.c.l.b16 %v221
        %v322 = vunpack.c.l.b16 %v222
        %v323 = vunpack.c.l.b16 %v223
        %v324 = vunpack.c.l.b16 %v224
        %v325 = vunpack.c.l.b16 %v225
        %v326 = vunpack.c.l.b16 %v226
        %v327 = vpack.c.b16 %v296, %v295
        %v328 = vpack.c.b16 %v298, %v297
        %v329 = vpack.c.b16 %v300, %v299
        %v330 = vpack.c.b16 %v302, %v301
        %v331 = vpack.c.b16 %v304, %v303
        %v332 = vpack.c.b16 %v306, %v305
        %v333 = vpack.c.b16 %v308, %v307
        %v334 = vpack.c.b16 %v310, %v309
        %v335 = vpack.c.b16 %v312, %v311
        %v336 = vpack.c.b16 %v314, %v313
        %v337 = vpack.c.b16 %v316, %v315
        %v338 = vpack.c.b16 %v318, %v317
        %v339 = vpack.c.b16 %v320, %v319
        %v340 = vpack.c.b16 %v322, %v321
        %v341 = vpack.c.b16 %v324, %v323
        %v342 = vpack.c.b16 %v326, %v325
        %v347 = vunpack.c.l.b16 %v227
        %v348 = vunpack.c.l.b16 %v228
        %v349 = vunpack.c.l.b16 %v229
        %v350 = vunpack.c.l.b16 %v230
        %v351 = vpack.c.b16 %v348, %v347
        %v352 = vpack.c.b16 %v350, %v349
        %vm355 = vcmask 261120
        %v357 = vsel %vm355, %v327, 0
        %v360 = vsel %vm355, %v328, 0
        %v363 = vsel %vm355, %v329, 0
        %v366 = vsel %vm355, %v330, 0
        %v369 = vsel %vm355, %v331, 0
        %v372 = vsel %vm355, %v332, 0
        %v375 = vsel %vm355, %v333, 0
        %v378 = vsel %vm355, %v334, 0
        %v381 = vsel %vm355, %v335, 0
        %v384 = vsel %vm355, %v336, 0
        %v387 = vsel %vm355, %v337, 0
        %v390 = vsel %vm355, %v338, 0
        %v393 = vsel %vm355, %v339, 0
        %v396 = vsel %vm355, %v340, 0
        %v399 = vsel %vm355, %v341, 0
        %v402 = vsel %vm355, %v342, 0
        %404 = vmatprep.subr.bf16.mxu0 0
        %405 = vmatpush1.bf16.msra.mxu0 0
        %406 = vmatprep.subr.bf16.mxu0 0
        %407 = vmatpush1.bf16.msra.mxu0 0
        %408 = vmatprep.subr.bf16.mxu0 0
        %409 = vmatpush1.bf16.msra.mxu0 0
        %410 = vmatprep.subr.bf16.mxu0 0
        %411 = vmatpush1.bf16.msra.mxu0 0
        %412 = vmatprep.subr.bf16.mxu0 0
        %413 = vmatpush1.bf16.msra.mxu0 0
        %414 = vmatprep.subr.bf16.mxu0 0
        %415 = vmatpush1.bf16.msra.mxu0 0
        %416 = vmatprep.subr.bf16.mxu0 0
        %417 = vmatpush1.bf16.msra.mxu0 %v352
        %418 = vmatprep.subr.bf16.mxu0 0
        %419 = vmatpush1.bf16.msra.mxu0 %v351
        %420 = vmatprep.subr.bf16.mxu0 0
        %421 = vmatpush2.bf16.msra.mxu0 0
        %422 = vmatprep.subr.bf16.mxu0 0
        %423 = vmatpush2.bf16.msra.mxu0 0
        %424 = vmatprep.subr.bf16.mxu0 0
        %425 = vmatpush2.bf16.msra.mxu0 0
        %426 = vmatprep.subr.bf16.mxu0 0
        %427 = vmatpush2.bf16.msra.mxu0 0
        %428 = vmatprep.subr.bf16.mxu0 0
        %429 = vmatpush2.bf16.msra.mxu0 0
        %430 = vmatprep.subr.bf16.mxu0 0
        %431 = vmatpush2.bf16.msra.mxu0 0
        %432 = vmatprep.subr.bf16.mxu0 0
        %433 = vmatpush2.bf16.msra.mxu0 0
        %434 = vmatprep.subr.bf16.mxu0 0
        %435 = vmatpush2.bf16.msra.mxu0 0
        %436 = vmatprep.mubr.bf16.mxu0 0
        %437 = vmatmul.mubr.bf16.gmra.mxu0 %v357
        %v438 = vpop.f32.mrf.mxu0
        %v439 = vadd.f32 %v231, %v438
        %v440 = vpop.f32.mrf.mxu0
        %v441 = vpop.f32.mrf.mxu0
        %v442 = vadd.f32 %v232, %v441
        %v443 = vpop.f32.mrf.mxu0
        %444 = vmatprep.mubr.bf16.mxu0 0
        %445 = vmatmul.mubr.bf16.gmra.mxu0 %v360
        %v446 = vpop.f32.mrf.mxu0
        %v447 = vadd.f32 %v233, %v446
        %v448 = vpop.f32.mrf.mxu0
        %v449 = vpop.f32.mrf.mxu0
        %v450 = vadd.f32 %v234, %v449
        %v451 = vpop.f32.mrf.mxu0
        %452 = vmatprep.mubr.bf16.mxu0 0
        %453 = vmatmul.mubr.bf16.gmra.mxu0 %v363
        %v454 = vpop.f32.mrf.mxu0
        %v455 = vadd.f32 %v235, %v454
        %v456 = vpop.f32.mrf.mxu0
        %v457 = vpop.f32.mrf.mxu0
        %v458 = vadd.f32 %v236, %v457
        %v459 = vpop.f32.mrf.mxu0
        %460 = vmatprep.mubr.bf16.mxu0 0
        %461 = vmatmul.mubr.bf16.gmra.mxu0 %v366
        %v462 = vpop.f32.mrf.mxu0
        %v463 = vadd.f32 %v237, %v462
        %v464 = vpop.f32.mrf.mxu0
        %v465 = vpop.f32.mrf.mxu0
        %v466 = vadd.f32 %v238, %v465
        %v467 = vpop.f32.mrf.mxu0
        %468 = vmatprep.mubr.bf16.mxu0 0
        %469 = vmatmul.mubr.bf16.gmra.mxu0 %v369
        %v470 = vpop.f32.mrf.mxu0
        %v471 = vadd.f32 %v239, %v470
        %v472 = vpop.f32.mrf.mxu0
        %v473 = vpop.f32.mrf.mxu0
        %v474 = vadd.f32 %v240, %v473
        %v475 = vpop.f32.mrf.mxu0
        %476 = vmatprep.mubr.bf16.mxu0 0
        %477 = vmatmul.mubr.bf16.gmra.mxu0 %v372
        %v478 = vpop.f32.mrf.mxu0
        %v479 = vadd.f32 %v241, %v478
        %v480 = vpop.f32.mrf.mxu0
        %v481 = vpop.f32.mrf.mxu0
        %v482 = vadd.f32 %v242, %v481
        %v483 = vpop.f32.mrf.mxu0
        %484 = vmatprep.mubr.bf16.mxu0 0
        %485 = vmatmul.mubr.bf16.gmra.mxu0 %v375
        %v486 = vpop.f32.mrf.mxu0
        %v487 = vadd.f32 %v243, %v486
        %v488 = vpop.f32.mrf.mxu0
        %v489 = vpop.f32.mrf.mxu0
        %v490 = vadd.f32 %v244, %v489
        %v491 = vpop.f32.mrf.mxu0
        %492 = vmatprep.mubr.bf16.mxu0 0
        %493 = vmatmul.mubr.bf16.gmra.mxu0 %v378
        %v494 = vpop.f32.mrf.mxu0
        %v495 = vadd.f32 %v245, %v494
        %v496 = vpop.f32.mrf.mxu0
        %v497 = vpop.f32.mrf.mxu0
        %v498 = vadd.f32 %v246, %v497
        %v499 = vpop.f32.mrf.mxu0
        %500 = vmatprep.mubr.bf16.mxu0 0
        %501 = vmatmul.mubr.bf16.gmra.mxu0 %v381
        %v502 = vpop.f32.mrf.mxu0
        %v503 = vadd.f32 %v247, %v502
        %v504 = vpop.f32.mrf.mxu0
        %v505 = vpop.f32.mrf.mxu0
        %v506 = vadd.f32 %v248, %v505
        %v507 = vpop.f32.mrf.mxu0
        %508 = vmatprep.mubr.bf16.mxu0 0
        %509 = vmatmul.mubr.bf16.gmra.mxu0 %v384
        %v510 = vpop.f32.mrf.mxu0
        %v511 = vadd.f32 %v249, %v510
        %v512 = vpop.f32.mrf.mxu0
        %v513 = vpop.f32.mrf.mxu0
        %v514 = vadd.f32 %v250, %v513
        %v515 = vpop.f32.mrf.mxu0
        %516 = vmatprep.mubr.bf16.mxu0 0
        %517 = vmatmul.mubr.bf16.gmra.mxu0 %v387
        %v518 = vpop.f32.mrf.mxu0
        %v519 = vadd.f32 %v251, %v518
        %v520 = vpop.f32.mrf.mxu0
        %v521 = vpop.f32.mrf.mxu0
        %v522 = vadd.f32 %v252, %v521
        %v523 = vpop.f32.mrf.mxu0
        %524 = vmatprep.mubr.bf16.mxu0 0
        %525 = vmatmul.mubr.bf16.gmra.mxu0 %v390
        %v526 = vpop.f32.mrf.mxu0
        %v527 = vadd.f32 %v253, %v526
        %v528 = vpop.f32.mrf.mxu0
        %v529 = vpop.f32.mrf.mxu0
        %v530 = vadd.f32 %v254, %v529
        %v531 = vpop.f32.mrf.mxu0
        %532 = vmatprep.mubr.bf16.mxu0 0
        %533 = vmatmul.mubr.bf16.gmra.mxu0 %v393
        %v534 = vpop.f32.mrf.mxu0
        %v535 = vadd.f32 %v255, %v534
        %v536 = vpop.f32.mrf.mxu0
        %v537 = vpop.f32.mrf.mxu0
        %v538 = vadd.f32 %v256, %v537
        %v539 = vpop.f32.mrf.mxu0
        %540 = vmatprep.mubr.bf16.mxu0 0
        %541 = vmatmul.mubr.bf16.gmra.mxu0 %v396
        %v542 = vpop.f32.mrf.mxu0
        %v543 = vadd.f32 %v257, %v542
        %v544 = vpop.f32.mrf.mxu0
        %v545 = vpop.f32.mrf.mxu0
        %v546 = vadd.f32 %v258, %v545
        %v547 = vpop.f32.mrf.mxu0
        %548 = vmatprep.mubr.bf16.mxu0 0
        %549 = vmatmul.mubr.bf16.gmra.mxu0 %v399
        %v550 = vpop.f32.mrf.mxu0
        %v551 = vadd.f32 %v259, %v550
        %v552 = vpop.f32.mrf.mxu0
        %v553 = vpop.f32.mrf.mxu0
        %v554 = vadd.f32 %v260, %v553
        %v555 = vpop.f32.mrf.mxu0
        %556 = vmatprep.mubr.bf16.mxu0 0
        %557 = vmatmul.mubr.bf16.gmra.mxu0 %v402
        %v558 = vpop.f32.mrf.mxu0
        %v559 = vadd.f32 %v261, %v558
        %v560 = vpop.f32.mrf.mxu0
        %v561 = vpop.f32.mrf.mxu0
        %v562 = vadd.f32 %v262, %v561
        %v563 = vpop.f32.mrf.mxu0
        %564 = vdwg.mxu0
        %565 = vst [vmem:[%s180] sm:$0xff] %v439
        %566 = vst [vmem:[%s180 + $0x8] sm:$0xff] %v442
        %567 = vst [vmem:[%s180 + $0x10] sm:$0xff] %v447
        %568 = vst [vmem:[%s180 + $0x18] sm:$0xff] %v450
        %569 = vst [vmem:[%s180 + $0x20] sm:$0xff] %v455
        %570 = vst [vmem:[%s180 + $0x28] sm:$0xff] %v458
        %571 = vst [vmem:[%s180 + $0x30] sm:$0xff] %v463
        %572 = vst [vmem:[%s180 + $0x38] sm:$0xff] %v466
        %573 = vst [vmem:[%s180 + $0x40] sm:$0xff] %v471
        %574 = vst [vmem:[%s180 + $0x48] sm:$0xff] %v474
        %575 = vst [vmem:[%s180 + $0x50] sm:$0xff] %v479
        %576 = vst [vmem:[%s180 + $0x58] sm:$0xff] %v482
        %577 = vst [vmem:[%s180 + $0x60] sm:$0xff] %v487
        %578 = vst [vmem:[%s180 + $0x68] sm:$0xff] %v490
        %579 = vst [vmem:[%s180 + $0x70] sm:$0xff] %v495
        %580 = vst [vmem:[%s180 + $0x78] sm:$0xff] %v498
        %581 = vst [vmem:[%s180 + $0x80] sm:$0xff] %v503
        %582 = vst [vmem:[%s180 + $0x88] sm:$0xff] %v506
        %583 = vst [vmem:[%s180 + $0x90] sm:$0xff] %v511
        %584 = vst [vmem:[%s180 + $0x98] sm:$0xff] %v514
        %585 = vst [vmem:[%s180 + $0xa0] sm:$0xff] %v519
        %586 = vst [vmem:[%s180 + $0xa8] sm:$0xff] %v522
        %587 = vst [vmem:[%s180 + $0xb0] sm:$0xff] %v527
        %588 = vst [vmem:[%s180 + $0xb8] sm:$0xff] %v530
        %589 = vst [vmem:[%s180 + $0xc0] sm:$0xff] %v535
        %590 = vst [vmem:[%s180 + $0xc8] sm:$0xff] %v538
        %591 = vst [vmem:[%s180 + $0xd0] sm:$0xff] %v543
        %592 = vst [vmem:[%s180 + $0xd8] sm:$0xff] %v546
        %593 = vst [vmem:[%s180 + $0xe0] sm:$0xff] %v551
        %594 = vst [vmem:[%s180 + $0xe8] sm:$0xff] %v554
        %595 = vst [vmem:[%s180 + $0xf0] sm:$0xff] %v559
        %596 = vst [vmem:[%s180 + $0xf8] sm:$0xff] %v562
        %s597 = sand.u32 %s98, 1
        %s598 = scalar_lea.sflag [#allocation3], %s597
        %s599 = sand.u32 %s98, 1
        %s600 = smul.addr %s599, 256
        %s601 = scalar_lea.vmem [#allocation2], %s600
        // Predicated region
        $region33: #{_lambda_.7} parent=31 // pred_check
          %p602 = pneg %p108
        $region34: #{_lambda_.7} parent=31 // pred_check_branch
          %604 = sbr.rel (%p602) target = $region36
        $region35: #{_lambda_.7} parent=31 // pred_region
          %s605 = smul.u32 32, %s17
          %s607 = ssub.s32 4096, 4096
          %608 = vsyncadd %s598, %s607
          %s609 = smul.addr %s605, 128
          %s610 = scalar_lea.hbm %s3, %s609
          %s611 = sshll.u32 %s601, 4
          %s612 = int_to_ptr.vmem [resolvable:$true] %s611
          %617 = dma.vmem_to_hbm [thread:$0]  %s612, 4096, %s610, %s598, 128, 128, 8
        $region36: #{_lambda_.7} parent=31 // pred_fallthru
          _
      $region32: #{_lambda_.7} parent=5 // pred_fallthru
        _
      %p618 = scmp.le.s32.totalorder 2, %s12
      // Predicated region
      $region37: #{_lambda_.7} parent=5 // pred_check
        %p619 = pneg %p618
      $region38: #{_lambda_.7} parent=5 // pred_check_branch
        %621 = sbr.rel (%p619) target = $region40
      $region39: #{_lambda_.7} parent=5 // pred_region
        %s622 = ssub.s32 %s12, 2
        // Predicated region
        $region41: #{_lambda_.7} parent=39 // pred_check
          %p623 = pneg %p114
        $region42: #{_lambda_.7} parent=39 // pred_check_branch
          %625 = sbr.rel (%p623) target = $region44
        $region43: #{_lambda_.7} parent=39 // pred_region
          %s626 = sand.u32 %s99, 1
          %s627 = scalar_lea.sflag [#allocation3], %s626
          %s628 = sand.u32 %s99, 1
          %s629 = smul.addr %s628, 256
          %s630 = scalar_lea.vmem [#allocation2], %s629
          %631 = dma.done %s627, 4096
        $region44: #{_lambda_.7} parent=39 // pred_fallthru
          _
      $region40: #{_lambda_.7} parent=5 // pred_fallthru
        _
    $region6: #{_lambda_.7} parent=1 // loop_footer
      %s16 = sadd.s32 1, %s12
    $region7: #{_lambda_.7} parent=1 // loop_footer_branch
      %11 = sbr.rel target = $region3
    $region8: #{_lambda_.7} parent=1 // loop_exit
      _
    %632 = vsyncpa [#allocation3], 1
    %s633 = scalar_lea.sflag [#allocation3], 1
    %634 = vsyncpa %s633, 1

// kernel: _lambda_.6
$region0: #{_lambda_.6}
  #allocation0 [shape = 'u32[]', space=smem, size = 0x4, offset = 0x4, fixed_abs, tag = 'smem constant byte address 0x4 - core index']
  #allocation1 [shape = 'u32[144,128]{1,0:T(1,128)}', space=vmem, size = 0x12000, scoped, tag = 'internal scratch']
  %s0 = inlined_call_operand.vmem [shape: f32[2,18,18,32], index: 0, kind: input, shape index: {}]
  %s1 = inlined_call_operand.vmem [shape: bf16[9,32,32], index: 1, kind: input, shape index: {}]
  %s2 = inlined_call_operand.vmem [shape: f32[1,32], index: 2, kind: input, shape index: {}]
  %s3 = inlined_call_operand.vmem [shape: f32[1,32], index: 3, kind: input, shape index: {}]
  %s4 = inlined_call_operand.vmem [shape: bf16[2,16,16,32], index: 4, kind: output, shape index: {}]
  %s5 = sld [smem:[#allocation0]]
  $region49: #{_lambda_.6} parent=0
    _
  %s7 = ssub.s32 1, %s5
  %s8 = scalar_select 0, %s7, %s5
  loop: start=0, step=1, limit=4
  $region2: #{_lambda_.6} parent=0 // loop_pre_header
    _
  $region3: #{_lambda_.6} parent=0 // loop_header
    %s10 = sphi 0, %s14
    %p11 = scmp.ge.s32.totalorder %s10, 4
    %s20 = sphi 0, %s22
    %s23 = sphi 0, %s20
    %s24 = sphi 0, %s23
    %s40 = sphi 0, %s24
    %s44 = sphi 0, %s44
    %s46 = sphi 0, %s44
    %s47 = sphi 0, %s46
    %s61 = sphi 0, %s47
    %s65 = sphi 0, %s65
    %s67 = sphi 0, %s65
    %s68 = sphi 0, %s67
    %s82 = sphi 0, %s68
    %s86 = sphi 0, %s86
    %s88 = sphi 0, %s86
    %s89 = sphi 0, %s88
    %s103 = sphi 0, %s89
    %s109 = sphi 0, %s111
    %s112 = sphi 0, %s109
    %s113 = sphi 0, %s112
    %s129 = sphi 0, %s113
  $region4: #{_lambda_.6} parent=0 // loop_header_branch
    %13 = sbr.rel (%p11) target = $region8
  $region5: #{_lambda_.6} parent=0 // loop_body
    %s15 = ssub.s32 %s10, 1
    %s16 = ssub.s32 %s10, 2
    %s17 = sadd.s32 %s10, 1
    %s18 = ssub.s32 %s10, %s17
    %p19 = scmp.eq.s32.totalorder %s18, 0
    %s21 = sadd.s32 %s20, 1
    %s22 = scalar_select %p19, %s20, %s21
    %p25 = pneg %p19
    %p26 = scmp.eq.s32.totalorder %s10, 1
    %p27 = por %p25, %p26
    %p28 = scmp.ne.s32.totalorder %s20, %s23
    %p29 = scmp.eq.s32.totalorder %s10, 0
    %p30 = por %p28, %p29
    %p31 = scmp.ne.s32.totalorder %s20, %s23
    %p32 = scmp.eq.s32.totalorder %s15, 1
    %p33 = por %p31, %p32
    %p34 = scmp.ne.s32.totalorder %s23, %s24
    %p35 = scmp.eq.s32.totalorder %s15, 0
    %p36 = por %p34, %p35
    %p37 = scmp.ne.s32.totalorder %s23, %s24
    %p38 = scmp.eq.s32.totalorder %s16, 1
    %p39 = por %p37, %p38
    %p41 = scmp.ne.s32.totalorder %s24, %s40
    %p42 = scmp.eq.s32.totalorder %s16, 0
    %p43 = por %p41, %p42
    %s45 = sadd.s32 %s44, 1
    %p48 = scmp.eq.s32.totalorder %s10, 1
    %p49 = scmp.ne.s32.totalorder %s44, %s46
    %p50 = scmp.eq.s32.totalorder %s10, 0
    %p51 = por %p49, %p50
    %p52 = scmp.ne.s32.totalorder %s44, %s46
    %p53 = scmp.eq.s32.totalorder %s15, 1
    %p54 = por %p52, %p53
    %p55 = scmp.ne.s32.totalorder %s46, %s47
    %p56 = scmp.eq.s32.totalorder %s15, 0
    %p57 = por %p55, %p56
    %p58 = scmp.ne.s32.totalorder %s46, %s47
    %p59 = scmp.eq.s32.totalorder %s16, 1
    %p60 = por %p58, %p59
    %p62 = scmp.ne.s32.totalorder %s47, %s61
    %p63 = scmp.eq.s32.totalorder %s16, 0
    %p64 = por %p62, %p63
    %s66 = sadd.s32 %s65, 1
    %p69 = scmp.eq.s32.totalorder %s10, 1
    %p70 = scmp.ne.s32.totalorder %s65, %s67
    %p71 = scmp.eq.s32.totalorder %s10, 0
    %p72 = por %p70, %p71
    %p73 = scmp.ne.s32.totalorder %s65, %s67
    %p74 = scmp.eq.s32.totalorder %s15, 1
    %p75 = por %p73, %p74
    %p76 = scmp.ne.s32.totalorder %s67, %s68
    %p77 = scmp.eq.s32.totalorder %s15, 0
    %p78 = por %p76, %p77
    %p79 = scmp.ne.s32.totalorder %s67, %s68
    %p80 = scmp.eq.s32.totalorder %s16, 1
    %p81 = por %p79, %p80
    %p83 = scmp.ne.s32.totalorder %s68, %s82
    %p84 = scmp.eq.s32.totalorder %s16, 0
    %p85 = por %p83, %p84
    %s87 = sadd.s32 %s86, 1
    %p90 = scmp.eq.s32.totalorder %s10, 1
    %p91 = scmp.ne.s32.totalorder %s86, %s88
    %p92 = scmp.eq.s32.totalorder %s10, 0
    %p93 = por %p91, %p92
    %p94 = scmp.ne.s32.totalorder %s86, %s88
    %p95 = scmp.eq.s32.totalorder %s15, 1
    %p96 = por %p94, %p95
    %p97 = scmp.ne.s32.totalorder %s88, %s89
    %p98 = scmp.eq.s32.totalorder %s15, 0
    %p99 = por %p97, %p98
    %p100 = scmp.ne.s32.totalorder %s88, %s89
    %p101 = scmp.eq.s32.totalorder %s16, 1
    %p102 = por %p100, %p101
    %p104 = scmp.ne.s32.totalorder %s89, %s103
    %p105 = scmp.eq.s32.totalorder %s16, 0
    %p106 = por %p104, %p105
    %s107 = ssub.s32 %s10, %s17
    %p108 = scmp.eq.s32.totalorder %s107, 0
    %s110 = sadd.s32 %s109, 1
    %s111 = scalar_select %p108, %s109, %s110
    %p114 = pneg %p108
    %p115 = scmp.eq.s32.totalorder %s10, 1
    %p116 = por %p114, %p115
    %p117 = scmp.ne.s32.totalorder %s109, %s112
    %p118 = scmp.eq.s32.totalorder %s10, 0
    %p119 = por %p117, %p118
    %p120 = scmp.ne.s32.totalorder %s109, %s112
    %p121 = scmp.eq.s32.totalorder %s15, 1
    %p122 = por %p120, %p121
    %p123 = scmp.ne.s32.totalorder %s112, %s113
    %p124 = scmp.eq.s32.totalorder %s15, 0
    %p125 = por %p123, %p124
    %p126 = scmp.ne.s32.totalorder %s112, %s113
    %p127 = scmp.eq.s32.totalorder %s16, 1
    %p128 = por %p126, %p127
    %p130 = scmp.ne.s32.totalorder %s113, %s129
    %p131 = scmp.eq.s32.totalorder %s16, 0
    %p132 = por %p130, %p131
    %p133 = scmp.le.s32.totalorder 1, %s10
    %p134 = scmp.lt.s32.totalorder %s10, 3
    %p135 = pnand %p133, %p134
    %p136 = pneg %p135
    // Predicated region
    $region9: #{_lambda_.6} parent=5 // pred_check
      _
    $region10: #{_lambda_.6} parent=5 // pred_check_branch
      %138 = sbr.rel (%p135) target = $region12
    $region11: #{_lambda_.6} parent=5 // pred_region
      %s139 = ssub.s32 %s10, 1
      // Predicated region
      $region13: #{_lambda_.6} parent=11 // pred_check
        %p140 = pneg %p57
      $region14: #{_lambda_.6} parent=11 // pred_check_branch
        %142 = sbr.rel (%p140) target = $region16
      $region15: #{_lambda_.6} parent=11 // pred_region
        _
      $region16: #{_lambda_.6} parent=11 // pred_fallthru
        _
      // Predicated region
      $region17: #{_lambda_.6} parent=11 // pred_check
        %p143 = pneg %p78
      $region18: #{_lambda_.6} parent=11 // pred_check_branch
        %145 = sbr.rel (%p143) target = $region20
      $region19: #{_lambda_.6} parent=11 // pred_region
        _
      $region20: #{_lambda_.6} parent=11 // pred_fallthru
        _
      // Predicated region
      $region21: #{_lambda_.6} parent=11 // pred_check
        %p146 = pneg %p99
      $region22: #{_lambda_.6} parent=11 // pred_check_branch
        %148 = sbr.rel (%p146) target = $region24
      $region23: #{_lambda_.6} parent=11 // pred_region
        _
      $region24: #{_lambda_.6} parent=11 // pred_fallthru
        _
    $region12: #{_lambda_.6} parent=5 // pred_fallthru
      _
    %p149 = scmp.lt.s32.totalorder %s10, 2
    // Predicated region
    $region25: #{_lambda_.6} parent=5 // pred_check
      %p150 = pneg %p149
    $region26: #{_lambda_.6} parent=5 // pred_check_branch
      %152 = sbr.rel (%p150) target = $region28
    $region27: #{_lambda_.6} parent=5 // pred_region
      // Predicated region
      $region29: #{_lambda_.6} parent=27 // pred_check
        %p153 = pneg %p30
      $region30: #{_lambda_.6} parent=27 // pred_check_branch
        %155 = sbr.rel (%p153) target = $region32
      $region31: #{_lambda_.6} parent=27 // pred_region
        %p156 = scmp.lt.s32.totalorder %s10, 1
        %s157 = scalar_select %p156, %s10, 1
        %s158 = smul.addr %s157, 54
        %s159 = smul.addr %s158, 8
        %s160 = scalar_lea.vmem %s0, %s159
      $region32: #{_lambda_.6} parent=27 // pred_fallthru
        _
    $region28: #{_lambda_.6} parent=5 // pred_fallthru
      _
    %p161 = scmp.le.s32.totalorder 1, %s10
    %p162 = scmp.lt.s32.totalorder %s10, 3
    %p163 = pnand %p161, %p162
    %p164 = pneg %p163
    // Predicated region
    $region33: #{_lambda_.6} parent=5 // pred_check
      _
    $region34: #{_lambda_.6} parent=5 // pred_check_branch
      %166 = sbr.rel (%p163) target = $region36
    $region35: #{_lambda_.6} parent=5 // pred_region
      %s167 = ssub.s32 %s10, 1
      %p168 = scmp.lt.s32.totalorder %s15, 1
      %s169 = scalar_select %p168, %s15, 1
      %s170 = smul.addr %s169, 54
      %s171 = smul.addr %s170, 8
      %s172 = scalar_lea.vmem %s0, %s171
      %p173 = pneg %p36
      %p174 = pneg %p33
      %p175 = pneg %p57
      %p176 = pneg %p54
      %p177 = pneg %p78
      %p178 = pneg %p75
      %p179 = pneg %p99
      %p180 = pneg %p96
      %p181 = pneg %p125
      %p182 = pneg %p122
      %p183 = scmp.lt.s32.totalorder %s15, 1
      %s184 = scalar_select %p183, %s15, 1
      %s185 = smul.addr %s184, 32
      %s186 = smul.addr %s185, 4
      %s187 = scalar_lea.vmem %s4, %s186
      %p188 = scmp.lt.s32.totalorder %s15, 1
      %s189 = scalar_select %p188, %s15, 1
      %s190 = smul.addr %s189, 54
      %s191 = smul.addr %s190, 8
      %s192 = scalar_lea.vmem %s0, %s191
      %p193 = scmp.lt.s32.totalorder %s15, 1
      %s194 = scalar_select %p193, %s15, 1
      %s195 = smul.addr %s194, 32
      %s196 = smul.addr %s195, 4
      %s197 = scalar_lea.vmem %s4, %s196
      %v199 = vld [vmem:[%s192] sm:$0xff]
      %v200 = vld [vmem:[%s192 + $0x8] sm:$0xff]
      %v201 = vld [vmem:[%s192 + $0x18] sm:$0xff]
      %v202 = vld [vmem:[%s192 + $0x20] sm:$0xff]
      %v203 = vld [vmem:[%s192 + $0x30] sm:$0xff]
      %v204 = vld [vmem:[%s192 + $0x38] sm:$0xff]
      %v205 = vld [vmem:[%s192 + $0x48] sm:$0xff]
      %v206 = vld [vmem:[%s192 + $0x50] sm:$0xff]
      %v207 = vld [vmem:[%s192 + $0x60] sm:$0xff]
      %v208 = vld [vmem:[%s192 + $0x68] sm:$0xff]
      %v209 = vld [vmem:[%s192 + $0x78] sm:$0xff]
      %v210 = vld [vmem:[%s192 + $0x80] sm:$0xff]
      %v211 = vld [vmem:[%s192 + $0x90] sm:$0xff]
      %v212 = vld [vmem:[%s192 + $0x98] sm:$0xff]
      %v213 = vld [vmem:[%s192 + $0xa8] sm:$0xff]
      %v214 = vld [vmem:[%s192 + $0xb0] sm:$0xff]
      %v215 = vld [vmem:[%s192 + $0xc0] sm:$0xff]
      %v216 = vld [vmem:[%s192 + $0xc8] sm:$0xff]
      %v217 = vld [vmem:[%s192 + $0xd8] sm:$0xff]
      %v218 = vld [vmem:[%s192 + $0xe0] sm:$0xff]
      %v219 = vld [vmem:[%s192 + $0xf0] sm:$0xff]
      %v220 = vld [vmem:[%s192 + $0xf8] sm:$0xff]
      %v221 = vld [vmem:[%s192 + $0x108] sm:$0xff]
      %v222 = vld [vmem:[%s192 + $0x110] sm:$0xff]
      %v223 = vld [vmem:[%s192 + $0x120] sm:$0xff]
      %v224 = vld [vmem:[%s192 + $0x128] sm:$0xff]
      %v225 = vld [vmem:[%s192 + $0x138] sm:$0xff]
      %v226 = vld [vmem:[%s192 + $0x140] sm:$0xff]
      %v227 = vld [vmem:[%s192 + $0x150] sm:$0xff]
      %v228 = vld [vmem:[%s192 + $0x158] sm:$0xff]
      %v229 = vld [vmem:[%s192 + $0x168] sm:$0xff]
      %v230 = vld [vmem:[%s192 + $0x170] sm:$0xff]
      %v231 = vpack.c.bf16 %v200, %v199
      %v232 = vpack.c.bf16 %v202, %v201
      %v233 = vpack.c.bf16 %v204, %v203
      %v234 = vpack.c.bf16 %v206, %v205
      %v235 = vpack.c.bf16 %v208, %v207
      %v236 = vpack.c.bf16 %v210, %v209
      %v237 = vpack.c.bf16 %v212, %v211
      %v238 = vpack.c.bf16 %v214, %v213
      %v239 = vpack.c.bf16 %v216, %v215
      %v240 = vpack.c.bf16 %v218, %v217
      %v241 = vpack.c.bf16 %v220, %v219
      %v242 = vpack.c.bf16 %v222, %v221
      %v243 = vpack.c.bf16 %v224, %v223
      %v244 = vpack.c.bf16 %v226, %v225
      %v245 = vpack.c.bf16 %v228, %v227
      %v246 = vpack.c.bf16 %v230, %v229
      %v247 = vld [vmem:[%s1] sm:$0xf]
      %v248 = vld [vmem:[%s1 + $0x4] sm:$0xf]
      %v249 = vld [vmem:[%s1 + $0x8] sm:$0xf]
      %v250 = vld [vmem:[%s1 + $0xc] sm:$0xf]
      %v251 = vld [vmem:[%s192 + $0x1] sm:$0xff]
      %v252 = vld [vmem:[%s192 + $0x9] sm:$0xff]
      %v253 = vld [vmem:[%s192 + $0x19] sm:$0xff]
      %v254 = vld [vmem:[%s192 + $0x21] sm:$0xff]
      %v255 = vld [vmem:[%s192 + $0x31] sm:$0xff]
      %v256 = vld [vmem:[%s192 + $0x39] sm:$0xff]
      %v257 = vld [vmem:[%s192 + $0x49] sm:$0xff]
      %v258 = vld [vmem:[%s192 + $0x51] sm:$0xff]
      %v259 = vld [vmem:[%s192 + $0x61] sm:$0xff]
      %v260 = vld [vmem:[%s192 + $0x69] sm:$0xff]
      %v261 = vld [vmem:[%s192 + $0x79] sm:$0xff]
      %v262 = vld [vmem:[%s192 + $0x81] sm:$0xff]
      %v263 = vld [vmem:[%s192 + $0x91] sm:$0xff]
      %v264 = vld [vmem:[%s192 + $0x99] sm:$0xff]
      %v265 = vld [vmem:[%s192 + $0xa9] sm:$0xff]
      %v266 = vld [vmem:[%s192 + $0xb1] sm:$0xff]
      %v267 = vld [vmem:[%s192 + $0xc1] sm:$0xff]
      %v268 = vld [vmem:[%s192 + $0xc9] sm:$0xff]
      %v269 = vld [vmem:[%s192 + $0xd9] sm:$0xff]
      %v270 = vld [vmem:[%s192 + $0xe1] sm:$0xff]
      %v271 = vld [vmem:[%s192 + $0xf1] sm:$0xff]
      %v272 = vld [vmem:[%s192 + $0xf9] sm:$0xff]
      %v273 = vld [vmem:[%s192 + $0x109] sm:$0xff]
      %v274 = vld [vmem:[%s192 + $0x111] sm:$0xff]
      %v275 = vld [vmem:[%s192 + $0x121] sm:$0xff]
      %v276 = vld [vmem:[%s192 + $0x129] sm:$0xff]
      %v277 = vld [vmem:[%s192 + $0x139] sm:$0xff]
      %v278 = vld [vmem:[%s192 + $0x141] sm:$0xff]
      %v279 = vld [vmem:[%s192 + $0x151] sm:$0xff]
      %v280 = vld [vmem:[%s192 + $0x159] sm:$0xff]
      %v281 = vld [vmem:[%s192 + $0x169] sm:$0xff]
      %v282 = vld [vmem:[%s192 + $0x171] sm:$0xff]
      %v283 = vpack.c.bf16 %v252, %v251
      %v284 = vpack.c.bf16 %v254, %v253
      %v285 = vpack.c.bf16 %v256, %v255
      %v286 = vpack.c.bf16 %v258, %v257
      %v287 = vpack.c.bf16 %v260, %v259
      %v288 = vpack.c.bf16 %v262, %v261
      %v289 = vpack.c.bf16 %v264, %v263
      %v290 = vpack.c.bf16 %v266, %v265
      %v291 = vpack.c.bf16 %v268, %v267
      %v292 = vpack.c.bf16 %v270, %v269
      %v293 = vpack.c.bf16 %v272, %v271
      %v294 = vpack.c.bf16 %v274, %v273
      %v295 = vpack.c.bf16 %v276, %v275
      %v296 = vpack.c.bf16 %v278, %v277
      %v297 = vpack.c.bf16 %v280, %v279
      %v298 = vpack.c.bf16 %v282, %v281
      %s299 = scalar_lea.vmem %s1, 16
      %v300 = vld [vmem:[%s299] sm:$0xf]
      %v301 = vld [vmem:[%s299 + $0x4] sm:$0xf]
      %v302 = vld [vmem:[%s299 + $0x8] sm:$0xf]
      %v303 = vld [vmem:[%s299 + $0xc] sm:$0xf]
      %v308 = vunpack.c.l.b16 %v300
      %v309 = vunpack.c.l.b16 %v301
      %v310 = vunpack.c.l.b16 %v302
      %v311 = vunpack.c.l.b16 %v303
      %v312 = vpack.c.b16 %v309, %v308
      %v313 = vpack.c.b16 %v311, %v310
      %vm316 = vcmask 261120
      %v318 = vsel %vm316, %v283, 0
      %v321 = vsel %vm316, %v284, 0
      %v324 = vsel %vm316, %v285, 0
      %v327 = vsel %vm316, %v286, 0
      %v330 = vsel %vm316, %v287, 0
      %v333 = vsel %vm316, %v288, 0
      %v336 = vsel %vm316, %v289, 0
      %v339 = vsel %vm316, %v290, 0
      %v342 = vsel %vm316, %v291, 0
      %v345 = vsel %vm316, %v292, 0
      %v348 = vsel %vm316, %v293, 0
      %v351 = vsel %vm316, %v294, 0
      %v354 = vsel %vm316, %v295, 0
      %v357 = vsel %vm316, %v296, 0
      %v360 = vsel %vm316, %v297, 0
      %v363 = vsel %vm316, %v298, 0
      %365 = vmatprep.subr.bf16.mxu0 0
      %366 = vmatpush1.bf16.msra.mxu0 0
      %367 = vmatprep.subr.bf16.mxu0 0
      %368 = vmatpush1.bf16.msra.mxu0 0
      %369 = vmatprep.subr.bf16.mxu0 0
      %370 = vmatpush1.bf16.msra.mxu0 0
      %371 = vmatprep.subr.bf16.mxu0 0
      %372 = vmatpush1.bf16.msra.mxu0 0
      %373 = vmatprep.subr.bf16.mxu0 0
      %374 = vmatpush1.bf16.msra.mxu0 0
      %375 = vmatprep.subr.bf16.mxu0 0
      %376 = vmatpush1.bf16.msra.mxu0 0
      %377 = vmatprep.subr.bf16.mxu0 0
      %378 = vmatpush1.bf16.msra.mxu0 %v313
      %379 = vmatprep.subr.bf16.mxu0 0
      %380 = vmatpush1.bf16.msra.mxu0 %v312
      %381 = vmatprep.subr.bf16.mxu0 0
      %382 = vmatpush2.bf16.msra.mxu0 0
      %383 = vmatprep.subr.bf16.mxu0 0
      %384 = vmatpush2.bf16.msra.mxu0 0
      %385 = vmatprep.subr.bf16.mxu0 0
      %386 = vmatpush2.bf16.msra.mxu0 0
      %387 = vmatprep.subr.bf16.mxu0 0
      %388 = vmatpush2.bf16.msra.mxu0 0
      %389 = vmatprep.subr.bf16.mxu0 0
      %390 = vmatpush2.bf16.msra.mxu0 0
      %391 = vmatprep.subr.bf16.mxu0 0
      %392 = vmatpush2.bf16.msra.mxu0 0
      %393 = vmatprep.subr.bf16.mxu0 0
      %394 = vmatpush2.bf16.msra.mxu0 0
      %395 = vmatprep.subr.bf16.mxu0 0
      %396 = vmatpush2.bf16.msra.mxu0 0
      %397 = vmatprep.mubr.bf16.mxu0 0
      %398 = vmatmul.mubr.bf16.gmra.mxu0 %v318
      %v399 = vpop.f32.mrf.mxu0
      %v400 = vadd.f32 0.0, %v399
      %v401 = vpop.f32.mrf.mxu0
      %v402 = vpop.f32.mrf.mxu0
      %v403 = vadd.f32 0.0, %v402
      %v404 = vpop.f32.mrf.mxu0
      %405 = vmatprep.mubr.bf16.mxu0 0
      %406 = vmatmul.mubr.bf16.gmra.mxu0 %v321
      %v407 = vpop.f32.mrf.mxu0
      %v408 = vadd.f32 0.0, %v407
      %v409 = vpop.f32.mrf.mxu0
      %v410 = vpop.f32.mrf.mxu0
      %v411 = vadd.f32 0.0, %v410
      %v412 = vpop.f32.mrf.mxu0
      %413 = vmatprep.mubr.bf16.mxu0 0
      %414 = vmatmul.mubr.bf16.gmra.mxu0 %v324
      %v415 = vpop.f32.mrf.mxu0
      %v416 = vadd.f32 0.0, %v415
      %v417 = vpop.f32.mrf.mxu0
      %v418 = vpop.f32.mrf.mxu0
      %v419 = vadd.f32 0.0, %v418
      %v420 = vpop.f32.mrf.mxu0
      %421 = vmatprep.mubr.bf16.mxu0 0
      %422 = vmatmul.mubr.bf16.gmra.mxu0 %v327
      %v423 = vpop.f32.mrf.mxu0
      %v424 = vadd.f32 0.0, %v423
      %v425 = vpop.f32.mrf.mxu0
      %v426 = vpop.f32.mrf.mxu0
      %v427 = vadd.f32 0.0, %v426
      %v428 = vpop.f32.mrf.mxu0
      %429 = vmatprep.mubr.bf16.mxu0 0
      %430 = vmatmul.mubr.bf16.gmra.mxu0 %v330
      %v431 = vpop.f32.mrf.mxu0
      %v432 = vadd.f32 0.0, %v431
      %v433 = vpop.f32.mrf.mxu0
      %v434 = vpop.f32.mrf.mxu0
      %v435 = vadd.f32 0.0, %v434
      %v436 = vpop.f32.mrf.mxu0
      %437 = vmatprep.mubr.bf16.mxu0 0
      %438 = vmatmul.mubr.bf16.gmra.mxu0 %v333
      %v439 = vpop.f32.mrf.mxu0
      %v440 = vadd.f32 0.0, %v439
      %v441 = vpop.f32.mrf.mxu0
      %v442 = vpop.f32.mrf.mxu0
      %v443 = vadd.f32 0.0, %v442
      %v444 = vpop.f32.mrf.mxu0
      %445 = vmatprep.mubr.bf16.mxu0 0
      %446 = vmatmul.mubr.bf16.gmra.mxu0 %v336
      %v447 = vpop.f32.mrf.mxu0
      %v448 = vadd.f32 0.0, %v447
      %v449 = vpop.f32.mrf.mxu0
      %v450 = vpop.f32.mrf.mxu0
      %v451 = vadd.f32 0.0, %v450
      %v452 = vpop.f32.mrf.mxu0
      %453 = vmatprep.mubr.bf16.mxu0 0
      %454 = vmatmul.mubr.bf16.gmra.mxu0 %v339
      %v455 = vpop.f32.mrf.mxu0
      %v456 = vadd.f32 0.0, %v455
      %v457 = vpop.f32.mrf.mxu0
      %v458 = vpop.f32.mrf.mxu0
      %v459 = vadd.f32 0.0, %v458
      %v460 = vpop.f32.mrf.mxu0
      %461 = vmatprep.mubr.bf16.mxu0 0
      %462 = vmatmul.mubr.bf16.gmra.mxu0 %v342
      %v463 = vpop.f32.mrf.mxu0
      %v464 = vadd.f32 0.0, %v463
      %v465 = vpop.f32.mrf.mxu0
      %v466 = vpop.f32.mrf.mxu0
      %v467 = vadd.f32 0.0, %v466
      %v468 = vpop.f32.mrf.mxu0
      %469 = vmatprep.mubr.bf16.mxu0 0
      %470 = vmatmul.mubr.bf16.gmra.mxu0 %v345
      %v471 = vpop.f32.mrf.mxu0
      %v472 = vadd.f32 0.0, %v471
      %v473 = vpop.f32.mrf.mxu0
      %v474 = vpop.f32.mrf.mxu0
      %v475 = vadd.f32 0.0, %v474
      %v476 = vpop.f32.mrf.mxu0
      %477 = vmatprep.mubr.bf16.mxu0 0
      %478 = vmatmul.mubr.bf16.gmra.mxu0 %v348
      %v479 = vpop.f32.mrf.mxu0
      %v480 = vadd.f32 0.0, %v479
      %v481 = vpop.f32.mrf.mxu0
      %v482 = vpop.f32.mrf.mxu0
      %v483 = vadd.f32 0.0, %v482
      %v484 = vpop.f32.mrf.mxu0
      %485 = vmatprep.mubr.bf16.mxu0 0
      %486 = vmatmul.mubr.bf16.gmra.mxu0 %v351
      %v487 = vpop.f32.mrf.mxu0
      %v488 = vadd.f32 0.0, %v487
      %v489 = vpop.f32.mrf.mxu0
      %v490 = vpop.f32.mrf.mxu0
      %v491 = vadd.f32 0.0, %v490
      %v492 = vpop.f32.mrf.mxu0
      %493 = vmatprep.mubr.bf16.mxu0 0
      %494 = vmatmul.mubr.bf16.gmra.mxu0 %v354
      %v495 = vpop.f32.mrf.mxu0
      %v496 = vadd.f32 0.0, %v495
      %v497 = vpop.f32.mrf.mxu0
      %v498 = vpop.f32.mrf.mxu0
      %v499 = vadd.f32 0.0, %v498
      %v500 = vpop.f32.mrf.mxu0
      %501 = vmatprep.mubr.bf16.mxu0 0
      %502 = vmatmul.mubr.bf16.gmra.mxu0 %v357
      %v503 = vpop.f32.mrf.mxu0
      %v504 = vadd.f32 0.0, %v503
      %v505 = vpop.f32.mrf.mxu0
      %v506 = vpop.f32.mrf.mxu0
      %v507 = vadd.f32 0.0, %v506
      %v508 = vpop.f32.mrf.mxu0
      %509 = vmatprep.mubr.bf16.mxu0 0
      %510 = vmatmul.mubr.bf16.gmra.mxu0 %v360
      %v511 = vpop.f32.mrf.mxu0
      %v512 = vadd.f32 0.0, %v511
      %v513 = vpop.f32.mrf.mxu0
      %v514 = vpop.f32.mrf.mxu0
      %v515 = vadd.f32 0.0, %v514
      %v516 = vpop.f32.mrf.mxu0
      %517 = vmatprep.mubr.bf16.mxu0 0
      %518 = vmatmul.mubr.bf16.gmra.mxu0 %v363
      %v519 = vpop.f32.mrf.mxu0
      %v520 = vadd.f32 0.0, %v519
      %v521 = vpop.f32.mrf.mxu0
      %v522 = vpop.f32.mrf.mxu0
      %v523 = vadd.f32 0.0, %v522
      %v524 = vpop.f32.mrf.mxu0
      %525 = vdwg.mxu0
      %v530 = vunpack.c.l.b16 %v247
      %v531 = vunpack.c.l.b16 %v248
      %v532 = vunpack.c.l.b16 %v249
      %v533 = vunpack.c.l.b16 %v250
      %v534 = vpack.c.b16 %v531, %v530
      %v535 = vpack.c.b16 %v533, %v532
      %v539 = vsel %vm316, %v231, 0
      %v542 = vsel %vm316, %v232, 0
      %v545 = vsel %vm316, %v233, 0
      %v548 = vsel %vm316, %v234, 0
      %v551 = vsel %vm316, %v235, 0
      %v554 = vsel %vm316, %v236, 0
      %v557 = vsel %vm316, %v237, 0
      %v560 = vsel %vm316, %v238, 0
      %v563 = vsel %vm316, %v239, 0
      %v566 = vsel %vm316, %v240, 0
      %v569 = vsel %vm316, %v241, 0
      %v572 = vsel %vm316, %v242, 0
      %v575 = vsel %vm316, %v243, 0
      %v578 = vsel %vm316, %v244, 0
      %v581 = vsel %vm316, %v245, 0
      %v584 = vsel %vm316, %v246, 0
      %586 = vmatprep.subr.bf16.mxu0 0
      %587 = vmatpush1.bf16.msra.mxu0 0
      %588 = vmatprep.subr.bf16.mxu0 0
      %589 = vmatpush1.bf16.msra.mxu0 0
      %590 = vmatprep.subr.bf16.mxu0 0
      %591 = vmatpush1.bf16.msra.mxu0 0
      %592 = vmatprep.subr.bf16.mxu0 0
      %593 = vmatpush1.bf16.msra.mxu0 0
      %594 = vmatprep.subr.bf16.mxu0 0
      %595 = vmatpush1.bf16.msra.mxu0 0
      %596 = vmatprep.subr.bf16.mxu0 0
      %597 = vmatpush1.bf16.msra.mxu0 0
      %598 = vmatprep.subr.bf16.mxu0 0
      %599 = vmatpush1.bf16.msra.mxu0 %v535
      %600 = vmatprep.subr.bf16.mxu0 0
      %601 = vmatpush1.bf16.msra.mxu0 %v534
      %602 = vmatprep.subr.bf16.mxu0 0
      %603 = vmatpush2.bf16.msra.mxu0 0
      %604 = vmatprep.subr.bf16.mxu0 0
      %605 = vmatpush2.bf16.msra.mxu0 0
      %606 = vmatprep.subr.bf16.mxu0 0
      %607 = vmatpush2.bf16.msra.mxu0 0
      %608 = vmatprep.subr.bf16.mxu0 0
      %609 = vmatpush2.bf16.msra.mxu0 0
      %610 = vmatprep.subr.bf16.mxu0 0
      %611 = vmatpush2.bf16.msra.mxu0 0
      %612 = vmatprep.subr.bf16.mxu0 0
      %613 = vmatpush2.bf16.msra.mxu0 0
      %614 = vmatprep.subr.bf16.mxu0 0
      %615 = vmatpush2.bf16.msra.mxu0 0
      %616 = vmatprep.subr.bf16.mxu0 0
      %617 = vmatpush2.bf16.msra.mxu0 0
      %618 = vmatprep.mubr.bf16.mxu0 0
      %619 = vmatmul.mubr.bf16.gmra.mxu0 %v539
      %v620 = vpop.f32.mrf.mxu0
      %v621 = vadd.f32 %v400, %v620
      %v622 = vpop.f32.mrf.mxu0
      %v623 = vpop.f32.mrf.mxu0
      %v624 = vadd.f32 %v403, %v623
      %v625 = vpop.f32.mrf.mxu0
      %626 = vmatprep.mubr.bf16.mxu0 0
      %627 = vmatmul.mubr.bf16.gmra.mxu0 %v542
      %v628 = vpop.f32.mrf.mxu0
      %v629 = vadd.f32 %v408, %v628
      %v630 = vpop.f32.mrf.mxu0
      %v631 = vpop.f32.mrf.mxu0
      %v632 = vadd.f32 %v411, %v631
      %v633 = vpop.f32.mrf.mxu0
      %634 = vmatprep.mubr.bf16.mxu0 0
      %635 = vmatmul.mubr.bf16.gmra.mxu0 %v545
      %v636 = vpop.f32.mrf.mxu0
      %v637 = vadd.f32 %v416, %v636
      %v638 = vpop.f32.mrf.mxu0
      %v639 = vpop.f32.mrf.mxu0
      %v640 = vadd.f32 %v419, %v639
      %v641 = vpop.f32.mrf.mxu0
      %642 = vmatprep.mubr.bf16.mxu0 0
      %643 = vmatmul.mubr.bf16.gmra.mxu0 %v548
      %v644 = vpop.f32.mrf.mxu0
      %v645 = vadd.f32 %v424, %v644
      %v646 = vpop.f32.mrf.mxu0
      %v647 = vpop.f32.mrf.mxu0
      %v648 = vadd.f32 %v427, %v647
      %v649 = vpop.f32.mrf.mxu0
      %650 = vmatprep.mubr.bf16.mxu0 0
      %651 = vmatmul.mubr.bf16.gmra.mxu0 %v551
      %v652 = vpop.f32.mrf.mxu0
      %v653 = vadd.f32 %v432, %v652
      %v654 = vpop.f32.mrf.mxu0
      %v655 = vpop.f32.mrf.mxu0
      %v656 = vadd.f32 %v435, %v655
      %v657 = vpop.f32.mrf.mxu0
      %658 = vmatprep.mubr.bf16.mxu0 0
      %659 = vmatmul.mubr.bf16.gmra.mxu0 %v554
      %v660 = vpop.f32.mrf.mxu0
      %v661 = vadd.f32 %v440, %v660
      %v662 = vpop.f32.mrf.mxu0
      %v663 = vpop.f32.mrf.mxu0
      %v664 = vadd.f32 %v443, %v663
      %v665 = vpop.f32.mrf.mxu0
      %666 = vmatprep.mubr.bf16.mxu0 0
      %667 = vmatmul.mubr.bf16.gmra.mxu0 %v557
      %v668 = vpop.f32.mrf.mxu0
      %v669 = vadd.f32 %v448, %v668
      %v670 = vpop.f32.mrf.mxu0
      %v671 = vpop.f32.mrf.mxu0
      %v672 = vadd.f32 %v451, %v671
      %v673 = vpop.f32.mrf.mxu0
      %674 = vmatprep.mubr.bf16.mxu0 0
      %675 = vmatmul.mubr.bf16.gmra.mxu0 %v560
      %v676 = vpop.f32.mrf.mxu0
      %v677 = vadd.f32 %v456, %v676
      %v678 = vpop.f32.mrf.mxu0
      %v679 = vpop.f32.mrf.mxu0
      %v680 = vadd.f32 %v459, %v679
      %v681 = vpop.f32.mrf.mxu0
      %682 = vmatprep.mubr.bf16.mxu0 0
      %683 = vmatmul.mubr.bf16.gmra.mxu0 %v563
      %v684 = vpop.f32.mrf.mxu0
      %v685 = vadd.f32 %v464, %v684
      %v686 = vpop.f32.mrf.mxu0
      %v687 = vpop.f32.mrf.mxu0
      %v688 = vadd.f32 %v467, %v687
      %v689 = vpop.f32.mrf.mxu0
      %690 = vmatprep.mubr.bf16.mxu0 0
      %691 = vmatmul.mubr.bf16.gmra.mxu0 %v566
      %v692 = vpop.f32.mrf.mxu0
      %v693 = vadd.f32 %v472, %v692
      %v694 = vpop.f32.mrf.mxu0
      %v695 = vpop.f32.mrf.mxu0
      %v696 = vadd.f32 %v475, %v695
      %v697 = vpop.f32.mrf.mxu0
      %698 = vmatprep.mubr.bf16.mxu0 0
      %699 = vmatmul.mubr.bf16.gmra.mxu0 %v569
      %v700 = vpop.f32.mrf.mxu0
      %v701 = vadd.f32 %v480, %v700
      %v702 = vpop.f32.mrf.mxu0
      %v703 = vpop.f32.mrf.mxu0
      %v704 = vadd.f32 %v483, %v703
      %v705 = vpop.f32.mrf.mxu0
      %706 = vmatprep.mubr.bf16.mxu0 0
      %707 = vmatmul.mubr.bf16.gmra.mxu0 %v572
      %v708 = vpop.f32.mrf.mxu0
      %v709 = vadd.f32 %v488, %v708
      %v710 = vpop.f32.mrf.mxu0
      %v711 = vpop.f32.mrf.mxu0
      %v712 = vadd.f32 %v491, %v711
      %v713 = vpop.f32.mrf.mxu0
      %714 = vmatprep.mubr.bf16.mxu0 0
      %715 = vmatmul.mubr.bf16.gmra.mxu0 %v575
      %v716 = vpop.f32.mrf.mxu0
      %v717 = vadd.f32 %v496, %v716
      %v718 = vpop.f32.mrf.mxu0
      %v719 = vpop.f32.mrf.mxu0
      %v720 = vadd.f32 %v499, %v719
      %v721 = vpop.f32.mrf.mxu0
      %722 = vmatprep.mubr.bf16.mxu0 0
      %723 = vmatmul.mubr.bf16.gmra.mxu0 %v578
      %v724 = vpop.f32.mrf.mxu0
      %v725 = vadd.f32 %v504, %v724
      %v726 = vpop.f32.mrf.mxu0
      %v727 = vpop.f32.mrf.mxu0
      %v728 = vadd.f32 %v507, %v727
      %v729 = vpop.f32.mrf.mxu0
      %730 = vmatprep.mubr.bf16.mxu0 0
      %731 = vmatmul.mubr.bf16.gmra.mxu0 %v581
      %v732 = vpop.f32.mrf.mxu0
      %v733 = vadd.f32 %v512, %v732
      %v734 = vpop.f32.mrf.mxu0
      %v735 = vpop.f32.mrf.mxu0
      %v736 = vadd.f32 %v515, %v735
      %v737 = vpop.f32.mrf.mxu0
      %738 = vmatprep.mubr.bf16.mxu0 0
      %739 = vmatmul.mubr.bf16.gmra.mxu0 %v584
      %v740 = vpop.f32.mrf.mxu0
      %v741 = vadd.f32 %v520, %v740
      %v742 = vpop.f32.mrf.mxu0
      %v743 = vpop.f32.mrf.mxu0
      %v744 = vadd.f32 %v523, %v743
      %v745 = vpop.f32.mrf.mxu0
      %746 = vdwg.mxu0
      %v747 = vld [vmem:[%s192 + $0x2] sm:$0xff]
      %v748 = vld [vmem:[%s192 + $0xa] sm:$0xff]
      %v749 = vld [vmem:[%s192 + $0x1a] sm:$0xff]
      %v750 = vld [vmem:[%s192 + $0x22] sm:$0xff]
      %v751 = vld [vmem:[%s192 + $0x32] sm:$0xff]
      %v752 = vld [vmem:[%s192 + $0x3a] sm:$0xff]
      %v753 = vld [vmem:[%s192 + $0x4a] sm:$0xff]
      %v754 = vld [vmem:[%s192 + $0x52] sm:$0xff]
      %v755 = vld [vmem:[%s192 + $0x62] sm:$0xff]
      %v756 = vld [vmem:[%s192 + $0x6a] sm:$0xff]
      %v757 = vld [vmem:[%s192 + $0x7a] sm:$0xff]
      %v758 = vld [vmem:[%s192 + $0x82] sm:$0xff]
      %v759 = vld [vmem:[%s192 + $0x92] sm:$0xff]
      %v760 = vld [vmem:[%s192 + $0x9a] sm:$0xff]
      %v761 = vld [vmem:[%s192 + $0xaa] sm:$0xff]
      %v762 = vld [vmem:[%s192 + $0xb2] sm:$0xff]
      %v763 = vld [vmem:[%s192 + $0xc2] sm:$0xff]
      %v764 = vld [vmem:[%s192 + $0xca] sm:$0xff]
      %v765 = vld [vmem:[%s192 + $0xda] sm:$0xff]
      %v766 = vld [vmem:[%s192 + $0xe2] sm:$0xff]
      %v767 = vld [vmem:[%s192 + $0xf2] sm:$0xff]
      %v768 = vld [vmem:[%s192 + $0xfa] sm:$0xff]
      %v769 = vld [vmem:[%s192 + $0x10a] sm:$0xff]
      %v770 = vld [vmem:[%s192 + $0x112] sm:$0xff]
      %v771 = vld [vmem:[%s192 + $0x122] sm:$0xff]
      %v772 = vld [vmem:[%s192 + $0x12a] sm:$0xff]
      %v773 = vld [vmem:[%s192 + $0x13a] sm:$0xff]
      %v774 = vld [vmem:[%s192 + $0x142] sm:$0xff]
      %v775 = vld [vmem:[%s192 + $0x152] sm:$0xff]
      %v776 = vld [vmem:[%s192 + $0x15a] sm:$0xff]
      %v777 = vld [vmem:[%s192 + $0x16a] sm:$0xff]
      %v778 = vld [vmem:[%s192 + $0x172] sm:$0xff]
      %v779 = vpack.c.bf16 %v748, %v747
      %v780 = vpack.c.bf16 %v750, %v749
      %v781 = vpack.c.bf16 %v752, %v751
      %v782 = vpack.c.bf16 %v754, %v753
      %v783 = vpack.c.bf16 %v756, %v755
      %v784 = vpack.c.bf16 %v758, %v757
      %v785 = vpack.c.bf16 %v760, %v759
      %v786 = vpack.c.bf16 %v762, %v761
      %v787 = vpack.c.bf16 %v764, %v763
      %v788 = vpack.c.bf16 %v766, %v765
      %v789 = vpack.c.bf16 %v768, %v767
      %v790 = vpack.c.bf16 %v770, %v769
      %v791 = vpack.c.bf16 %v772, %v771
      %v792 = vpack.c.bf16 %v774, %v773
      %v793 = vpack.c.bf16 %v776, %v775
      %v794 = vpack.c.bf16 %v778, %v777
      %s795 = scalar_lea.vmem %s1, 32
      %v796 = vld [vmem:[%s795] sm:$0xf]
      %v797 = vld [vmem:[%s795 + $0x4] sm:$0xf]
      %v798 = vld [vmem:[%s795 + $0x8] sm:$0xf]
      %v799 = vld [vmem:[%s795 + $0xc] sm:$0xf]
      %v804 = vunpack.c.l.b16 %v796
      %v805 = vunpack.c.l.b16 %v797
      %v806 = vunpack.c.l.b16 %v798
      %v807 = vunpack.c.l.b16 %v799
      %v808 = vpack.c.b16 %v805, %v804
      %v809 = vpack.c.b16 %v807, %v806
      %v813 = vsel %vm316, %v779, 0
      %v816 = vsel %vm316, %v780, 0
      %v819 = vsel %vm316, %v781, 0
      %v822 = vsel %vm316, %v782, 0
      %v825 = vsel %vm316, %v783, 0
      %v828 = vsel %vm316, %v784, 0
      %v831 = vsel %vm316, %v785, 0
      %v834 = vsel %vm316, %v786, 0
      %v837 = vsel %vm316, %v787, 0
      %v840 = vsel %vm316, %v788, 0
      %v843 = vsel %vm316, %v789, 0
      %v846 = vsel %vm316, %v790, 0
      %v849 = vsel %vm316, %v791, 0
      %v852 = vsel %vm316, %v792, 0
      %v855 = vsel %vm316, %v793, 0
      %v858 = vsel %vm316, %v794, 0
      %860 = vmatprep.subr.bf16.mxu0 0
      %861 = vmatpush1.bf16.msra.mxu0 0
      %862 = vmatprep.subr.bf16.mxu0 0
      %863 = vmatpush1.bf16.msra.mxu0 0
      %864 = vmatprep.subr.bf16.mxu0 0
      %865 = vmatpush1.bf16.msra.mxu0 0
      %866 = vmatprep.subr.bf16.mxu0 0
      %867 = vmatpush1.bf16.msra.mxu0 0
      %868 = vmatprep.subr.bf16.mxu0 0
      %869 = vmatpush1.bf16.msra.mxu0 0
      %870 = vmatprep.subr.bf16.mxu0 0
      %871 = vmatpush1.bf16.msra.mxu0 0
      %872 = vmatprep.subr.bf16.mxu0 0
      %873 = vmatpush1.bf16.msra.mxu0 %v809
      %874 = vmatprep.subr.bf16.mxu0 0
      %875 = vmatpush1.bf16.msra.mxu0 %v808
      %876 = vmatprep.subr.bf16.mxu0 0
      %877 = vmatpush2.bf16.msra.mxu0 0
      %878 = vmatprep.subr.bf16.mxu0 0
      %879 = vmatpush2.bf16.msra.mxu0 0
      %880 = vmatprep.subr.bf16.mxu0 0
      %881 = vmatpush2.bf16.msra.mxu0 0
      %882 = vmatprep.subr.bf16.mxu0 0
      %883 = vmatpush2.bf16.msra.mxu0 0
      %884 = vmatprep.subr.bf16.mxu0 0
      %885 = vmatpush2.bf16.msra.mxu0 0
      %886 = vmatprep.subr.bf16.mxu0 0
      %887 = vmatpush2.bf16.msra.mxu0 0
      %888 = vmatprep.subr.bf16.mxu0 0
      %889 = vmatpush2.bf16.msra.mxu0 0
      %890 = vmatprep.subr.bf16.mxu0 0
      %891 = vmatpush2.bf16.msra.mxu0 0
      %892 = vmatprep.mubr.bf16.mxu0 0
      %893 = vmatmul.mubr.bf16.gmra.mxu0 %v813
      %v894 = vpop.f32.mrf.mxu0
      %v895 = vadd.f32 0.0, %v894
      %v896 = vpop.f32.mrf.mxu0
      %v897 = vpop.f32.mrf.mxu0
      %v898 = vadd.f32 0.0, %v897
      %v899 = vpop.f32.mrf.mxu0
      %900 = vmatprep.mubr.bf16.mxu0 0
      %901 = vmatmul.mubr.bf16.gmra.mxu0 %v816
      %v902 = vpop.f32.mrf.mxu0
      %v903 = vadd.f32 0.0, %v902
      %v904 = vpop.f32.mrf.mxu0
      %v905 = vpop.f32.mrf.mxu0
      %v906 = vadd.f32 0.0, %v905
      %v907 = vpop.f32.mrf.mxu0
      %908 = vmatprep.mubr.bf16.mxu0 0
      %909 = vmatmul.mubr.bf16.gmra.mxu0 %v819
      %v910 = vpop.f32.mrf.mxu0
      %v911 = vadd.f32 0.0, %v910
      %v912 = vpop.f32.mrf.mxu0
      %v913 = vpop.f32.mrf.mxu0
      %v914 = vadd.f32 0.0, %v913
      %v915 = vpop.f32.mrf.mxu0
      %916 = vmatprep.mubr.bf16.mxu0 0
      %917 = vmatmul.mubr.bf16.gmra.mxu0 %v822
      %v918 = vpop.f32.mrf.mxu0
      %v919 = vadd.f32 0.0, %v918
      %v920 = vpop.f32.mrf.mxu0
      %v921 = vpop.f32.mrf.mxu0
      %v922 = vadd.f32 0.0, %v921
      %v923 = vpop.f32.mrf.mxu0
      %924 = vmatprep.mubr.bf16.mxu0 0
      %925 = vmatmul.mubr.bf16.gmra.mxu0 %v825
      %v926 = vpop.f32.mrf.mxu0
      %v927 = vadd.f32 0.0, %v926
      %v928 = vpop.f32.mrf.mxu0
      %v929 = vpop.f32.mrf.mxu0
      %v930 = vadd.f32 0.0, %v929
      %v931 = vpop.f32.mrf.mxu0
      %932 = vmatprep.mubr.bf16.mxu0 0
      %933 = vmatmul.mubr.bf16.gmra.mxu0 %v828
      %v934 = vpop.f32.mrf.mxu0
      %v935 = vadd.f32 0.0, %v934
      %v936 = vpop.f32.mrf.mxu0
      %v937 = vpop.f32.mrf.mxu0
      %v938 = vadd.f32 0.0, %v937
      %v939 = vpop.f32.mrf.mxu0
      %940 = vmatprep.mubr.bf16.mxu0 0
      %941 = vmatmul.mubr.bf16.gmra.mxu0 %v831
      %v942 = vpop.f32.mrf.mxu0
      %v943 = vadd.f32 0.0, %v942
      %v944 = vpop.f32.mrf.mxu0
      %v945 = vpop.f32.mrf.mxu0
      %v946 = vadd.f32 0.0, %v945
      %v947 = vpop.f32.mrf.mxu0
      %948 = vmatprep.mubr.bf16.mxu0 0
      %949 = vmatmul.mubr.bf16.gmra.mxu0 %v834
      %v950 = vpop.f32.mrf.mxu0
      %v951 = vadd.f32 0.0, %v950
      %v952 = vpop.f32.mrf.mxu0
      %v953 = vpop.f32.mrf.mxu0
      %v954 = vadd.f32 0.0, %v953
      %v955 = vpop.f32.mrf.mxu0
      %956 = vmatprep.mubr.bf16.mxu0 0
      %957 = vmatmul.mubr.bf16.gmra.mxu0 %v837
      %v958 = vpop.f32.mrf.mxu0
      %v959 = vadd.f32 0.0, %v958
      %v960 = vpop.f32.mrf.mxu0
      %v961 = vpop.f32.mrf.mxu0
      %v962 = vadd.f32 0.0, %v961
      %v963 = vpop.f32.mrf.mxu0
      %964 = vmatprep.mubr.bf16.mxu0 0
      %965 = vmatmul.mubr.bf16.gmra.mxu0 %v840
      %v966 = vpop.f32.mrf.mxu0
      %v967 = vadd.f32 0.0, %v966
      %v968 = vpop.f32.mrf.mxu0
      %v969 = vpop.f32.mrf.mxu0
      %v970 = vadd.f32 0.0, %v969
      %v971 = vpop.f32.mrf.mxu0
      %972 = vmatprep.mubr.bf16.mxu0 0
      %973 = vmatmul.mubr.bf16.gmra.mxu0 %v843
      %v974 = vpop.f32.mrf.mxu0
      %v975 = vadd.f32 0.0, %v974
      %v976 = vpop.f32.mrf.mxu0
      %v977 = vpop.f32.mrf.mxu0
      %v978 = vadd.f32 0.0, %v977
      %v979 = vpop.f32.mrf.mxu0
      %980 = vmatprep.mubr.bf16.mxu0 0
      %981 = vmatmul.mubr.bf16.gmra.mxu0 %v846
      %v982 = vpop.f32.mrf.mxu0
      %v983 = vadd.f32 0.0, %v982
      %v984 = vpop.f32.mrf.mxu0
      %v985 = vpop.f32.mrf.mxu0
      %v986 = vadd.f32 0.0, %v985
      %v987 = vpop.f32.mrf.mxu0
      %988 = vmatprep.mubr.bf16.mxu0 0
      %989 = vmatmul.mubr.bf16.gmra.mxu0 %v849
      %v990 = vpop.f32.mrf.mxu0
      %v991 = vadd.f32 0.0, %v990
      %v992 = vpop.f32.mrf.mxu0
      %v993 = vpop.f32.mrf.mxu0
      %v994 = vadd.f32 0.0, %v993
      %v995 = vpop.f32.mrf.mxu0
      %996 = vmatprep.mubr.bf16.mxu0 0
      %997 = vmatmul.mubr.bf16.gmra.mxu0 %v852
      %v998 = vpop.f32.mrf.mxu0
      %v999 = vadd.f32 0.0, %v998
      %v1000 = vpop.f32.mrf.mxu0
      %v1001 = vpop.f32.mrf.mxu0
      %v1002 = vadd.f32 0.0, %v1001
      %v1003 = vpop.f32.mrf.mxu0
      %1004 = vmatprep.mubr.bf16.mxu0 0
      %1005 = vmatmul.mubr.bf16.gmra.mxu0 %v855
      %v1006 = vpop.f32.mrf.mxu0
      %v1007 = vadd.f32 0.0, %v1006
      %v1008 = vpop.f32.mrf.mxu0
      %v1009 = vpop.f32.mrf.mxu0
      %v1010 = vadd.f32 0.0, %v1009
      %v1011 = vpop.f32.mrf.mxu0
      %1012 = vmatprep.mubr.bf16.mxu0 0
      %1013 = vmatmul.mubr.bf16.gmra.mxu0 %v858
      %v1014 = vpop.f32.mrf.mxu0
      %v1015 = vadd.f32 0.0, %v1014
      %v1016 = vpop.f32.mrf.mxu0
      %v1017 = vpop.f32.mrf.mxu0
      %v1018 = vadd.f32 0.0, %v1017
      %v1019 = vpop.f32.mrf.mxu0
      %1020 = vdwg.mxu0
      %v1021 = vadd.f32 %v621, %v895
      %v1022 = vadd.f32 %v624, %v898
      %v1023 = vadd.f32 %v629, %v903
      %v1024 = vadd.f32 %v632, %v906
      %v1025 = vadd.f32 %v637, %v911
      %v1026 = vadd.f32 %v640, %v914
      %v1027 = vadd.f32 %v645, %v919
      %v1028 = vadd.f32 %v648, %v922
      %v1029 = vadd.f32 %v653, %v927
      %v1030 = vadd.f32 %v656, %v930
      %v1031 = vadd.f32 %v661, %v935
      %v1032 = vadd.f32 %v664, %v938
      %v1033 = vadd.f32 %v669, %v943
      %v1034 = vadd.f32 %v672, %v946
      %v1035 = vadd.f32 %v677, %v951
      %v1036 = vadd.f32 %v680, %v954
      %v1037 = vadd.f32 %v685, %v959
      %v1038 = vadd.f32 %v688, %v962
      %v1039 = vadd.f32 %v693, %v967
      %v1040 = vadd.f32 %v696, %v970
      %v1041 = vadd.f32 %v701, %v975
      %v1042 = vadd.f32 %v704, %v978
      %v1043 = vadd.f32 %v709, %v983
      %v1044 = vadd.f32 %v712, %v986
      %v1045 = vadd.f32 %v717, %v991
      %v1046 = vadd.f32 %v720, %v994
      %v1047 = vadd.f32 %v725, %v999
      %v1048 = vadd.f32 %v728, %v1002
      %v1049 = vadd.f32 %v733, %v1007
      %v1050 = vadd.f32 %v736, %v1010
      %v1051 = vadd.f32 %v741, %v1015
      %v1052 = vadd.f32 %v744, %v1018
      %s1053 = scalar_lea.vmem %s192, 24
      %v1054 = vld [vmem:[%s1053] sm:$0xff]
      %v1055 = vld [vmem:[%s1053 + $0x8] sm:$0xff]
      %v1056 = vld [vmem:[%s1053 + $0x18] sm:$0xff]
      %v1057 = vld [vmem:[%s1053 + $0x20] sm:$0xff]
      %v1058 = vld [vmem:[%s1053 + $0x30] sm:$0xff]
      %v1059 = vld [vmem:[%s1053 + $0x38] sm:$0xff]
      %v1060 = vld [vmem:[%s1053 + $0x48] sm:$0xff]
      %v1061 = vld [vmem:[%s1053 + $0x50] sm:$0xff]
      %v1062 = vld [vmem:[%s1053 + $0x60] sm:$0xff]
      %v1063 = vld [vmem:[%s1053 + $0x68] sm:$0xff]
      %v1064 = vld [vmem:[%s1053 + $0x78] sm:$0xff]
      %v1065 = vld [vmem:[%s1053 + $0x80] sm:$0xff]
      %v1066 = vld [vmem:[%s1053 + $0x90] sm:$0xff]
      %v1067 = vld [vmem:[%s1053 + $0x98] sm:$0xff]
      %v1068 = vld [vmem:[%s1053 + $0xa8] sm:$0xff]
      %v1069 = vld [vmem:[%s1053 + $0xb0] sm:$0xff]
      %v1070 = vld [vmem:[%s1053 + $0xc0] sm:$0xff]
      %v1071 = vld [vmem:[%s1053 + $0xc8] sm:$0xff]
      %v1072 = vld [vmem:[%s1053 + $0xd8] sm:$0xff]
      %v1073 = vld [vmem:[%s1053 + $0xe0] sm:$0xff]
      %v1074 = vld [vmem:[%s1053 + $0xf0] sm:$0xff]
      %v1075 = vld [vmem:[%s1053 + $0xf8] sm:$0xff]
      %v1076 = vld [vmem:[%s1053 + $0x108] sm:$0xff]
      %v1077 = vld [vmem:[%s1053 + $0x110] sm:$0xff]
      %v1078 = vld [vmem:[%s1053 + $0x120] sm:$0xff]
      %v1079 = vld [vmem:[%s1053 + $0x128] sm:$0xff]
      %v1080 = vld [vmem:[%s1053 + $0x138] sm:$0xff]
      %v1081 = vld [vmem:[%s1053 + $0x140] sm:$0xff]
      %v1082 = vld [vmem:[%s1053 + $0x150] sm:$0xff]
      %v1083 = vld [vmem:[%s1053 + $0x158] sm:$0xff]
      %v1084 = vld [vmem:[%s1053 + $0x168] sm:$0xff]
      %v1085 = vld [vmem:[%s1053 + $0x170] sm:$0xff]
      %v1086 = vpack.c.bf16 %v1055, %v1054
      %v1087 = vpack.c.bf16 %v1057, %v1056
      %v1088 = vpack.c.bf16 %v1059, %v1058
      %v1089 = vpack.c.bf16 %v1061, %v1060
      %v1090 = vpack.c.bf16 %v1063, %v1062
      %v1091 = vpack.c.bf16 %v1065, %v1064
      %v1092 = vpack.c.bf16 %v1067, %v1066
      %v1093 = vpack.c.bf16 %v1069, %v1068
      %v1094 = vpack.c.bf16 %v1071, %v1070
      %v1095 = vpack.c.bf16 %v1073, %v1072
      %v1096 = vpack.c.bf16 %v1075, %v1074
      %v1097 = vpack.c.bf16 %v1077, %v1076
      %v1098 = vpack.c.bf16 %v1079, %v1078
      %v1099 = vpack.c.bf16 %v1081, %v1080
      %v1100 = vpack.c.bf16 %v1083, %v1082
      %v1101 = vpack.c.bf16 %v1085, %v1084
      %s1102 = scalar_lea.vmem %s1, 48
      %v1103 = vld [vmem:[%s1102] sm:$0xf]
      %v1104 = vld [vmem:[%s1102 + $0x4] sm:$0xf]
      %v1105 = vld [vmem:[%s1102 + $0x8] sm:$0xf]
      %v1106 = vld [vmem:[%s1102 + $0xc] sm:$0xf]
      %v1111 = vunpack.c.l.b16 %v1103
      %v1112 = vunpack.c.l.b16 %v1104
      %v1113 = vunpack.c.l.b16 %v1105
      %v1114 = vunpack.c.l.b16 %v1106
      %v1115 = vpack.c.b16 %v1112, %v1111
      %v1116 = vpack.c.b16 %v1114, %v1113
      %v1120 = vsel %vm316, %v1086, 0
      %v1123 = vsel %vm316, %v1087, 0
      %v1126 = vsel %vm316, %v1088, 0
      %v1129 = vsel %vm316, %v1089, 0
      %v1132 = vsel %vm316, %v1090, 0
      %v1135 = vsel %vm316, %v1091, 0
      %v1138 = vsel %vm316, %v1092, 0
      %v1141 = vsel %vm316, %v1093, 0
      %v1144 = vsel %vm316, %v1094, 0
      %v1147 = vsel %vm316, %v1095, 0
      %v1150 = vsel %vm316, %v1096, 0
      %v1153 = vsel %vm316, %v1097, 0
      %v1156 = vsel %vm316, %v1098, 0
      %v1159 = vsel %vm316, %v1099, 0
      %v1162 = vsel %vm316, %v1100, 0
      %v1165 = vsel %vm316, %v1101, 0
      %1167 = vmatprep.subr.bf16.mxu0 0
      %1168 = vmatpush1.bf16.msra.mxu0 0
      %1169 = vmatprep.subr.bf16.mxu0 0
      %1170 = vmatpush1.bf16.msra.mxu0 0
      %1171 = vmatprep.subr.bf16.mxu0 0
      %1172 = vmatpush1.bf16.msra.mxu0 0
      %1173 = vmatprep.subr.bf16.mxu0 0
      %1174 = vmatpush1.bf16.msra.mxu0 0
      %1175 = vmatprep.subr.bf16.mxu0 0
      %1176 = vmatpush1.bf16.msra.mxu0 0
      %1177 = vmatprep.subr.bf16.mxu0 0
      %1178 = vmatpush1.bf16.msra.mxu0 0
      %1179 = vmatprep.subr.bf16.mxu0 0
      %1180 = vmatpush1.bf16.msra.mxu0 %v1116
      %1181 = vmatprep.subr.bf16.mxu0 0
      %1182 = vmatpush1.bf16.msra.mxu0 %v1115
      %1183 = vmatprep.subr.bf16.mxu0 0
      %1184 = vmatpush2.bf16.msra.mxu0 0
      %1185 = vmatprep.subr.bf16.mxu0 0
      %1186 = vmatpush2.bf16.msra.mxu0 0
      %1187 = vmatprep.subr.bf16.mxu0 0
      %1188 = vmatpush2.bf16.msra.mxu0 0
      %1189 = vmatprep.subr.bf16.mxu0 0
      %1190 = vmatpush2.bf16.msra.mxu0 0
      %1191 = vmatprep.subr.bf16.mxu0 0
      %1192 = vmatpush2.bf16.msra.mxu0 0
      %1193 = vmatprep.subr.bf16.mxu0 0
      %1194 = vmatpush2.bf16.msra.mxu0 0
      %1195 = vmatprep.subr.bf16.mxu0 0
      %1196 = vmatpush2.bf16.msra.mxu0 0
      %1197 = vmatprep.subr.bf16.mxu0 0
      %1198 = vmatpush2.bf16.msra.mxu0 0
      %1199 = vmatprep.mubr.bf16.mxu0 0
      %1200 = vmatmul.mubr.bf16.gmra.mxu0 %v1120
      %v1201 = vpop.f32.mrf.mxu0
      %v1202 = vadd.f32 0.0, %v1201
      %v1203 = vpop.f32.mrf.mxu0
      %v1204 = vpop.f32.mrf.mxu0
      %v1205 = vadd.f32 0.0, %v1204
      %v1206 = vpop.f32.mrf.mxu0
      %1207 = vmatprep.mubr.bf16.mxu0 0
      %1208 = vmatmul.mubr.bf16.gmra.mxu0 %v1123
      %v1209 = vpop.f32.mrf.mxu0
      %v1210 = vadd.f32 0.0, %v1209
      %v1211 = vpop.f32.mrf.mxu0
      %v1212 = vpop.f32.mrf.mxu0
      %v1213 = vadd.f32 0.0, %v1212
      %v1214 = vpop.f32.mrf.mxu0
      %1215 = vmatprep.mubr.bf16.mxu0 0
      %1216 = vmatmul.mubr.bf16.gmra.mxu0 %v1126
      %v1217 = vpop.f32.mrf.mxu0
      %v1218 = vadd.f32 0.0, %v1217
      %v1219 = vpop.f32.mrf.mxu0
      %v1220 = vpop.f32.mrf.mxu0
      %v1221 = vadd.f32 0.0, %v1220
      %v1222 = vpop.f32.mrf.mxu0
      %1223 = vmatprep.mubr.bf16.mxu0 0
      %1224 = vmatmul.mubr.bf16.gmra.mxu0 %v1129
      %v1225 = vpop.f32.mrf.mxu0
      %v1226 = vadd.f32 0.0, %v1225
      %v1227 = vpop.f32.mrf.mxu0
      %v1228 = vpop.f32.mrf.mxu0
      %v1229 = vadd.f32 0.0, %v1228
      %v1230 = vpop.f32.mrf.mxu0
      %1231 = vmatprep.mubr.bf16.mxu0 0
      %1232 = vmatmul.mubr.bf16.gmra.mxu0 %v1132
      %v1233 = vpop.f32.mrf.mxu0
      %v1234 = vadd.f32 0.0, %v1233
      %v1235 = vpop.f32.mrf.mxu0
      %v1236 = vpop.f32.mrf.mxu0
      %v1237 = vadd.f32 0.0, %v1236
      %v1238 = vpop.f32.mrf.mxu0
      %1239 = vmatprep.mubr.bf16.mxu0 0
      %1240 = vmatmul.mubr.bf16.gmra.mxu0 %v1135
      %v1241 = vpop.f32.mrf.mxu0
      %v1242 = vadd.f32 0.0, %v1241
      %v1243 = vpop.f32.mrf.mxu0
      %v1244 = vpop.f32.mrf.mxu0
      %v1245 = vadd.f32 0.0, %v1244
      %v1246 = vpop.f32.mrf.mxu0
      %1247 = vmatprep.mubr.bf16.mxu0 0
      %1248 = vmatmul.mubr.bf16.gmra.mxu0 %v1138
      %v1249 = vpop.f32.mrf.mxu0
      %v1250 = vadd.f32 0.0, %v1249
      %v1251 = vpop.f32.mrf.mxu0
      %v1252 = vpop.f32.mrf.mxu0
      %v1253 = vadd.f32 0.0, %v1252
      %v1254 = vpop.f32.mrf.mxu0
      %1255 = vmatprep.mubr.bf16.mxu0 0
      %1256 = vmatmul.mubr.bf16.gmra.mxu0 %v1141
      %v1257 = vpop.f32.mrf.mxu0
      %v1258 = vadd.f32 0.0, %v1257
      %v1259 = vpop.f32.mrf.mxu0
      %v1260 = vpop.f32.mrf.mxu0
      %v1261 = vadd.f32 0.0, %v1260
      %v1262 = vpop.f32.mrf.mxu0
      %1263 = vmatprep.mubr.bf16.mxu0 0
      %1264 = vmatmul.mubr.bf16.gmra.mxu0 %v1144
      %v1265 = vpop.f32.mrf.mxu0
      %v1266 = vadd.f32 0.0, %v1265
      %v1267 = vpop.f32.mrf.mxu0
      %v1268 = vpop.f32.mrf.mxu0
      %v1269 = vadd.f32 0.0, %v1268
      %v1270 = vpop.f32.mrf.mxu0
      %1271 = vmatprep.mubr.bf16.mxu0 0
      %1272 = vmatmul.mubr.bf16.gmra.mxu0 %v1147
      %v1273 = vpop.f32.mrf.mxu0
      %v1274 = vadd.f32 0.0, %v1273
      %v1275 = vpop.f32.mrf.mxu0
      %v1276 = vpop.f32.mrf.mxu0
      %v1277 = vadd.f32 0.0, %v1276
      %v1278 = vpop.f32.mrf.mxu0
      %1279 = vmatprep.mubr.bf16.mxu0 0
      %1280 = vmatmul.mubr.bf16.gmra.mxu0 %v1150
      %v1281 = vpop.f32.mrf.mxu0
      %v1282 = vadd.f32 0.0, %v1281
      %v1283 = vpop.f32.mrf.mxu0
      %v1284 = vpop.f32.mrf.mxu0
      %v1285 = vadd.f32 0.0, %v1284
      %v1286 = vpop.f32.mrf.mxu0
      %1287 = vmatprep.mubr.bf16.mxu0 0
      %1288 = vmatmul.mubr.bf16.gmra.mxu0 %v1153
      %v1289 = vpop.f32.mrf.mxu0
      %v1290 = vadd.f32 0.0, %v1289
      %v1291 = vpop.f32.mrf.mxu0
      %v1292 = vpop.f32.mrf.mxu0
      %v1293 = vadd.f32 0.0, %v1292
      %v1294 = vpop.f32.mrf.mxu0
      %1295 = vmatprep.mubr.bf16.mxu0 0
      %1296 = vmatmul.mubr.bf16.gmra.mxu0 %v1156
      %v1297 = vpop.f32.mrf.mxu0
      %v1298 = vadd.f32 0.0, %v1297
      %v1299 = vpop.f32.mrf.mxu0
      %v1300 = vpop.f32.mrf.mxu0
      %v1301 = vadd.f32 0.0, %v1300
      %v1302 = vpop.f32.mrf.mxu0
      %1303 = vmatprep.mubr.bf16.mxu0 0
      %1304 = vmatmul.mubr.bf16.gmra.mxu0 %v1159
      %v1305 = vpop.f32.mrf.mxu0
      %v1306 = vadd.f32 0.0, %v1305
      %v1307 = vpop.f32.mrf.mxu0
      %v1308 = vpop.f32.mrf.mxu0
      %v1309 = vadd.f32 0.0, %v1308
      %v1310 = vpop.f32.mrf.mxu0
      %1311 = vmatprep.mubr.bf16.mxu0 0
      %1312 = vmatmul.mubr.bf16.gmra.mxu0 %v1162
      %v1313 = vpop.f32.mrf.mxu0
      %v1314 = vadd.f32 0.0, %v1313
      %v1315 = vpop.f32.mrf.mxu0
      %v1316 = vpop.f32.mrf.mxu0
      %v1317 = vadd.f32 0.0, %v1316
      %v1318 = vpop.f32.mrf.mxu0
      %1319 = vmatprep.mubr.bf16.mxu0 0
      %1320 = vmatmul.mubr.bf16.gmra.mxu0 %v1165
      %v1321 = vpop.f32.mrf.mxu0
      %v1322 = vadd.f32 0.0, %v1321
      %v1323 = vpop.f32.mrf.mxu0
      %v1324 = vpop.f32.mrf.mxu0
      %v1325 = vadd.f32 0.0, %v1324
      %v1326 = vpop.f32.mrf.mxu0
      %1327 = vdwg.mxu0
      %v1328 = vadd.f32 %v1021, %v1202
      %v1329 = vadd.f32 %v1022, %v1205
      %v1330 = vadd.f32 %v1023, %v1210
      %v1331 = vadd.f32 %v1024, %v1213
      %v1332 = vadd.f32 %v1025, %v1218
      %v1333 = vadd.f32 %v1026, %v1221
      %v1334 = vadd.f32 %v1027, %v1226
      %v1335 = vadd.f32 %v1028, %v1229
      %v1336 = vadd.f32 %v1029, %v1234
      %v1337 = vadd.f32 %v1030, %v1237
      %v1338 = vadd.f32 %v1031, %v1242
      %v1339 = vadd.f32 %v1032, %v1245
      %v1340 = vadd.f32 %v1033, %v1250
      %v1341 = vadd.f32 %v1034, %v1253
      %v1342 = vadd.f32 %v1035, %v1258
      %v1343 = vadd.f32 %v1036, %v1261
      %v1344 = vadd.f32 %v1037, %v1266
      %v1345 = vadd.f32 %v1038, %v1269
      %v1346 = vadd.f32 %v1039, %v1274
      %v1347 = vadd.f32 %v1040, %v1277
      %v1348 = vadd.f32 %v1041, %v1282
      %v1349 = vadd.f32 %v1042, %v1285
      %v1350 = vadd.f32 %v1043, %v1290
      %v1351 = vadd.f32 %v1044, %v1293
      %v1352 = vadd.f32 %v1045, %v1298
      %v1353 = vadd.f32 %v1046, %v1301
      %v1354 = vadd.f32 %v1047, %v1306
      %v1355 = vadd.f32 %v1048, %v1309
      %v1356 = vadd.f32 %v1049, %v1314
      %v1357 = vadd.f32 %v1050, %v1317
      %v1358 = vadd.f32 %v1051, %v1322
      %v1359 = vadd.f32 %v1052, %v1325
      %v1360 = vld [vmem:[%s1053 + $0x1] sm:$0xff]
      %v1361 = vld [vmem:[%s1053 + $0x9] sm:$0xff]
      %v1362 = vld [vmem:[%s1053 + $0x19] sm:$0xff]
      %v1363 = vld [vmem:[%s1053 + $0x21] sm:$0xff]
      %v1364 = vld [vmem:[%s1053 + $0x31] sm:$0xff]
      %v1365 = vld [vmem:[%s1053 + $0x39] sm:$0xff]
      %v1366 = vld [vmem:[%s1053 + $0x49] sm:$0xff]
      %v1367 = vld [vmem:[%s1053 + $0x51] sm:$0xff]
      %v1368 = vld [vmem:[%s1053 + $0x61] sm:$0xff]
      %v1369 = vld [vmem:[%s1053 + $0x69] sm:$0xff]
      %v1370 = vld [vmem:[%s1053 + $0x79] sm:$0xff]
      %v1371 = vld [vmem:[%s1053 + $0x81] sm:$0xff]
      %v1372 = vld [vmem:[%s1053 + $0x91] sm:$0xff]
      %v1373 = vld [vmem:[%s1053 + $0x99] sm:$0xff]
      %v1374 = vld [vmem:[%s1053 + $0xa9] sm:$0xff]
      %v1375 = vld [vmem:[%s1053 + $0xb1] sm:$0xff]
      %v1376 = vld [vmem:[%s1053 + $0xc1] sm:$0xff]
      %v1377 = vld [vmem:[%s1053 + $0xc9] sm:$0xff]
      %v1378 = vld [vmem:[%s1053 + $0xd9] sm:$0xff]
      %v1379 = vld [vmem:[%s1053 + $0xe1] sm:$0xff]
      %v1380 = vld [vmem:[%s1053 + $0xf1] sm:$0xff]
      %v1381 = vld [vmem:[%s1053 + $0xf9] sm:$0xff]
      %v1382 = vld [vmem:[%s1053 + $0x109] sm:$0xff]
      %v1383 = vld [vmem:[%s1053 + $0x111] sm:$0xff]
      %v1384 = vld [vmem:[%s1053 + $0x121] sm:$0xff]
      %v1385 = vld [vmem:[%s1053 + $0x129] sm:$0xff]
      %v1386 = vld [vmem:[%s1053 + $0x139] sm:$0xff]
      %v1387 = vld [vmem:[%s1053 + $0x141] sm:$0xff]
      %v1388 = vld [vmem:[%s1053 + $0x151] sm:$0xff]
      %v1389 = vld [vmem:[%s1053 + $0x159] sm:$0xff]
      %v1390 = vld [vmem:[%s1053 + $0x169] sm:$0xff]
      %v1391 = vld [vmem:[%s1053 + $0x171] sm:$0xff]
      %v1392 = vpack.c.bf16 %v1361, %v1360
      %v1393 = vpack.c.bf16 %v1363, %v1362
      %v1394 = vpack.c.bf16 %v1365, %v1364
      %v1395 = vpack.c.bf16 %v1367, %v1366
      %v1396 = vpack.c.bf16 %v1369, %v1368
      %v1397 = vpack.c.bf16 %v1371, %v1370
      %v1398 = vpack.c.bf16 %v1373, %v1372
      %v1399 = vpack.c.bf16 %v1375, %v1374
      %v1400 = vpack.c.bf16 %v1377, %v1376
      %v1401 = vpack.c.bf16 %v1379, %v1378
      %v1402 = vpack.c.bf16 %v1381, %v1380
      %v1403 = vpack.c.bf16 %v1383, %v1382
      %v1404 = vpack.c.bf16 %v1385, %v1384
      %v1405 = vpack.c.bf16 %v1387, %v1386
      %v1406 = vpack.c.bf16 %v1389, %v1388
      %v1407 = vpack.c.bf16 %v1391, %v1390
      %s1408 = scalar_lea.vmem %s1, 64
      %v1409 = vld [vmem:[%s1408] sm:$0xf]
      %v1410 = vld [vmem:[%s1408 + $0x4] sm:$0xf]
      %v1411 = vld [vmem:[%s1408 + $0x8] sm:$0xf]
      %v1412 = vld [vmem:[%s1408 + $0xc] sm:$0xf]
      %v1417 = vunpack.c.l.b16 %v1409
      %v1418 = vunpack.c.l.b16 %v1410
      %v1419 = vunpack.c.l.b16 %v1411
      %v1420 = vunpack.c.l.b16 %v1412
      %v1421 = vpack.c.b16 %v1418, %v1417
      %v1422 = vpack.c.b16 %v1420, %v1419
      %v1426 = vsel %vm316, %v1392, 0
      %v1429 = vsel %vm316, %v1393, 0
      %v1432 = vsel %vm316, %v1394, 0
      %v1435 = vsel %vm316, %v1395, 0
      %v1438 = vsel %vm316, %v1396, 0
      %v1441 = vsel %vm316, %v1397, 0
      %v1444 = vsel %vm316, %v1398, 0
      %v1447 = vsel %vm316, %v1399, 0
      %v1450 = vsel %vm316, %v1400, 0
      %v1453 = vsel %vm316, %v1401, 0
      %v1456 = vsel %vm316, %v1402, 0
      %v1459 = vsel %vm316, %v1403, 0
      %v1462 = vsel %vm316, %v1404, 0
      %v1465 = vsel %vm316, %v1405, 0
      %v1468 = vsel %vm316, %v1406, 0
      %v1471 = vsel %vm316, %v1407, 0
      %1473 = vmatprep.subr.bf16.mxu0 0
      %1474 = vmatpush1.bf16.msra.mxu0 0
      %1475 = vmatprep.subr.bf16.mxu0 0
      %1476 = vmatpush1.bf16.msra.mxu0 0
      %1477 = vmatprep.subr.bf16.mxu0 0
      %1478 = vmatpush1.bf16.msra.mxu0 0
      %1479 = vmatprep.subr.bf16.mxu0 0
      %1480 = vmatpush1.bf16.msra.mxu0 0
      %1481 = vmatprep.subr.bf16.mxu0 0
      %1482 = vmatpush1.bf16.msra.mxu0 0
      %1483 = vmatprep.subr.bf16.mxu0 0
      %1484 = vmatpush1.bf16.msra.mxu0 0
      %1485 = vmatprep.subr.bf16.mxu0 0
      %1486 = vmatpush1.bf16.msra.mxu0 %v1422
      %1487 = vmatprep.subr.bf16.mxu0 0
      %1488 = vmatpush1.bf16.msra.mxu0 %v1421
      %1489 = vmatprep.subr.bf16.mxu0 0
      %1490 = vmatpush2.bf16.msra.mxu0 0
      %1491 = vmatprep.subr.bf16.mxu0 0
      %1492 = vmatpush2.bf16.msra.mxu0 0
      %1493 = vmatprep.subr.bf16.mxu0 0
      %1494 = vmatpush2.bf16.msra.mxu0 0
      %1495 = vmatprep.subr.bf16.mxu0 0
      %1496 = vmatpush2.bf16.msra.mxu0 0
      %1497 = vmatprep.subr.bf16.mxu0 0
      %1498 = vmatpush2.bf16.msra.mxu0 0
      %1499 = vmatprep.subr.bf16.mxu0 0
      %1500 = vmatpush2.bf16.msra.mxu0 0
      %1501 = vmatprep.subr.bf16.mxu0 0
      %1502 = vmatpush2.bf16.msra.mxu0 0
      %1503 = vmatprep.subr.bf16.mxu0 0
      %1504 = vmatpush2.bf16.msra.mxu0 0
      %1505 = vmatprep.mubr.bf16.mxu0 0
      %1506 = vmatmul.mubr.bf16.gmra.mxu0 %v1426
      %v1507 = vpop.f32.mrf.mxu0
      %v1508 = vadd.f32 0.0, %v1507
      %v1509 = vpop.f32.mrf.mxu0
      %v1510 = vpop.f32.mrf.mxu0
      %v1511 = vadd.f32 0.0, %v1510
      %v1512 = vpop.f32.mrf.mxu0
      %1513 = vmatprep.mubr.bf16.mxu0 0
      %1514 = vmatmul.mubr.bf16.gmra.mxu0 %v1429
      %v1515 = vpop.f32.mrf.mxu0
      %v1516 = vadd.f32 0.0, %v1515
      %v1517 = vpop.f32.mrf.mxu0
      %v1518 = vpop.f32.mrf.mxu0
      %v1519 = vadd.f32 0.0, %v1518
      %v1520 = vpop.f32.mrf.mxu0
      %1521 = vmatprep.mubr.bf16.mxu0 0
      %1522 = vmatmul.mubr.bf16.gmra.mxu0 %v1432
      %v1523 = vpop.f32.mrf.mxu0
      %v1524 = vadd.f32 0.0, %v1523
      %v1525 = vpop.f32.mrf.mxu0
      %v1526 = vpop.f32.mrf.mxu0
      %v1527 = vadd.f32 0.0, %v1526
      %v1528 = vpop.f32.mrf.mxu0
      %1529 = vmatprep.mubr.bf16.mxu0 0
      %1530 = vmatmul.mubr.bf16.gmra.mxu0 %v1435
      %v1531 = vpop.f32.mrf.mxu0
      %v1532 = vadd.f32 0.0, %v1531
      %v1533 = vpop.f32.mrf.mxu0
      %v1534 = vpop.f32.mrf.mxu0
      %v1535 = vadd.f32 0.0, %v1534
      %v1536 = vpop.f32.mrf.mxu0
      %1537 = vmatprep.mubr.bf16.mxu0 0
      %1538 = vmatmul.mubr.bf16.gmra.mxu0 %v1438
      %v1539 = vpop.f32.mrf.mxu0
      %v1540 = vadd.f32 0.0, %v1539
      %v1541 = vpop.f32.mrf.mxu0
      %v1542 = vpop.f32.mrf.mxu0
      %v1543 = vadd.f32 0.0, %v1542
      %v1544 = vpop.f32.mrf.mxu0
      %1545 = vmatprep.mubr.bf16.mxu0 0
      %1546 = vmatmul.mubr.bf16.gmra.mxu0 %v1441
      %v1547 = vpop.f32.mrf.mxu0
      %v1548 = vadd.f32 0.0, %v1547
      %v1549 = vpop.f32.mrf.mxu0
      %v1550 = vpop.f32.mrf.mxu0
      %v1551 = vadd.f32 0.0, %v1550
      %v1552 = vpop.f32.mrf.mxu0
      %1553 = vmatprep.mubr.bf16.mxu0 0
      %1554 = vmatmul.mubr.bf16.gmra.mxu0 %v1444
      %v1555 = vpop.f32.mrf.mxu0
      %v1556 = vadd.f32 0.0, %v1555
      %v1557 = vpop.f32.mrf.mxu0
      %v1558 = vpop.f32.mrf.mxu0
      %v1559 = vadd.f32 0.0, %v1558
      %v1560 = vpop.f32.mrf.mxu0
      %1561 = vmatprep.mubr.bf16.mxu0 0
      %1562 = vmatmul.mubr.bf16.gmra.mxu0 %v1447
      %v1563 = vpop.f32.mrf.mxu0
      %v1564 = vadd.f32 0.0, %v1563
      %v1565 = vpop.f32.mrf.mxu0
      %v1566 = vpop.f32.mrf.mxu0
      %v1567 = vadd.f32 0.0, %v1566
      %v1568 = vpop.f32.mrf.mxu0
      %1569 = vmatprep.mubr.bf16.mxu0 0
      %1570 = vmatmul.mubr.bf16.gmra.mxu0 %v1450
      %v1571 = vpop.f32.mrf.mxu0
      %v1572 = vadd.f32 0.0, %v1571
      %v1573 = vpop.f32.mrf.mxu0
      %v1574 = vpop.f32.mrf.mxu0
      %v1575 = vadd.f32 0.0, %v1574
      %v1576 = vpop.f32.mrf.mxu0
      %1577 = vmatprep.mubr.bf16.mxu0 0
      %1578 = vmatmul.mubr.bf16.gmra.mxu0 %v1453
      %v1579 = vpop.f32.mrf.mxu0
      %v1580 = vadd.f32 0.0, %v1579
      %v1581 = vpop.f32.mrf.mxu0
      %v1582 = vpop.f32.mrf.mxu0
      %v1583 = vadd.f32 0.0, %v1582
      %v1584 = vpop.f32.mrf.mxu0
      %1585 = vmatprep.mubr.bf16.mxu0 0
      %1586 = vmatmul.mubr.bf16.gmra.mxu0 %v1456
      %v1587 = vpop.f32.mrf.mxu0
      %v1588 = vadd.f32 0.0, %v1587
      %v1589 = vpop.f32.mrf.mxu0
      %v1590 = vpop.f32.mrf.mxu0
      %v1591 = vadd.f32 0.0, %v1590
      %v1592 = vpop.f32.mrf.mxu0
      %1593 = vmatprep.mubr.bf16.mxu0 0
      %1594 = vmatmul.mubr.bf16.gmra.mxu0 %v1459
      %v1595 = vpop.f32.mrf.mxu0
      %v1596 = vadd.f32 0.0, %v1595
      %v1597 = vpop.f32.mrf.mxu0
      %v1598 = vpop.f32.mrf.mxu0
      %v1599 = vadd.f32 0.0, %v1598
      %v1600 = vpop.f32.mrf.mxu0
      %1601 = vmatprep.mubr.bf16.mxu0 0
      %1602 = vmatmul.mubr.bf16.gmra.mxu0 %v1462
      %v1603 = vpop.f32.mrf.mxu0
      %v1604 = vadd.f32 0.0, %v1603
      %v1605 = vpop.f32.mrf.mxu0
      %v1606 = vpop.f32.mrf.mxu0
      %v1607 = vadd.f32 0.0, %v1606
      %v1608 = vpop.f32.mrf.mxu0
      %1609 = vmatprep.mubr.bf16.mxu0 0
      %1610 = vmatmul.mubr.bf16.gmra.mxu0 %v1465
      %v1611 = vpop.f32.mrf.mxu0
      %v1612 = vadd.f32 0.0, %v1611
      %v1613 = vpop.f32.mrf.mxu0
      %v1614 = vpop.f32.mrf.mxu0
      %v1615 = vadd.f32 0.0, %v1614
      %v1616 = vpop.f32.mrf.mxu0
      %1617 = vmatprep.mubr.bf16.mxu0 0
      %1618 = vmatmul.mubr.bf16.gmra.mxu0 %v1468
      %v1619 = vpop.f32.mrf.mxu0
      %v1620 = vadd.f32 0.0, %v1619
      %v1621 = vpop.f32.mrf.mxu0
      %v1622 = vpop.f32.mrf.mxu0
      %v1623 = vadd.f32 0.0, %v1622
      %v1624 = vpop.f32.mrf.mxu0
      %1625 = vmatprep.mubr.bf16.mxu0 0
      %1626 = vmatmul.mubr.bf16.gmra.mxu0 %v1471
      %v1627 = vpop.f32.mrf.mxu0
      %v1628 = vadd.f32 0.0, %v1627
      %v1629 = vpop.f32.mrf.mxu0
      %v1630 = vpop.f32.mrf.mxu0
      %v1631 = vadd.f32 0.0, %v1630
      %v1632 = vpop.f32.mrf.mxu0
      %1633 = vdwg.mxu0
      %v1634 = vadd.f32 %v1328, %v1508
      %v1635 = vadd.f32 %v1329, %v1511
      %v1636 = vadd.f32 %v1330, %v1516
      %v1637 = vadd.f32 %v1331, %v1519
      %v1638 = vadd.f32 %v1332, %v1524
      %v1639 = vadd.f32 %v1333, %v1527
      %v1640 = vadd.f32 %v1334, %v1532
      %v1641 = vadd.f32 %v1335, %v1535
      %v1642 = vadd.f32 %v1336, %v1540
      %v1643 = vadd.f32 %v1337, %v1543
      %v1644 = vadd.f32 %v1338, %v1548
      %v1645 = vadd.f32 %v1339, %v1551
      %v1646 = vadd.f32 %v1340, %v1556
      %v1647 = vadd.f32 %v1341, %v1559
      %v1648 = vadd.f32 %v1342, %v1564
      %v1649 = vadd.f32 %v1343, %v1567
      %v1650 = vadd.f32 %v1344, %v1572
      %v1651 = vadd.f32 %v1345, %v1575
      %v1652 = vadd.f32 %v1346, %v1580
      %v1653 = vadd.f32 %v1347, %v1583
      %v1654 = vadd.f32 %v1348, %v1588
      %v1655 = vadd.f32 %v1349, %v1591
      %v1656 = vadd.f32 %v1350, %v1596
      %v1657 = vadd.f32 %v1351, %v1599
      %v1658 = vadd.f32 %v1352, %v1604
      %v1659 = vadd.f32 %v1353, %v1607
      %v1660 = vadd.f32 %v1354, %v1612
      %v1661 = vadd.f32 %v1355, %v1615
      %v1662 = vadd.f32 %v1356, %v1620
      %v1663 = vadd.f32 %v1357, %v1623
      %v1664 = vadd.f32 %v1358, %v1628
      %v1665 = vadd.f32 %v1359, %v1631
      %v1666 = vld [vmem:[%s1053 + $0x2] sm:$0xff]
      %v1667 = vld [vmem:[%s1053 + $0xa] sm:$0xff]
      %v1668 = vld [vmem:[%s1053 + $0x1a] sm:$0xff]
      %v1669 = vld [vmem:[%s1053 + $0x22] sm:$0xff]
      %v1670 = vld [vmem:[%s1053 + $0x32] sm:$0xff]
      %v1671 = vld [vmem:[%s1053 + $0x3a] sm:$0xff]
      %v1672 = vld [vmem:[%s1053 + $0x4a] sm:$0xff]
      %v1673 = vld [vmem:[%s1053 + $0x52] sm:$0xff]
      %v1674 = vld [vmem:[%s1053 + $0x62] sm:$0xff]
      %v1675 = vld [vmem:[%s1053 + $0x6a] sm:$0xff]
      %v1676 = vld [vmem:[%s1053 + $0x7a] sm:$0xff]
      %v1677 = vld [vmem:[%s1053 + $0x82] sm:$0xff]
      %v1678 = vld [vmem:[%s1053 + $0x92] sm:$0xff]
      %v1679 = vld [vmem:[%s1053 + $0x9a] sm:$0xff]
      %v1680 = vld [vmem:[%s1053 + $0xaa] sm:$0xff]
      %v1681 = vld [vmem:[%s1053 + $0xb2] sm:$0xff]
      %v1682 = vld [vmem:[%s1053 + $0xc2] sm:$0xff]
      %v1683 = vld [vmem:[%s1053 + $0xca] sm:$0xff]
      %v1684 = vld [vmem:[%s1053 + $0xda] sm:$0xff]
      %v1685 = vld [vmem:[%s1053 + $0xe2] sm:$0xff]
      %v1686 = vld [vmem:[%s1053 + $0xf2] sm:$0xff]
      %v1687 = vld [vmem:[%s1053 + $0xfa] sm:$0xff]
      %v1688 = vld [vmem:[%s1053 + $0x10a] sm:$0xff]
      %v1689 = vld [vmem:[%s1053 + $0x112] sm:$0xff]
      %v1690 = vld [vmem:[%s1053 + $0x122] sm:$0xff]
      %v1691 = vld [vmem:[%s1053 + $0x12a] sm:$0xff]
      %v1692 = vld [vmem:[%s1053 + $0x13a] sm:$0xff]
      %v1693 = vld [vmem:[%s1053 + $0x142] sm:$0xff]
      %v1694 = vld [vmem:[%s1053 + $0x152] sm:$0xff]
      %v1695 = vld [vmem:[%s1053 + $0x15a] sm:$0xff]
      %v1696 = vld [vmem:[%s1053 + $0x16a] sm:$0xff]
      %v1697 = vld [vmem:[%s1053 + $0x172] sm:$0xff]
      %v1698 = vpack.c.bf16 %v1667, %v1666
      %v1699 = vpack.c.bf16 %v1669, %v1668
      %v1700 = vpack.c.bf16 %v1671, %v1670
      %v1701 = vpack.c.bf16 %v1673, %v1672
      %v1702 = vpack.c.bf16 %v1675, %v1674
      %v1703 = vpack.c.bf16 %v1677, %v1676
      %v1704 = vpack.c.bf16 %v1679, %v1678
      %v1705 = vpack.c.bf16 %v1681, %v1680
      %v1706 = vpack.c.bf16 %v1683, %v1682
      %v1707 = vpack.c.bf16 %v1685, %v1684
      %v1708 = vpack.c.bf16 %v1687, %v1686
      %v1709 = vpack.c.bf16 %v1689, %v1688
      %v1710 = vpack.c.bf16 %v1691, %v1690
      %v1711 = vpack.c.bf16 %v1693, %v1692
      %v1712 = vpack.c.bf16 %v1695, %v1694
      %v1713 = vpack.c.bf16 %v1697, %v1696
      %s1714 = scalar_lea.vmem %s1, 80
      %v1715 = vld [vmem:[%s1714] sm:$0xf]
      %v1716 = vld [vmem:[%s1714 + $0x4] sm:$0xf]
      %v1717 = vld [vmem:[%s1714 + $0x8] sm:$0xf]
      %v1718 = vld [vmem:[%s1714 + $0xc] sm:$0xf]
      %v1723 = vunpack.c.l.b16 %v1715
      %v1724 = vunpack.c.l.b16 %v1716
      %v1725 = vunpack.c.l.b16 %v1717
      %v1726 = vunpack.c.l.b16 %v1718
      %v1727 = vpack.c.b16 %v1724, %v1723
      %v1728 = vpack.c.b16 %v1726, %v1725
      %v1732 = vsel %vm316, %v1698, 0
      %v1735 = vsel %vm316, %v1699, 0
      %v1738 = vsel %vm316, %v1700, 0
      %v1741 = vsel %vm316, %v1701, 0
      %v1744 = vsel %vm316, %v1702, 0
      %v1747 = vsel %vm316, %v1703, 0
      %v1750 = vsel %vm316, %v1704, 0
      %v1753 = vsel %vm316, %v1705, 0
      %v1756 = vsel %vm316, %v1706, 0
      %v1759 = vsel %vm316, %v1707, 0
      %v1762 = vsel %vm316, %v1708, 0
      %v1765 = vsel %vm316, %v1709, 0
      %v1768 = vsel %vm316, %v1710, 0
      %v1771 = vsel %vm316, %v1711, 0
      %v1774 = vsel %vm316, %v1712, 0
      %v1777 = vsel %vm316, %v1713, 0
      %1779 = vmatprep.subr.bf16.mxu0 0
      %1780 = vmatpush1.bf16.msra.mxu0 0
      %1781 = vmatprep.subr.bf16.mxu0 0
      %1782 = vmatpush1.bf16.msra.mxu0 0
      %1783 = vmatprep.subr.bf16.mxu0 0
      %1784 = vmatpush1.bf16.msra.mxu0 0
      %1785 = vmatprep.subr.bf16.mxu0 0
      %1786 = vmatpush1.bf16.msra.mxu0 0
      %1787 = vmatprep.subr.bf16.mxu0 0
      %1788 = vmatpush1.bf16.msra.mxu0 0
      %1789 = vmatprep.subr.bf16.mxu0 0
      %1790 = vmatpush1.bf16.msra.mxu0 0
      %1791 = vmatprep.subr.bf16.mxu0 0
      %1792 = vmatpush1.bf16.msra.mxu0 %v1728
      %1793 = vmatprep.subr.bf16.mxu0 0
      %1794 = vmatpush1.bf16.msra.mxu0 %v1727
      %1795 = vmatprep.subr.bf16.mxu0 0
      %1796 = vmatpush2.bf16.msra.mxu0 0
      %1797 = vmatprep.subr.bf16.mxu0 0
      %1798 = vmatpush2.bf16.msra.mxu0 0
      %1799 = vmatprep.subr.bf16.mxu0 0
      %1800 = vmatpush2.bf16.msra.mxu0 0
      %1801 = vmatprep.subr.bf16.mxu0 0
      %1802 = vmatpush2.bf16.msra.mxu0 0
      %1803 = vmatprep.subr.bf16.mxu0 0
      %1804 = vmatpush2.bf16.msra.mxu0 0
      %1805 = vmatprep.subr.bf16.mxu0 0
      %1806 = vmatpush2.bf16.msra.mxu0 0
      %1807 = vmatprep.subr.bf16.mxu0 0
      %1808 = vmatpush2.bf16.msra.mxu0 0
      %1809 = vmatprep.subr.bf16.mxu0 0
      %1810 = vmatpush2.bf16.msra.mxu0 0
      %1811 = vmatprep.mubr.bf16.mxu0 0
      %1812 = vmatmul.mubr.bf16.gmra.mxu0 %v1732
      %v1813 = vpop.f32.mrf.mxu0
      %v1814 = vadd.f32 0.0, %v1813
      %v1815 = vpop.f32.mrf.mxu0
      %v1816 = vpop.f32.mrf.mxu0
      %v1817 = vadd.f32 0.0, %v1816
      %v1818 = vpop.f32.mrf.mxu0
      %1819 = vmatprep.mubr.bf16.mxu0 0
      %1820 = vmatmul.mubr.bf16.gmra.mxu0 %v1735
      %v1821 = vpop.f32.mrf.mxu0
      %v1822 = vadd.f32 0.0, %v1821
      %v1823 = vpop.f32.mrf.mxu0
      %v1824 = vpop.f32.mrf.mxu0
      %v1825 = vadd.f32 0.0, %v1824
      %v1826 = vpop.f32.mrf.mxu0
      %1827 = vmatprep.mubr.bf16.mxu0 0
      %1828 = vmatmul.mubr.bf16.gmra.mxu0 %v1738
      %v1829 = vpop.f32.mrf.mxu0
      %v1830 = vadd.f32 0.0, %v1829
      %v1831 = vpop.f32.mrf.mxu0
      %v1832 = vpop.f32.mrf.mxu0
      %v1833 = vadd.f32 0.0, %v1832
      %v1834 = vpop.f32.mrf.mxu0
      %1835 = vmatprep.mubr.bf16.mxu0 0
      %1836 = vmatmul.mubr.bf16.gmra.mxu0 %v1741
      %v1837 = vpop.f32.mrf.mxu0
      %v1838 = vadd.f32 0.0, %v1837
      %v1839 = vpop.f32.mrf.mxu0
      %v1840 = vpop.f32.mrf.mxu0
      %v1841 = vadd.f32 0.0, %v1840
      %v1842 = vpop.f32.mrf.mxu0
      %1843 = vmatprep.mubr.bf16.mxu0 0
      %1844 = vmatmul.mubr.bf16.gmra.mxu0 %v1744
      %v1845 = vpop.f32.mrf.mxu0
      %v1846 = vadd.f32 0.0, %v1845
      %v1847 = vpop.f32.mrf.mxu0
      %v1848 = vpop.f32.mrf.mxu0
      %v1849 = vadd.f32 0.0, %v1848
      %v1850 = vpop.f32.mrf.mxu0
      %1851 = vmatprep.mubr.bf16.mxu0 0
      %1852 = vmatmul.mubr.bf16.gmra.mxu0 %v1747
      %v1853 = vpop.f32.mrf.mxu0
      %v1854 = vadd.f32 0.0, %v1853
      %v1855 = vpop.f32.mrf.mxu0
      %v1856 = vpop.f32.mrf.mxu0
      %v1857 = vadd.f32 0.0, %v1856
      %v1858 = vpop.f32.mrf.mxu0
      %1859 = vmatprep.mubr.bf16.mxu0 0
      %1860 = vmatmul.mubr.bf16.gmra.mxu0 %v1750
      %v1861 = vpop.f32.mrf.mxu0
      %v1862 = vadd.f32 0.0, %v1861
      %v1863 = vpop.f32.mrf.mxu0
      %v1864 = vpop.f32.mrf.mxu0
      %v1865 = vadd.f32 0.0, %v1864
      %v1866 = vpop.f32.mrf.mxu0
      %1867 = vmatprep.mubr.bf16.mxu0 0
      %1868 = vmatmul.mubr.bf16.gmra.mxu0 %v1753
      %v1869 = vpop.f32.mrf.mxu0
      %v1870 = vadd.f32 0.0, %v1869
      %v1871 = vpop.f32.mrf.mxu0
      %v1872 = vpop.f32.mrf.mxu0
      %v1873 = vadd.f32 0.0, %v1872
      %v1874 = vpop.f32.mrf.mxu0
      %1875 = vmatprep.mubr.bf16.mxu0 0
      %1876 = vmatmul.mubr.bf16.gmra.mxu0 %v1756
      %v1877 = vpop.f32.mrf.mxu0
      %v1878 = vadd.f32 0.0, %v1877
      %v1879 = vpop.f32.mrf.mxu0
      %v1880 = vpop.f32.mrf.mxu0
      %v1881 = vadd.f32 0.0, %v1880
      %v1882 = vpop.f32.mrf.mxu0
      %1883 = vmatprep.mubr.bf16.mxu0 0
      %1884 = vmatmul.mubr.bf16.gmra.mxu0 %v1759
      %v1885 = vpop.f32.mrf.mxu0
      %v1886 = vadd.f32 0.0, %v1885
      %v1887 = vpop.f32.mrf.mxu0
      %v1888 = vpop.f32.mrf.mxu0
      %v1889 = vadd.f32 0.0, %v1888
      %v1890 = vpop.f32.mrf.mxu0
      %1891 = vmatprep.mubr.bf16.mxu0 0
      %1892 = vmatmul.mubr.bf16.gmra.mxu0 %v1762
      %v1893 = vpop.f32.mrf.mxu0
      %v1894 = vadd.f32 0.0, %v1893
      %v1895 = vpop.f32.mrf.mxu0
      %v1896 = vpop.f32.mrf.mxu0
      %v1897 = vadd.f32 0.0, %v1896
      %v1898 = vpop.f32.mrf.mxu0
      %1899 = vmatprep.mubr.bf16.mxu0 0
      %1900 = vmatmul.mubr.bf16.gmra.mxu0 %v1765
      %v1901 = vpop.f32.mrf.mxu0
      %v1902 = vadd.f32 0.0, %v1901
      %v1903 = vpop.f32.mrf.mxu0
      %v1904 = vpop.f32.mrf.mxu0
      %v1905 = vadd.f32 0.0, %v1904
      %v1906 = vpop.f32.mrf.mxu0
      %1907 = vmatprep.mubr.bf16.mxu0 0
      %1908 = vmatmul.mubr.bf16.gmra.mxu0 %v1768
      %v1909 = vpop.f32.mrf.mxu0
      %v1910 = vadd.f32 0.0, %v1909
      %v1911 = vpop.f32.mrf.mxu0
      %v1912 = vpop.f32.mrf.mxu0
      %v1913 = vadd.f32 0.0, %v1912
      %v1914 = vpop.f32.mrf.mxu0
      %1915 = vmatprep.mubr.bf16.mxu0 0
      %1916 = vmatmul.mubr.bf16.gmra.mxu0 %v1771
      %v1917 = vpop.f32.mrf.mxu0
      %v1918 = vadd.f32 0.0, %v1917
      %v1919 = vpop.f32.mrf.mxu0
      %v1920 = vpop.f32.mrf.mxu0
      %v1921 = vadd.f32 0.0, %v1920
      %v1922 = vpop.f32.mrf.mxu0
      %1923 = vmatprep.mubr.bf16.mxu0 0
      %1924 = vmatmul.mubr.bf16.gmra.mxu0 %v1774
      %v1925 = vpop.f32.mrf.mxu0
      %v1926 = vadd.f32 0.0, %v1925
      %v1927 = vpop.f32.mrf.mxu0
      %v1928 = vpop.f32.mrf.mxu0
      %v1929 = vadd.f32 0.0, %v1928
      %v1930 = vpop.f32.mrf.mxu0
      %1931 = vmatprep.mubr.bf16.mxu0 0
      %1932 = vmatmul.mubr.bf16.gmra.mxu0 %v1777
      %v1933 = vpop.f32.mrf.mxu0
      %v1934 = vadd.f32 0.0, %v1933
      %v1935 = vpop.f32.mrf.mxu0
      %v1936 = vpop.f32.mrf.mxu0
      %v1937 = vadd.f32 0.0, %v1936
      %v1938 = vpop.f32.mrf.mxu0
      %1939 = vdwg.mxu0
      %v1940 = vadd.f32 %v1634, %v1814
      %v1941 = vadd.f32 %v1635, %v1817
      %v1942 = vadd.f32 %v1636, %v1822
      %v1943 = vadd.f32 %v1637, %v1825
      %v1944 = vadd.f32 %v1638, %v1830
      %v1945 = vadd.f32 %v1639, %v1833
      %v1946 = vadd.f32 %v1640, %v1838
      %v1947 = vadd.f32 %v1641, %v1841
      %v1948 = vadd.f32 %v1642, %v1846
      %v1949 = vadd.f32 %v1643, %v1849
      %v1950 = vadd.f32 %v1644, %v1854
      %v1951 = vadd.f32 %v1645, %v1857
      %v1952 = vadd.f32 %v1646, %v1862
      %v1953 = vadd.f32 %v1647, %v1865
      %v1954 = vadd.f32 %v1648, %v1870
      %v1955 = vadd.f32 %v1649, %v1873
      %v1956 = vadd.f32 %v1650, %v1878
      %v1957 = vadd.f32 %v1651, %v1881
      %v1958 = vadd.f32 %v1652, %v1886
      %v1959 = vadd.f32 %v1653, %v1889
      %v1960 = vadd.f32 %v1654, %v1894
      %v1961 = vadd.f32 %v1655, %v1897
      %v1962 = vadd.f32 %v1656, %v1902
      %v1963 = vadd.f32 %v1657, %v1905
      %v1964 = vadd.f32 %v1658, %v1910
      %v1965 = vadd.f32 %v1659, %v1913
      %v1966 = vadd.f32 %v1660, %v1918
      %v1967 = vadd.f32 %v1661, %v1921
      %v1968 = vadd.f32 %v1662, %v1926
      %v1969 = vadd.f32 %v1663, %v1929
      %v1970 = vadd.f32 %v1664, %v1934
      %v1971 = vadd.f32 %v1665, %v1937
      %s1972 = scalar_lea.vmem %s192, 48
      %v1973 = vld [vmem:[%s1972] sm:$0xff]
      %v1974 = vld [vmem:[%s1972 + $0x8] sm:$0xff]
      %v1975 = vld [vmem:[%s1972 + $0x18] sm:$0xff]
      %v1976 = vld [vmem:[%s1972 + $0x20] sm:$0xff]
      %v1977 = vld [vmem:[%s1972 + $0x30] sm:$0xff]
      %v1978 = vld [vmem:[%s1972 + $0x38] sm:$0xff]
      %v1979 = vld [vmem:[%s1972 + $0x48] sm:$0xff]
      %v1980 = vld [vmem:[%s1972 + $0x50] sm:$0xff]
      %v1981 = vld [vmem:[%s1972 + $0x60] sm:$0xff]
      %v1982 = vld [vmem:[%s1972 + $0x68] sm:$0xff]
      %v1983 = vld [vmem:[%s1972 + $0x78] sm:$0xff]
      %v1984 = vld [vmem:[%s1972 + $0x80] sm:$0xff]
      %v1985 = vld [vmem:[%s1972 + $0x90] sm:$0xff]
      %v1986 = vld [vmem:[%s1972 + $0x98] sm:$0xff]
      %v1987 = vld [vmem:[%s1972 + $0xa8] sm:$0xff]
      %v1988 = vld [vmem:[%s1972 + $0xb0] sm:$0xff]
      %v1989 = vld [vmem:[%s1972 + $0xc0] sm:$0xff]
      %v1990 = vld [vmem:[%s1972 + $0xc8] sm:$0xff]
      %v1991 = vld [vmem:[%s1972 + $0xd8] sm:$0xff]
      %v1992 = vld [vmem:[%s1972 + $0xe0] sm:$0xff]
      %v1993 = vld [vmem:[%s1972 + $0xf0] sm:$0xff]
      %v1994 = vld [vmem:[%s1972 + $0xf8] sm:$0xff]
      %v1995 = vld [vmem:[%s1972 + $0x108] sm:$0xff]
      %v1996 = vld [vmem:[%s1972 + $0x110] sm:$0xff]
      %v1997 = vld [vmem:[%s1972 + $0x120] sm:$0xff]
      %v1998 = vld [vmem:[%s1972 + $0x128] sm:$0xff]
      %v1999 = vld [vmem:[%s1972 + $0x138] sm:$0xff]
      %v2000 = vld [vmem:[%s1972 + $0x140] sm:$0xff]
      %v2001 = vld [vmem:[%s1972 + $0x150] sm:$0xff]
      %v2002 = vld [vmem:[%s1972 + $0x158] sm:$0xff]
      %v2003 = vld [vmem:[%s1972 + $0x168] sm:$0xff]
      %v2004 = vld [vmem:[%s1972 + $0x170] sm:$0xff]
      %v2005 = vpack.c.bf16 %v1974, %v1973
      %v2006 = vpack.c.bf16 %v1976, %v1975
      %v2007 = vpack.c.bf16 %v1978, %v1977
      %v2008 = vpack.c.bf16 %v1980, %v1979
      %v2009 = vpack.c.bf16 %v1982, %v1981
      %v2010 = vpack.c.bf16 %v1984, %v1983
      %v2011 = vpack.c.bf16 %v1986, %v1985
      %v2012 = vpack.c.bf16 %v1988, %v1987
      %v2013 = vpack.c.bf16 %v1990, %v1989
      %v2014 = vpack.c.bf16 %v1992, %v1991
      %v2015 = vpack.c.bf16 %v1994, %v1993
      %v2016 = vpack.c.bf16 %v1996, %v1995
      %v2017 = vpack.c.bf16 %v1998, %v1997
      %v2018 = vpack.c.bf16 %v2000, %v1999
      %v2019 = vpack.c.bf16 %v2002, %v2001
      %v2020 = vpack.c.bf16 %v2004, %v2003
      %s2021 = scalar_lea.vmem %s1, 96
      %v2022 = vld [vmem:[%s2021] sm:$0xf]
      %v2023 = vld [vmem:[%s2021 + $0x4] sm:$0xf]
      %v2024 = vld [vmem:[%s2021 + $0x8] sm:$0xf]
      %v2025 = vld [vmem:[%s2021 + $0xc] sm:$0xf]
      %v2030 = vunpack.c.l.b16 %v2022
      %v2031 = vunpack.c.l.b16 %v2023
      %v2032 = vunpack.c.l.b16 %v2024
      %v2033 = vunpack.c.l.b16 %v2025
      %v2034 = vpack.c.b16 %v2031, %v2030
      %v2035 = vpack.c.b16 %v2033, %v2032
      %v2039 = vsel %vm316, %v2005, 0
      %v2042 = vsel %vm316, %v2006, 0
      %v2045 = vsel %vm316, %v2007, 0
      %v2048 = vsel %vm316, %v2008, 0
      %v2051 = vsel %vm316, %v2009, 0
      %v2054 = vsel %vm316, %v2010, 0
      %v2057 = vsel %vm316, %v2011, 0
      %v2060 = vsel %vm316, %v2012, 0
      %v2063 = vsel %vm316, %v2013, 0
      %v2066 = vsel %vm316, %v2014, 0
      %v2069 = vsel %vm316, %v2015, 0
      %v2072 = vsel %vm316, %v2016, 0
      %v2075 = vsel %vm316, %v2017, 0
      %v2078 = vsel %vm316, %v2018, 0
      %v2081 = vsel %vm316, %v2019, 0
      %v2084 = vsel %vm316, %v2020, 0
      %2086 = vmatprep.subr.bf16.mxu0 0
      %2087 = vmatpush1.bf16.msra.mxu0 0
      %2088 = vmatprep.subr.bf16.mxu0 0
      %2089 = vmatpush1.bf16.msra.mxu0 0
      %2090 = vmatprep.subr.bf16.mxu0 0
      %2091 = vmatpush1.bf16.msra.mxu0 0
      %2092 = vmatprep.subr.bf16.mxu0 0
      %2093 = vmatpush1.bf16.msra.mxu0 0
      %2094 = vmatprep.subr.bf16.mxu0 0
      %2095 = vmatpush1.bf16.msra.mxu0 0
      %2096 = vmatprep.subr.bf16.mxu0 0
      %2097 = vmatpush1.bf16.msra.mxu0 0
      %2098 = vmatprep.subr.bf16.mxu0 0
      %2099 = vmatpush1.bf16.msra.mxu0 %v2035
      %2100 = vmatprep.subr.bf16.mxu0 0
      %2101 = vmatpush1.bf16.msra.mxu0 %v2034
      %2102 = vmatprep.subr.bf16.mxu0 0
      %2103 = vmatpush2.bf16.msra.mxu0 0
      %2104 = vmatprep.subr.bf16.mxu0 0
      %2105 = vmatpush2.bf16.msra.mxu0 0
      %2106 = vmatprep.subr.bf16.mxu0 0
      %2107 = vmatpush2.bf16.msra.mxu0 0
      %2108 = vmatprep.subr.bf16.mxu0 0
      %2109 = vmatpush2.bf16.msra.mxu0 0
      %2110 = vmatprep.subr.bf16.mxu0 0
      %2111 = vmatpush2.bf16.msra.mxu0 0
      %2112 = vmatprep.subr.bf16.mxu0 0
      %2113 = vmatpush2.bf16.msra.mxu0 0
      %2114 = vmatprep.subr.bf16.mxu0 0
      %2115 = vmatpush2.bf16.msra.mxu0 0
      %2116 = vmatprep.subr.bf16.mxu0 0
      %2117 = vmatpush2.bf16.msra.mxu0 0
      %2118 = vmatprep.mubr.bf16.mxu0 0
      %2119 = vmatmul.mubr.bf16.gmra.mxu0 %v2039
      %v2120 = vpop.f32.mrf.mxu0
      %v2121 = vadd.f32 0.0, %v2120
      %v2122 = vpop.f32.mrf.mxu0
      %v2123 = vpop.f32.mrf.mxu0
      %v2124 = vadd.f32 0.0, %v2123
      %v2125 = vpop.f32.mrf.mxu0
      %2126 = vmatprep.mubr.bf16.mxu0 0
      %2127 = vmatmul.mubr.bf16.gmra.mxu0 %v2042
      %v2128 = vpop.f32.mrf.mxu0
      %v2129 = vadd.f32 0.0, %v2128
      %v2130 = vpop.f32.mrf.mxu0
      %v2131 = vpop.f32.mrf.mxu0
      %v2132 = vadd.f32 0.0, %v2131
      %v2133 = vpop.f32.mrf.mxu0
      %2134 = vmatprep.mubr.bf16.mxu0 0
      %2135 = vmatmul.mubr.bf16.gmra.mxu0 %v2045
      %v2136 = vpop.f32.mrf.mxu0
      %v2137 = vadd.f32 0.0, %v2136
      %v2138 = vpop.f32.mrf.mxu0
      %v2139 = vpop.f32.mrf.mxu0
      %v2140 = vadd.f32 0.0, %v2139
      %v2141 = vpop.f32.mrf.mxu0
      %2142 = vmatprep.mubr.bf16.mxu0 0
      %2143 = vmatmul.mubr.bf16.gmra.mxu0 %v2048
      %v2144 = vpop.f32.mrf.mxu0
      %v2145 = vadd.f32 0.0, %v2144
      %v2146 = vpop.f32.mrf.mxu0
      %v2147 = vpop.f32.mrf.mxu0
      %v2148 = vadd.f32 0.0, %v2147
      %v2149 = vpop.f32.mrf.mxu0
      %2150 = vmatprep.mubr.bf16.mxu0 0
      %2151 = vmatmul.mubr.bf16.gmra.mxu0 %v2051
      %v2152 = vpop.f32.mrf.mxu0
      %v2153 = vadd.f32 0.0, %v2152
      %v2154 = vpop.f32.mrf.mxu0
      %v2155 = vpop.f32.mrf.mxu0
      %v2156 = vadd.f32 0.0, %v2155
      %v2157 = vpop.f32.mrf.mxu0
      %2158 = vmatprep.mubr.bf16.mxu0 0
      %2159 = vmatmul.mubr.bf16.gmra.mxu0 %v2054
      %v2160 = vpop.f32.mrf.mxu0
      %v2161 = vadd.f32 0.0, %v2160
      %v2162 = vpop.f32.mrf.mxu0
      %v2163 = vpop.f32.mrf.mxu0
      %v2164 = vadd.f32 0.0, %v2163
      %v2165 = vpop.f32.mrf.mxu0
      %2166 = vmatprep.mubr.bf16.mxu0 0
      %2167 = vmatmul.mubr.bf16.gmra.mxu0 %v2057
      %v2168 = vpop.f32.mrf.mxu0
      %v2169 = vadd.f32 0.0, %v2168
      %v2170 = vpop.f32.mrf.mxu0
      %v2171 = vpop.f32.mrf.mxu0
      %v2172 = vadd.f32 0.0, %v2171
      %v2173 = vpop.f32.mrf.mxu0
      %2174 = vmatprep.mubr.bf16.mxu0 0
      %2175 = vmatmul.mubr.bf16.gmra.mxu0 %v2060
      %v2176 = vpop.f32.mrf.mxu0
      %v2177 = vadd.f32 0.0, %v2176
      %v2178 = vpop.f32.mrf.mxu0
      %v2179 = vpop.f32.mrf.mxu0
      %v2180 = vadd.f32 0.0, %v2179
      %v2181 = vpop.f32.mrf.mxu0
      %2182 = vmatprep.mubr.bf16.mxu0 0
      %2183 = vmatmul.mubr.bf16.gmra.mxu0 %v2063
      %v2184 = vpop.f32.mrf.mxu0
      %v2185 = vadd.f32 0.0, %v2184
      %v2186 = vpop.f32.mrf.mxu0
      %v2187 = vpop.f32.mrf.mxu0
      %v2188 = vadd.f32 0.0, %v2187
      %v2189 = vpop.f32.mrf.mxu0
      %2190 = vmatprep.mubr.bf16.mxu0 0
      %2191 = vmatmul.mubr.bf16.gmra.mxu0 %v2066
      %v2192 = vpop.f32.mrf.mxu0
      %v2193 = vadd.f32 0.0, %v2192
      %v2194 = vpop.f32.mrf.mxu0
      %v2195 = vpop.f32.mrf.mxu0
      %v2196 = vadd.f32 0.0, %v2195
      %v2197 = vpop.f32.mrf.mxu0
      %2198 = vmatprep.mubr.bf16.mxu0 0
      %2199 = vmatmul.mubr.bf16.gmra.mxu0 %v2069
      %v2200 = vpop.f32.mrf.mxu0
      %v2201 = vadd.f32 0.0, %v2200
      %v2202 = vpop.f32.mrf.mxu0
      %v2203 = vpop.f32.mrf.mxu0
      %v2204 = vadd.f32 0.0, %v2203
      %v2205 = vpop.f32.mrf.mxu0
      %2206 = vmatprep.mubr.bf16.mxu0 0
      %2207 = vmatmul.mubr.bf16.gmra.mxu0 %v2072
      %v2208 = vpop.f32.mrf.mxu0
      %v2209 = vadd.f32 0.0, %v2208
      %v2210 = vpop.f32.mrf.mxu0
      %v2211 = vpop.f32.mrf.mxu0
      %v2212 = vadd.f32 0.0, %v2211
      %v2213 = vpop.f32.mrf.mxu0
      %2214 = vmatprep.mubr.bf16.mxu0 0
      %2215 = vmatmul.mubr.bf16.gmra.mxu0 %v2075
      %v2216 = vpop.f32.mrf.mxu0
      %v2217 = vadd.f32 0.0, %v2216
      %v2218 = vpop.f32.mrf.mxu0
      %v2219 = vpop.f32.mrf.mxu0
      %v2220 = vadd.f32 0.0, %v2219
      %v2221 = vpop.f32.mrf.mxu0
      %2222 = vmatprep.mubr.bf16.mxu0 0
      %2223 = vmatmul.mubr.bf16.gmra.mxu0 %v2078
      %v2224 = vpop.f32.mrf.mxu0
      %v2225 = vadd.f32 0.0, %v2224
      %v2226 = vpop.f32.mrf.mxu0
      %v2227 = vpop.f32.mrf.mxu0
      %v2228 = vadd.f32 0.0, %v2227
      %v2229 = vpop.f32.mrf.mxu0
      %2230 = vmatprep.mubr.bf16.mxu0 0
      %2231 = vmatmul.mubr.bf16.gmra.mxu0 %v2081
      %v2232 = vpop.f32.mrf.mxu0
      %v2233 = vadd.f32 0.0, %v2232
      %v2234 = vpop.f32.mrf.mxu0
      %v2235 = vpop.f32.mrf.mxu0
      %v2236 = vadd.f32 0.0, %v2235
      %v2237 = vpop.f32.mrf.mxu0
      %2238 = vmatprep.mubr.bf16.mxu0 0
      %2239 = vmatmul.mubr.bf16.gmra.mxu0 %v2084
      %v2240 = vpop.f32.mrf.mxu0
      %v2241 = vadd.f32 0.0, %v2240
      %v2242 = vpop.f32.mrf.mxu0
      %v2243 = vpop.f32.mrf.mxu0
      %v2244 = vadd.f32 0.0, %v2243
      %v2245 = vpop.f32.mrf.mxu0
      %2246 = vdwg.mxu0
      %v2247 = vadd.f32 %v1940, %v2121
      %v2248 = vadd.f32 %v1941, %v2124
      %v2249 = vadd.f32 %v1942, %v2129
      %v2250 = vadd.f32 %v1943, %v2132
      %v2251 = vadd.f32 %v1944, %v2137
      %v2252 = vadd.f32 %v1945, %v2140
      %v2253 = vadd.f32 %v1946, %v2145
      %v2254 = vadd.f32 %v1947, %v2148
      %v2255 = vadd.f32 %v1948, %v2153
      %v2256 = vadd.f32 %v1949, %v2156
      %v2257 = vadd.f32 %v1950, %v2161
      %v2258 = vadd.f32 %v1951, %v2164
      %v2259 = vadd.f32 %v1952, %v2169
      %v2260 = vadd.f32 %v1953, %v2172
      %v2261 = vadd.f32 %v1954, %v2177
      %v2262 = vadd.f32 %v1955, %v2180
      %v2263 = vadd.f32 %v1956, %v2185
      %v2264 = vadd.f32 %v1957, %v2188
      %v2265 = vadd.f32 %v1958, %v2193
      %v2266 = vadd.f32 %v1959, %v2196
      %v2267 = vadd.f32 %v1960, %v2201
      %v2268 = vadd.f32 %v1961, %v2204
      %v2269 = vadd.f32 %v1962, %v2209
      %v2270 = vadd.f32 %v1963, %v2212
      %v2271 = vadd.f32 %v1964, %v2217
      %v2272 = vadd.f32 %v1965, %v2220
      %v2273 = vadd.f32 %v1966, %v2225
      %v2274 = vadd.f32 %v1967, %v2228
      %v2275 = vadd.f32 %v1968, %v2233
      %v2276 = vadd.f32 %v1969, %v2236
      %v2277 = vadd.f32 %v1970, %v2241
      %v2278 = vadd.f32 %v1971, %v2244
      %v2279 = vld [vmem:[%s1972 + $0x1] sm:$0xff]
      %v2280 = vld [vmem:[%s1972 + $0x9] sm:$0xff]
      %v2281 = vld [vmem:[%s1972 + $0x19] sm:$0xff]
      %v2282 = vld [vmem:[%s1972 + $0x21] sm:$0xff]
      %v2283 = vld [vmem:[%s1972 + $0x31] sm:$0xff]
      %v2284 = vld [vmem:[%s1972 + $0x39] sm:$0xff]
      %v2285 = vld [vmem:[%s1972 + $0x49] sm:$0xff]
      %v2286 = vld [vmem:[%s1972 + $0x51] sm:$0xff]
      %v2287 = vld [vmem:[%s1972 + $0x61] sm:$0xff]
      %v2288 = vld [vmem:[%s1972 + $0x69] sm:$0xff]
      %v2289 = vld [vmem:[%s1972 + $0x79] sm:$0xff]
      %v2290 = vld [vmem:[%s1972 + $0x81] sm:$0xff]
      %v2291 = vld [vmem:[%s1972 + $0x91] sm:$0xff]
      %v2292 = vld [vmem:[%s1972 + $0x99] sm:$0xff]
      %v2293 = vld [vmem:[%s1972 + $0xa9] sm:$0xff]
      %v2294 = vld [vmem:[%s1972 + $0xb1] sm:$0xff]
      %v2295 = vld [vmem:[%s1972 + $0xc1] sm:$0xff]
      %v2296 = vld [vmem:[%s1972 + $0xc9] sm:$0xff]
      %v2297 = vld [vmem:[%s1972 + $0xd9] sm:$0xff]
      %v2298 = vld [vmem:[%s1972 + $0xe1] sm:$0xff]
      %v2299 = vld [vmem:[%s1972 + $0xf1] sm:$0xff]
      %v2300 = vld [vmem:[%s1972 + $0xf9] sm:$0xff]
      %v2301 = vld [vmem:[%s1972 + $0x109] sm:$0xff]
      %v2302 = vld [vmem:[%s1972 + $0x111] sm:$0xff]
      %v2303 = vld [vmem:[%s1972 + $0x121] sm:$0xff]
      %v2304 = vld [vmem:[%s1972 + $0x129] sm:$0xff]
      %v2305 = vld [vmem:[%s1972 + $0x139] sm:$0xff]
      %v2306 = vld [vmem:[%s1972 + $0x141] sm:$0xff]
      %v2307 = vld [vmem:[%s1972 + $0x151] sm:$0xff]
      %v2308 = vld [vmem:[%s1972 + $0x159] sm:$0xff]
      %v2309 = vld [vmem:[%s1972 + $0x169] sm:$0xff]
      %v2310 = vld [vmem:[%s1972 + $0x171] sm:$0xff]
      %v2311 = vpack.c.bf16 %v2280, %v2279
      %v2312 = vpack.c.bf16 %v2282, %v2281
      %v2313 = vpack.c.bf16 %v2284, %v2283
      %v2314 = vpack.c.bf16 %v2286, %v2285
      %v2315 = vpack.c.bf16 %v2288, %v2287
      %v2316 = vpack.c.bf16 %v2290, %v2289
      %v2317 = vpack.c.bf16 %v2292, %v2291
      %v2318 = vpack.c.bf16 %v2294, %v2293
      %v2319 = vpack.c.bf16 %v2296, %v2295
      %v2320 = vpack.c.bf16 %v2298, %v2297
      %v2321 = vpack.c.bf16 %v2300, %v2299
      %v2322 = vpack.c.bf16 %v2302, %v2301
      %v2323 = vpack.c.bf16 %v2304, %v2303
      %v2324 = vpack.c.bf16 %v2306, %v2305
      %v2325 = vpack.c.bf16 %v2308, %v2307
      %v2326 = vpack.c.bf16 %v2310, %v2309
      %s2327 = scalar_lea.vmem %s1, 112
      %v2328 = vld [vmem:[%s2327] sm:$0xf]
      %v2329 = vld [vmem:[%s2327 + $0x4] sm:$0xf]
      %v2330 = vld [vmem:[%s2327 + $0x8] sm:$0xf]
      %v2331 = vld [vmem:[%s2327 + $0xc] sm:$0xf]
      %v2336 = vunpack.c.l.b16 %v2328
      %v2337 = vunpack.c.l.b16 %v2329
      %v2338 = vunpack.c.l.b16 %v2330
      %v2339 = vunpack.c.l.b16 %v2331
      %v2340 = vpack.c.b16 %v2337, %v2336
      %v2341 = vpack.c.b16 %v2339, %v2338
      %v2345 = vsel %vm316, %v2311, 0
      %v2348 = vsel %vm316, %v2312, 0
      %v2351 = vsel %vm316, %v2313, 0
      %v2354 = vsel %vm316, %v2314, 0
      %v2357 = vsel %vm316, %v2315, 0
      %v2360 = vsel %vm316, %v2316, 0
      %v2363 = vsel %vm316, %v2317, 0
      %v2366 = vsel %vm316, %v2318, 0
      %v2369 = vsel %vm316, %v2319, 0
      %v2372 = vsel %vm316, %v2320, 0
      %v2375 = vsel %vm316, %v2321, 0
      %v2378 = vsel %vm316, %v2322, 0
      %v2381 = vsel %vm316, %v2323, 0
      %v2384 = vsel %vm316, %v2324, 0
      %v2387 = vsel %vm316, %v2325, 0
      %v2390 = vsel %vm316, %v2326, 0
      %2392 = vmatprep.subr.bf16.mxu0 0
      %2393 = vmatpush1.bf16.msra.mxu0 0
      %2394 = vmatprep.subr.bf16.mxu0 0
      %2395 = vmatpush1.bf16.msra.mxu0 0
      %2396 = vmatprep.subr.bf16.mxu0 0
      %2397 = vmatpush1.bf16.msra.mxu0 0
      %2398 = vmatprep.subr.bf16.mxu0 0
      %2399 = vmatpush1.bf16.msra.mxu0 0
      %2400 = vmatprep.subr.bf16.mxu0 0
      %2401 = vmatpush1.bf16.msra.mxu0 0
      %2402 = vmatprep.subr.bf16.mxu0 0
      %2403 = vmatpush1.bf16.msra.mxu0 0
      %2404 = vmatprep.subr.bf16.mxu0 0
      %2405 = vmatpush1.bf16.msra.mxu0 %v2341
      %2406 = vmatprep.subr.bf16.mxu0 0
      %2407 = vmatpush1.bf16.msra.mxu0 %v2340
      %2408 = vmatprep.subr.bf16.mxu0 0
      %2409 = vmatpush2.bf16.msra.mxu0 0
      %2410 = vmatprep.subr.bf16.mxu0 0
      %2411 = vmatpush2.bf16.msra.mxu0 0
      %2412 = vmatprep.subr.bf16.mxu0 0
      %2413 = vmatpush2.bf16.msra.mxu0 0
      %2414 = vmatprep.subr.bf16.mxu0 0
      %2415 = vmatpush2.bf16.msra.mxu0 0
      %2416 = vmatprep.subr.bf16.mxu0 0
      %2417 = vmatpush2.bf16.msra.mxu0 0
      %2418 = vmatprep.subr.bf16.mxu0 0
      %2419 = vmatpush2.bf16.msra.mxu0 0
      %2420 = vmatprep.subr.bf16.mxu0 0
      %2421 = vmatpush2.bf16.msra.mxu0 0
      %2422 = vmatprep.subr.bf16.mxu0 0
      %2423 = vmatpush2.bf16.msra.mxu0 0
      %2424 = vmatprep.mubr.bf16.mxu0 0
      %2425 = vmatmul.mubr.bf16.gmra.mxu0 %v2345
      %v2426 = vpop.f32.mrf.mxu0
      %v2427 = vadd.f32 0.0, %v2426
      %v2428 = vpop.f32.mrf.mxu0
      %v2429 = vpop.f32.mrf.mxu0
      %v2430 = vadd.f32 0.0, %v2429
      %v2431 = vpop.f32.mrf.mxu0
      %2432 = vmatprep.mubr.bf16.mxu0 0
      %2433 = vmatmul.mubr.bf16.gmra.mxu0 %v2348
      %v2434 = vpop.f32.mrf.mxu0
      %v2435 = vadd.f32 0.0, %v2434
      %v2436 = vpop.f32.mrf.mxu0
      %v2437 = vpop.f32.mrf.mxu0
      %v2438 = vadd.f32 0.0, %v2437
      %v2439 = vpop.f32.mrf.mxu0
      %2440 = vmatprep.mubr.bf16.mxu0 0
      %2441 = vmatmul.mubr.bf16.gmra.mxu0 %v2351
      %v2442 = vpop.f32.mrf.mxu0
      %v2443 = vadd.f32 0.0, %v2442
      %v2444 = vpop.f32.mrf.mxu0
      %v2445 = vpop.f32.mrf.mxu0
      %v2446 = vadd.f32 0.0, %v2445
      %v2447 = vpop.f32.mrf.mxu0
      %2448 = vmatprep.mubr.bf16.mxu0 0
      %2449 = vmatmul.mubr.bf16.gmra.mxu0 %v2354
      %v2450 = vpop.f32.mrf.mxu0
      %v2451 = vadd.f32 0.0, %v2450
      %v2452 = vpop.f32.mrf.mxu0
      %v2453 = vpop.f32.mrf.mxu0
      %v2454 = vadd.f32 0.0, %v2453
      %v2455 = vpop.f32.mrf.mxu0
      %2456 = vmatprep.mubr.bf16.mxu0 0
      %2457 = vmatmul.mubr.bf16.gmra.mxu0 %v2357
      %v2458 = vpop.f32.mrf.mxu0
      %v2459 = vadd.f32 0.0, %v2458
      %v2460 = vpop.f32.mrf.mxu0
      %v2461 = vpop.f32.mrf.mxu0
      %v2462 = vadd.f32 0.0, %v2461
      %v2463 = vpop.f32.mrf.mxu0
      %2464 = vmatprep.mubr.bf16.mxu0 0
      %2465 = vmatmul.mubr.bf16.gmra.mxu0 %v2360
      %v2466 = vpop.f32.mrf.mxu0
      %v2467 = vadd.f32 0.0, %v2466
      %v2468 = vpop.f32.mrf.mxu0
      %v2469 = vpop.f32.mrf.mxu0
      %v2470 = vadd.f32 0.0, %v2469
      %v2471 = vpop.f32.mrf.mxu0
      %2472 = vmatprep.mubr.bf16.mxu0 0
      %2473 = vmatmul.mubr.bf16.gmra.mxu0 %v2363
      %v2474 = vpop.f32.mrf.mxu0
      %v2475 = vadd.f32 0.0, %v2474
      %v2476 = vpop.f32.mrf.mxu0
      %v2477 = vpop.f32.mrf.mxu0
      %v2478 = vadd.f32 0.0, %v2477
      %v2479 = vpop.f32.mrf.mxu0
      %2480 = vmatprep.mubr.bf16.mxu0 0
      %2481 = vmatmul.mubr.bf16.gmra.mxu0 %v2366
      %v2482 = vpop.f32.mrf.mxu0
      %v2483 = vadd.f32 0.0, %v2482
      %v2484 = vpop.f32.mrf.mxu0
      %v2485 = vpop.f32.mrf.mxu0
      %v2486 = vadd.f32 0.0, %v2485
      %v2487 = vpop.f32.mrf.mxu0
      %2488 = vmatprep.mubr.bf16.mxu0 0
      %2489 = vmatmul.mubr.bf16.gmra.mxu0 %v2369
      %v2490 = vpop.f32.mrf.mxu0
      %v2491 = vadd.f32 0.0, %v2490
      %v2492 = vpop.f32.mrf.mxu0
      %v2493 = vpop.f32.mrf.mxu0
      %v2494 = vadd.f32 0.0, %v2493
      %v2495 = vpop.f32.mrf.mxu0
      %2496 = vmatprep.mubr.bf16.mxu0 0
      %2497 = vmatmul.mubr.bf16.gmra.mxu0 %v2372
      %v2498 = vpop.f32.mrf.mxu0
      %v2499 = vadd.f32 0.0, %v2498
      %v2500 = vpop.f32.mrf.mxu0
      %v2501 = vpop.f32.mrf.mxu0
      %v2502 = vadd.f32 0.0, %v2501
      %v2503 = vpop.f32.mrf.mxu0
      %2504 = vmatprep.mubr.bf16.mxu0 0
      %2505 = vmatmul.mubr.bf16.gmra.mxu0 %v2375
      %v2506 = vpop.f32.mrf.mxu0
      %v2507 = vadd.f32 0.0, %v2506
      %v2508 = vpop.f32.mrf.mxu0
      %v2509 = vpop.f32.mrf.mxu0
      %v2510 = vadd.f32 0.0, %v2509
      %v2511 = vpop.f32.mrf.mxu0
      %2512 = vmatprep.mubr.bf16.mxu0 0
      %2513 = vmatmul.mubr.bf16.gmra.mxu0 %v2378
      %v2514 = vpop.f32.mrf.mxu0
      %v2515 = vadd.f32 0.0, %v2514
      %v2516 = vpop.f32.mrf.mxu0
      %v2517 = vpop.f32.mrf.mxu0
      %v2518 = vadd.f32 0.0, %v2517
      %v2519 = vpop.f32.mrf.mxu0
      %2520 = vmatprep.mubr.bf16.mxu0 0
      %2521 = vmatmul.mubr.bf16.gmra.mxu0 %v2381
      %v2522 = vpop.f32.mrf.mxu0
      %v2523 = vadd.f32 0.0, %v2522
      %v2524 = vpop.f32.mrf.mxu0
      %v2525 = vpop.f32.mrf.mxu0
      %v2526 = vadd.f32 0.0, %v2525
      %v2527 = vpop.f32.mrf.mxu0
      %2528 = vmatprep.mubr.bf16.mxu0 0
      %2529 = vmatmul.mubr.bf16.gmra.mxu0 %v2384
      %v2530 = vpop.f32.mrf.mxu0
      %v2531 = vadd.f32 0.0, %v2530
      %v2532 = vpop.f32.mrf.mxu0
      %v2533 = vpop.f32.mrf.mxu0
      %v2534 = vadd.f32 0.0, %v2533
      %v2535 = vpop.f32.mrf.mxu0
      %2536 = vmatprep.mubr.bf16.mxu0 0
      %2537 = vmatmul.mubr.bf16.gmra.mxu0 %v2387
      %v2538 = vpop.f32.mrf.mxu0
      %v2539 = vadd.f32 0.0, %v2538
      %v2540 = vpop.f32.mrf.mxu0
      %v2541 = vpop.f32.mrf.mxu0
      %v2542 = vadd.f32 0.0, %v2541
      %v2543 = vpop.f32.mrf.mxu0
      %2544 = vmatprep.mubr.bf16.mxu0 0
      %2545 = vmatmul.mubr.bf16.gmra.mxu0 %v2390
      %v2546 = vpop.f32.mrf.mxu0
      %v2547 = vadd.f32 0.0, %v2546
      %v2548 = vpop.f32.mrf.mxu0
      %v2549 = vpop.f32.mrf.mxu0
      %v2550 = vadd.f32 0.0, %v2549
      %v2551 = vpop.f32.mrf.mxu0
      %2552 = vdwg.mxu0
      %v2553 = vadd.f32 %v2247, %v2427
      %v2554 = vadd.f32 %v2248, %v2430
      %v2555 = vadd.f32 %v2249, %v2435
      %v2556 = vadd.f32 %v2250, %v2438
      %v2557 = vadd.f32 %v2251, %v2443
      %v2558 = vadd.f32 %v2252, %v2446
      %v2559 = vadd.f32 %v2253, %v2451
      %v2560 = vadd.f32 %v2254, %v2454
      %v2561 = vadd.f32 %v2255, %v2459
      %v2562 = vadd.f32 %v2256, %v2462
      %v2563 = vadd.f32 %v2257, %v2467
      %v2564 = vadd.f32 %v2258, %v2470
      %v2565 = vadd.f32 %v2259, %v2475
      %v2566 = vadd.f32 %v2260, %v2478
      %v2567 = vadd.f32 %v2261, %v2483
      %v2568 = vadd.f32 %v2262, %v2486
      %v2569 = vadd.f32 %v2263, %v2491
      %v2570 = vadd.f32 %v2264, %v2494
      %v2571 = vadd.f32 %v2265, %v2499
      %v2572 = vadd.f32 %v2266, %v2502
      %v2573 = vadd.f32 %v2267, %v2507
      %v2574 = vadd.f32 %v2268, %v2510
      %v2575 = vadd.f32 %v2269, %v2515
      %v2576 = vadd.f32 %v2270, %v2518
      %v2577 = vadd.f32 %v2271, %v2523
      %v2578 = vadd.f32 %v2272, %v2526
      %v2579 = vadd.f32 %v2273, %v2531
      %v2580 = vadd.f32 %v2274, %v2534
      %v2581 = vadd.f32 %v2275, %v2539
      %v2582 = vadd.f32 %v2276, %v2542
      %v2583 = vadd.f32 %v2277, %v2547
      %v2584 = vadd.f32 %v2278, %v2550
      %v2585 = vld [vmem:[%s1972 + $0x2] sm:$0xff]
      %v2586 = vld [vmem:[%s1972 + $0xa] sm:$0xff]
      %v2587 = vld [vmem:[%s1972 + $0x1a] sm:$0xff]
      %v2588 = vld [vmem:[%s1972 + $0x22] sm:$0xff]
      %v2589 = vld [vmem:[%s1972 + $0x32] sm:$0xff]
      %v2590 = vld [vmem:[%s1972 + $0x3a] sm:$0xff]
      %v2591 = vld [vmem:[%s1972 + $0x4a] sm:$0xff]
      %v2592 = vld [vmem:[%s1972 + $0x52] sm:$0xff]
      %v2593 = vld [vmem:[%s1972 + $0x62] sm:$0xff]
      %v2594 = vld [vmem:[%s1972 + $0x6a] sm:$0xff]
      %v2595 = vld [vmem:[%s1972 + $0x7a] sm:$0xff]
      %v2596 = vld [vmem:[%s1972 + $0x82] sm:$0xff]
      %v2597 = vld [vmem:[%s1972 + $0x92] sm:$0xff]
      %v2598 = vld [vmem:[%s1972 + $0x9a] sm:$0xff]
      %v2599 = vld [vmem:[%s1972 + $0xaa] sm:$0xff]
      %v2600 = vld [vmem:[%s1972 + $0xb2] sm:$0xff]
      %v2601 = vld [vmem:[%s1972 + $0xc2] sm:$0xff]
      %v2602 = vld [vmem:[%s1972 + $0xca] sm:$0xff]
      %v2603 = vld [vmem:[%s1972 + $0xda] sm:$0xff]
      %v2604 = vld [vmem:[%s1972 + $0xe2] sm:$0xff]
      %v2605 = vld [vmem:[%s1972 + $0xf2] sm:$0xff]
      %v2606 = vld [vmem:[%s1972 + $0xfa] sm:$0xff]
      %v2607 = vld [vmem:[%s1972 + $0x10a] sm:$0xff]
      %v2608 = vld [vmem:[%s1972 + $0x112] sm:$0xff]
      %v2609 = vld [vmem:[%s1972 + $0x122] sm:$0xff]
      %v2610 = vld [vmem:[%s1972 + $0x12a] sm:$0xff]
      %v2611 = vld [vmem:[%s1972 + $0x13a] sm:$0xff]
      %v2612 = vld [vmem:[%s1972 + $0x142] sm:$0xff]
      %v2613 = vld [vmem:[%s1972 + $0x152] sm:$0xff]
      %v2614 = vld [vmem:[%s1972 + $0x15a] sm:$0xff]
      %v2615 = vld [vmem:[%s1972 + $0x16a] sm:$0xff]
      %v2616 = vld [vmem:[%s1972 + $0x172] sm:$0xff]
      %v2617 = vpack.c.bf16 %v2586, %v2585
      %v2618 = vpack.c.bf16 %v2588, %v2587
      %v2619 = vpack.c.bf16 %v2590, %v2589
      %v2620 = vpack.c.bf16 %v2592, %v2591
      %v2621 = vpack.c.bf16 %v2594, %v2593
      %v2622 = vpack.c.bf16 %v2596, %v2595
      %v2623 = vpack.c.bf16 %v2598, %v2597
      %v2624 = vpack.c.bf16 %v2600, %v2599
      %v2625 = vpack.c.bf16 %v2602, %v2601
      %v2626 = vpack.c.bf16 %v2604, %v2603
      %v2627 = vpack.c.bf16 %v2606, %v2605
      %v2628 = vpack.c.bf16 %v2608, %v2607
      %v2629 = vpack.c.bf16 %v2610, %v2609
      %v2630 = vpack.c.bf16 %v2612, %v2611
      %v2631 = vpack.c.bf16 %v2614, %v2613
      %v2632 = vpack.c.bf16 %v2616, %v2615
      %s2633 = scalar_lea.vmem %s1, 128
      %v2634 = vld [vmem:[%s2633] sm:$0xf]
      %v2635 = vld [vmem:[%s2633 + $0x4] sm:$0xf]
      %v2636 = vld [vmem:[%s2633 + $0x8] sm:$0xf]
      %v2637 = vld [vmem:[%s2633 + $0xc] sm:$0xf]
      %v2642 = vunpack.c.l.b16 %v2634
      %v2643 = vunpack.c.l.b16 %v2635
      %v2644 = vunpack.c.l.b16 %v2636
      %v2645 = vunpack.c.l.b16 %v2637
      %v2646 = vpack.c.b16 %v2643, %v2642
      %v2647 = vpack.c.b16 %v2645, %v2644
      %v2651 = vsel %vm316, %v2617, 0
      %v2654 = vsel %vm316, %v2618, 0
      %v2657 = vsel %vm316, %v2619, 0
      %v2660 = vsel %vm316, %v2620, 0
      %v2663 = vsel %vm316, %v2621, 0
      %v2666 = vsel %vm316, %v2622, 0
      %v2669 = vsel %vm316, %v2623, 0
      %v2672 = vsel %vm316, %v2624, 0
      %v2675 = vsel %vm316, %v2625, 0
      %v2678 = vsel %vm316, %v2626, 0
      %v2681 = vsel %vm316, %v2627, 0
      %v2684 = vsel %vm316, %v2628, 0
      %v2687 = vsel %vm316, %v2629, 0
      %v2690 = vsel %vm316, %v2630, 0
      %v2693 = vsel %vm316, %v2631, 0
      %v2696 = vsel %vm316, %v2632, 0
      %2698 = vmatprep.subr.bf16.mxu0 0
      %2699 = vmatpush1.bf16.msra.mxu0 0
      %2700 = vmatprep.subr.bf16.mxu0 0
      %2701 = vmatpush1.bf16.msra.mxu0 0
      %2702 = vmatprep.subr.bf16.mxu0 0
      %2703 = vmatpush1.bf16.msra.mxu0 0
      %2704 = vmatprep.subr.bf16.mxu0 0
      %2705 = vmatpush1.bf16.msra.mxu0 0
      %2706 = vmatprep.subr.bf16.mxu0 0
      %2707 = vmatpush1.bf16.msra.mxu0 0
      %2708 = vmatprep.subr.bf16.mxu0 0
      %2709 = vmatpush1.bf16.msra.mxu0 0
      %2710 = vmatprep.subr.bf16.mxu0 0
      %2711 = vmatpush1.bf16.msra.mxu0 %v2647
      %2712 = vmatprep.subr.bf16.mxu0 0
      %2713 = vmatpush1.bf16.msra.mxu0 %v2646
      %2714 = vmatprep.subr.bf16.mxu0 0
      %2715 = vmatpush2.bf16.msra.mxu0 0
      %2716 = vmatprep.subr.bf16.mxu0 0
      %2717 = vmatpush2.bf16.msra.mxu0 0
      %2718 = vmatprep.subr.bf16.mxu0 0
      %2719 = vmatpush2.bf16.msra.mxu0 0
      %2720 = vmatprep.subr.bf16.mxu0 0
      %2721 = vmatpush2.bf16.msra.mxu0 0
      %2722 = vmatprep.subr.bf16.mxu0 0
      %2723 = vmatpush2.bf16.msra.mxu0 0
      %2724 = vmatprep.subr.bf16.mxu0 0
      %2725 = vmatpush2.bf16.msra.mxu0 0
      %2726 = vmatprep.subr.bf16.mxu0 0
      %2727 = vmatpush2.bf16.msra.mxu0 0
      %2728 = vmatprep.subr.bf16.mxu0 0
      %2729 = vmatpush2.bf16.msra.mxu0 0
      %2730 = vmatprep.mubr.bf16.mxu0 0
      %2731 = vmatmul.mubr.bf16.gmra.mxu0 %v2651
      %v2732 = vpop.f32.mrf.mxu0
      %v2733 = vadd.f32 0.0, %v2732
      %v2734 = vpop.f32.mrf.mxu0
      %v2735 = vpop.f32.mrf.mxu0
      %v2736 = vadd.f32 0.0, %v2735
      %v2737 = vpop.f32.mrf.mxu0
      %2738 = vmatprep.mubr.bf16.mxu0 0
      %2739 = vmatmul.mubr.bf16.gmra.mxu0 %v2654
      %v2740 = vpop.f32.mrf.mxu0
      %v2741 = vadd.f32 0.0, %v2740
      %v2742 = vpop.f32.mrf.mxu0
      %v2743 = vpop.f32.mrf.mxu0
      %v2744 = vadd.f32 0.0, %v2743
      %v2745 = vpop.f32.mrf.mxu0
      %2746 = vmatprep.mubr.bf16.mxu0 0
      %2747 = vmatmul.mubr.bf16.gmra.mxu0 %v2657
      %v2748 = vpop.f32.mrf.mxu0
      %v2749 = vadd.f32 0.0, %v2748
      %v2750 = vpop.f32.mrf.mxu0
      %v2751 = vpop.f32.mrf.mxu0
      %v2752 = vadd.f32 0.0, %v2751
      %v2753 = vpop.f32.mrf.mxu0
      %2754 = vmatprep.mubr.bf16.mxu0 0
      %2755 = vmatmul.mubr.bf16.gmra.mxu0 %v2660
      %v2756 = vpop.f32.mrf.mxu0
      %v2757 = vadd.f32 0.0, %v2756
      %v2758 = vpop.f32.mrf.mxu0
      %v2759 = vpop.f32.mrf.mxu0
      %v2760 = vadd.f32 0.0, %v2759
      %v2761 = vpop.f32.mrf.mxu0
      %2762 = vmatprep.mubr.bf16.mxu0 0
      %2763 = vmatmul.mubr.bf16.gmra.mxu0 %v2663
      %v2764 = vpop.f32.mrf.mxu0
      %v2765 = vadd.f32 0.0, %v2764
      %v2766 = vpop.f32.mrf.mxu0
      %v2767 = vpop.f32.mrf.mxu0
      %v2768 = vadd.f32 0.0, %v2767
      %v2769 = vpop.f32.mrf.mxu0
      %2770 = vmatprep.mubr.bf16.mxu0 0
      %2771 = vmatmul.mubr.bf16.gmra.mxu0 %v2666
      %v2772 = vpop.f32.mrf.mxu0
      %v2773 = vadd.f32 0.0, %v2772
      %v2774 = vpop.f32.mrf.mxu0
      %v2775 = vpop.f32.mrf.mxu0
      %v2776 = vadd.f32 0.0, %v2775
      %v2777 = vpop.f32.mrf.mxu0
      %2778 = vmatprep.mubr.bf16.mxu0 0
      %2779 = vmatmul.mubr.bf16.gmra.mxu0 %v2669
      %v2780 = vpop.f32.mrf.mxu0
      %v2781 = vadd.f32 0.0, %v2780
      %v2782 = vpop.f32.mrf.mxu0
      %v2783 = vpop.f32.mrf.mxu0
      %v2784 = vadd.f32 0.0, %v2783
      %v2785 = vpop.f32.mrf.mxu0
      %2786 = vmatprep.mubr.bf16.mxu0 0
      %2787 = vmatmul.mubr.bf16.gmra.mxu0 %v2672
      %v2788 = vpop.f32.mrf.mxu0
      %v2789 = vadd.f32 0.0, %v2788
      %v2790 = vpop.f32.mrf.mxu0
      %v2791 = vpop.f32.mrf.mxu0
      %v2792 = vadd.f32 0.0, %v2791
      %v2793 = vpop.f32.mrf.mxu0
      %2794 = vmatprep.mubr.bf16.mxu0 0
      %2795 = vmatmul.mubr.bf16.gmra.mxu0 %v2675
      %v2796 = vpop.f32.mrf.mxu0
      %v2797 = vadd.f32 0.0, %v2796
      %v2798 = vpop.f32.mrf.mxu0
      %v2799 = vpop.f32.mrf.mxu0
      %v2800 = vadd.f32 0.0, %v2799
      %v2801 = vpop.f32.mrf.mxu0
      %2802 = vmatprep.mubr.bf16.mxu0 0
      %2803 = vmatmul.mubr.bf16.gmra.mxu0 %v2678
      %v2804 = vpop.f32.mrf.mxu0
      %v2805 = vadd.f32 0.0, %v2804
      %v2806 = vpop.f32.mrf.mxu0
      %v2807 = vpop.f32.mrf.mxu0
      %v2808 = vadd.f32 0.0, %v2807
      %v2809 = vpop.f32.mrf.mxu0
      %2810 = vmatprep.mubr.bf16.mxu0 0
      %2811 = vmatmul.mubr.bf16.gmra.mxu0 %v2681
      %v2812 = vpop.f32.mrf.mxu0
      %v2813 = vadd.f32 0.0, %v2812
      %v2814 = vpop.f32.mrf.mxu0
      %v2815 = vpop.f32.mrf.mxu0
      %v2816 = vadd.f32 0.0, %v2815
      %v2817 = vpop.f32.mrf.mxu0
      %2818 = vmatprep.mubr.bf16.mxu0 0
      %2819 = vmatmul.mubr.bf16.gmra.mxu0 %v2684
      %v2820 = vpop.f32.mrf.mxu0
      %v2821 = vadd.f32 0.0, %v2820
      %v2822 = vpop.f32.mrf.mxu0
      %v2823 = vpop.f32.mrf.mxu0
      %v2824 = vadd.f32 0.0, %v2823
      %v2825 = vpop.f32.mrf.mxu0
      %2826 = vmatprep.mubr.bf16.mxu0 0
      %2827 = vmatmul.mubr.bf16.gmra.mxu0 %v2687
      %v2828 = vpop.f32.mrf.mxu0
      %v2829 = vadd.f32 0.0, %v2828
      %v2830 = vpop.f32.mrf.mxu0
      %v2831 = vpop.f32.mrf.mxu0
      %v2832 = vadd.f32 0.0, %v2831
      %v2833 = vpop.f32.mrf.mxu0
      %2834 = vmatprep.mubr.bf16.mxu0 0
      %2835 = vmatmul.mubr.bf16.gmra.mxu0 %v2690
      %v2836 = vpop.f32.mrf.mxu0
      %v2837 = vadd.f32 0.0, %v2836
      %v2838 = vpop.f32.mrf.mxu0
      %v2839 = vpop.f32.mrf.mxu0
      %v2840 = vadd.f32 0.0, %v2839
      %v2841 = vpop.f32.mrf.mxu0
      %2842 = vmatprep.mubr.bf16.mxu0 0
      %2843 = vmatmul.mubr.bf16.gmra.mxu0 %v2693
      %v2844 = vpop.f32.mrf.mxu0
      %v2845 = vadd.f32 0.0, %v2844
      %v2846 = vpop.f32.mrf.mxu0
      %v2847 = vpop.f32.mrf.mxu0
      %v2848 = vadd.f32 0.0, %v2847
      %v2849 = vpop.f32.mrf.mxu0
      %2850 = vmatprep.mubr.bf16.mxu0 0
      %2851 = vmatmul.mubr.bf16.gmra.mxu0 %v2696
      %v2852 = vpop.f32.mrf.mxu0
      %v2853 = vadd.f32 0.0, %v2852
      %v2854 = vpop.f32.mrf.mxu0
      %v2855 = vpop.f32.mrf.mxu0
      %v2856 = vadd.f32 0.0, %v2855
      %v2857 = vpop.f32.mrf.mxu0
      %2858 = vdwg.mxu0
      %v2859 = vadd.f32 %v2553, %v2733
      %v2860 = vadd.f32 %v2554, %v2736
      %v2861 = vadd.f32 %v2555, %v2741
      %v2862 = vadd.f32 %v2556, %v2744
      %v2863 = vadd.f32 %v2557, %v2749
      %v2864 = vadd.f32 %v2558, %v2752
      %v2865 = vadd.f32 %v2559, %v2757
      %v2866 = vadd.f32 %v2560, %v2760
      %v2867 = vadd.f32 %v2561, %v2765
      %v2868 = vadd.f32 %v2562, %v2768
      %v2869 = vadd.f32 %v2563, %v2773
      %v2870 = vadd.f32 %v2564, %v2776
      %v2871 = vadd.f32 %v2565, %v2781
      %v2872 = vadd.f32 %v2566, %v2784
      %v2873 = vadd.f32 %v2567, %v2789
      %v2874 = vadd.f32 %v2568, %v2792
      %v2875 = vadd.f32 %v2569, %v2797
      %v2876 = vadd.f32 %v2570, %v2800
      %v2877 = vadd.f32 %v2571, %v2805
      %v2878 = vadd.f32 %v2572, %v2808
      %v2879 = vadd.f32 %v2573, %v2813
      %v2880 = vadd.f32 %v2574, %v2816
      %v2881 = vadd.f32 %v2575, %v2821
      %v2882 = vadd.f32 %v2576, %v2824
      %v2883 = vadd.f32 %v2577, %v2829
      %v2884 = vadd.f32 %v2578, %v2832
      %v2885 = vadd.f32 %v2579, %v2837
      %v2886 = vadd.f32 %v2580, %v2840
      %v2887 = vadd.f32 %v2581, %v2845
      %v2888 = vadd.f32 %v2582, %v2848
      %v2889 = vadd.f32 %v2583, %v2853
      %v2890 = vadd.f32 %v2584, %v2856
      %v2891 = vld [vmem:[%s2] sm:$0x1]
      %v2892 = vld [vmem:[%s3] sm:$0x1]
      %v2894 = vlaneseq
      %v2895 = vshrl.u32 %v2894, 7
      %v2896 = vsub.s32 0, %v2895
      %v2897 = vrot.slane %v2891, %v2896
      %v2899 = vmul.f32 %v2859, %v2897
      %v2900 = vmul.f32 %v2860, %v2897
      %v2901 = vmul.f32 %v2861, %v2897
      %v2902 = vmul.f32 %v2862, %v2897
      %v2903 = vmul.f32 %v2863, %v2897
      %v2904 = vmul.f32 %v2864, %v2897
      %v2905 = vmul.f32 %v2865, %v2897
      %v2906 = vmul.f32 %v2866, %v2897
      %v2907 = vmul.f32 %v2867, %v2897
      %v2908 = vmul.f32 %v2868, %v2897
      %v2909 = vmul.f32 %v2869, %v2897
      %v2910 = vmul.f32 %v2870, %v2897
      %v2911 = vmul.f32 %v2871, %v2897
      %v2912 = vmul.f32 %v2872, %v2897
      %v2913 = vmul.f32 %v2873, %v2897
      %v2914 = vmul.f32 %v2874, %v2897
      %v2915 = vmul.f32 %v2875, %v2897
      %v2916 = vmul.f32 %v2876, %v2897
      %v2917 = vmul.f32 %v2877, %v2897
      %v2918 = vmul.f32 %v2878, %v2897
      %v2919 = vmul.f32 %v2879, %v2897
      %v2920 = vmul.f32 %v2880, %v2897
      %v2921 = vmul.f32 %v2881, %v2897
      %v2922 = vmul.f32 %v2882, %v2897
      %v2923 = vmul.f32 %v2883, %v2897
      %v2924 = vmul.f32 %v2884, %v2897
      %v2925 = vmul.f32 %v2885, %v2897
      %v2926 = vmul.f32 %v2886, %v2897
      %v2927 = vmul.f32 %v2887, %v2897
      %v2928 = vmul.f32 %v2888, %v2897
      %v2929 = vmul.f32 %v2889, %v2897
      %v2930 = vmul.f32 %v2890, %v2897
      %v2932 = vlaneseq
      %v2933 = vshrl.u32 %v2932, 7
      %v2934 = vsub.s32 0, %v2933
      %v2935 = vrot.slane %v2892, %v2934
      %v2937 = vadd.f32 %v2899, %v2935
      %v2938 = vadd.f32 %v2900, %v2935
      %v2939 = vadd.f32 %v2901, %v2935
      %v2940 = vadd.f32 %v2902, %v2935
      %v2941 = vadd.f32 %v2903, %v2935
      %v2942 = vadd.f32 %v2904, %v2935
      %v2943 = vadd.f32 %v2905, %v2935
      %v2944 = vadd.f32 %v2906, %v2935
      %v2945 = vadd.f32 %v2907, %v2935
      %v2946 = vadd.f32 %v2908, %v2935
      %v2947 = vadd.f32 %v2909, %v2935
      %v2948 = vadd.f32 %v2910, %v2935
      %v2949 = vadd.f32 %v2911, %v2935
      %v2950 = vadd.f32 %v2912, %v2935
      %v2951 = vadd.f32 %v2913, %v2935
      %v2952 = vadd.f32 %v2914, %v2935
      %v2953 = vadd.f32 %v2915, %v2935
      %v2954 = vadd.f32 %v2916, %v2935
      %v2955 = vadd.f32 %v2917, %v2935
      %v2956 = vadd.f32 %v2918, %v2935
      %v2957 = vadd.f32 %v2919, %v2935
      %v2958 = vadd.f32 %v2920, %v2935
      %v2959 = vadd.f32 %v2921, %v2935
      %v2960 = vadd.f32 %v2922, %v2935
      %v2961 = vadd.f32 %v2923, %v2935
      %v2962 = vadd.f32 %v2924, %v2935
      %v2963 = vadd.f32 %v2925, %v2935
      %v2964 = vadd.f32 %v2926, %v2935
      %v2965 = vadd.f32 %v2927, %v2935
      %v2966 = vadd.f32 %v2928, %v2935
      %v2967 = vadd.f32 %v2929, %v2935
      %v2968 = vadd.f32 %v2930, %v2935
      %v2969 = vmax.f32 %v2937, 0.0
      %v2970 = vmax.f32 %v2938, 0.0
      %v2971 = vmax.f32 %v2939, 0.0
      %v2972 = vmax.f32 %v2940, 0.0
      %v2973 = vmax.f32 %v2941, 0.0
      %v2974 = vmax.f32 %v2942, 0.0
      %v2975 = vmax.f32 %v2943, 0.0
      %v2976 = vmax.f32 %v2944, 0.0
      %v2977 = vmax.f32 %v2945, 0.0
      %v2978 = vmax.f32 %v2946, 0.0
      %v2979 = vmax.f32 %v2947, 0.0
      %v2980 = vmax.f32 %v2948, 0.0
      %v2981 = vmax.f32 %v2949, 0.0
      %v2982 = vmax.f32 %v2950, 0.0
      %v2983 = vmax.f32 %v2951, 0.0
      %v2984 = vmax.f32 %v2952, 0.0
      %v2985 = vmax.f32 %v2953, 0.0
      %v2986 = vmax.f32 %v2954, 0.0
      %v2987 = vmax.f32 %v2955, 0.0
      %v2988 = vmax.f32 %v2956, 0.0
      %v2989 = vmax.f32 %v2957, 0.0
      %v2990 = vmax.f32 %v2958, 0.0
      %v2991 = vmax.f32 %v2959, 0.0
      %v2992 = vmax.f32 %v2960, 0.0
      %v2993 = vmax.f32 %v2961, 0.0
      %v2994 = vmax.f32 %v2962, 0.0
      %v2995 = vmax.f32 %v2963, 0.0
      %v2996 = vmax.f32 %v2964, 0.0
      %v2997 = vmax.f32 %v2965, 0.0
      %v2998 = vmax.f32 %v2966, 0.0
      %v2999 = vmax.f32 %v2967, 0.0
      %v3000 = vmax.f32 %v2968, 0.0
      %v3001 = vpack.c.bf16 %v2970, %v2969
      %v3002 = vpack.c.bf16 %v2972, %v2971
      %v3003 = vpack.c.bf16 %v2974, %v2973
      %v3004 = vpack.c.bf16 %v2976, %v2975
      %v3005 = vpack.c.bf16 %v2978, %v2977
      %v3006 = vpack.c.bf16 %v2980, %v2979
      %v3007 = vpack.c.bf16 %v2982, %v2981
      %v3008 = vpack.c.bf16 %v2984, %v2983
      %v3009 = vpack.c.bf16 %v2986, %v2985
      %v3010 = vpack.c.bf16 %v2988, %v2987
      %v3011 = vpack.c.bf16 %v2990, %v2989
      %v3012 = vpack.c.bf16 %v2992, %v2991
      %v3013 = vpack.c.bf16 %v2994, %v2993
      %v3014 = vpack.c.bf16 %v2996, %v2995
      %v3015 = vpack.c.bf16 %v2998, %v2997
      %v3016 = vpack.c.bf16 %v3000, %v2999
      %v3033 = vunpack.c.l.b16 %v3001
      %v3034 = vunpack.c.h.b16 %v3001
      %v3035 = vunpack.c.l.b16 %v3002
      %v3036 = vunpack.c.h.b16 %v3002
      %v3037 = vunpack.c.l.b16 %v3003
      %v3038 = vunpack.c.h.b16 %v3003
      %v3039 = vunpack.c.l.b16 %v3004
      %v3040 = vunpack.c.h.b16 %v3004
      %v3041 = vunpack.c.l.b16 %v3005
      %v3042 = vunpack.c.h.b16 %v3005
      %v3043 = vunpack.c.l.b16 %v3006
      %v3044 = vunpack.c.h.b16 %v3006
      %v3045 = vunpack.c.l.b16 %v3007
      %v3046 = vunpack.c.h.b16 %v3007
      %v3047 = vunpack.c.l.b16 %v3008
      %v3048 = vunpack.c.h.b16 %v3008
      %v3049 = vunpack.c.l.b16 %v3009
      %v3050 = vunpack.c.h.b16 %v3009
      %v3051 = vunpack.c.l.b16 %v3010
      %v3052 = vunpack.c.h.b16 %v3010
      %v3053 = vunpack.c.l.b16 %v3011
      %v3054 = vunpack.c.h.b16 %v3011
      %v3055 = vunpack.c.l.b16 %v3012
      %v3056 = vunpack.c.h.b16 %v3012
      %v3057 = vunpack.c.l.b16 %v3013
      %v3058 = vunpack.c.h.b16 %v3013
      %v3059 = vunpack.c.l.b16 %v3014
      %v3060 = vunpack.c.h.b16 %v3014
      %v3061 = vunpack.c.l.b16 %v3015
      %v3062 = vunpack.c.h.b16 %v3015
      %v3063 = vunpack.c.l.b16 %v3016
      %v3064 = vunpack.c.h.b16 %v3016
      %v3065 = vpack.c.b16 %v3033, %v3033
      %v3066 = vpack.c.b16 %v3034, %v3034
      %v3067 = vpack.c.b16 %v3035, %v3035
      %v3068 = vpack.c.b16 %v3036, %v3036
      %v3069 = vpack.c.b16 %v3037, %v3037
      %v3070 = vpack.c.b16 %v3038, %v3038
      %v3071 = vpack.c.b16 %v3039, %v3039
      %v3072 = vpack.c.b16 %v3040, %v3040
      %v3073 = vpack.c.b16 %v3041, %v3041
      %v3074 = vpack.c.b16 %v3042, %v3042
      %v3075 = vpack.c.b16 %v3043, %v3043
      %v3076 = vpack.c.b16 %v3044, %v3044
      %v3077 = vpack.c.b16 %v3045, %v3045
      %v3078 = vpack.c.b16 %v3046, %v3046
      %v3079 = vpack.c.b16 %v3047, %v3047
      %v3080 = vpack.c.b16 %v3048, %v3048
      %v3081 = vpack.c.b16 %v3049, %v3049
      %v3082 = vpack.c.b16 %v3050, %v3050
      %v3083 = vpack.c.b16 %v3051, %v3051
      %v3084 = vpack.c.b16 %v3052, %v3052
      %v3085 = vpack.c.b16 %v3053, %v3053
      %v3086 = vpack.c.b16 %v3054, %v3054
      %v3087 = vpack.c.b16 %v3055, %v3055
      %v3088 = vpack.c.b16 %v3056, %v3056
      %v3089 = vpack.c.b16 %v3057, %v3057
      %v3090 = vpack.c.b16 %v3058, %v3058
      %v3091 = vpack.c.b16 %v3059, %v3059
      %v3092 = vpack.c.b16 %v3060, %v3060
      %v3093 = vpack.c.b16 %v3061, %v3061
      %v3094 = vpack.c.b16 %v3062, %v3062
      %v3095 = vpack.c.b16 %v3063, %v3063
      %v3096 = vpack.c.b16 %v3064, %v3064
      %vm3129 = vcmask 257024
      %3130 = vst.msk [vmem:[%s197] sm:$0xf] %vm3129, %v3065
      %3131 = vst.msk [vmem:[%s197 + $0x4] sm:$0xf] %vm3129, %v3066
      %3132 = vst.msk [vmem:[%s197 + $0x8] sm:$0xf] %vm3129, %v3067
      %3133 = vst.msk [vmem:[%s197 + $0xc] sm:$0xf] %vm3129, %v3068
      %3134 = vst.msk [vmem:[%s197 + $0x10] sm:$0xf] %vm3129, %v3069
      %3135 = vst.msk [vmem:[%s197 + $0x14] sm:$0xf] %vm3129, %v3070
      %3136 = vst.msk [vmem:[%s197 + $0x18] sm:$0xf] %vm3129, %v3071
      %3137 = vst.msk [vmem:[%s197 + $0x1c] sm:$0xf] %vm3129, %v3072
      %3138 = vst.msk [vmem:[%s197 + $0x20] sm:$0xf] %vm3129, %v3073
      %3139 = vst.msk [vmem:[%s197 + $0x24] sm:$0xf] %vm3129, %v3074
      %3140 = vst.msk [vmem:[%s197 + $0x28] sm:$0xf] %vm3129, %v3075
      %3141 = vst.msk [vmem:[%s197 + $0x2c] sm:$0xf] %vm3129, %v3076
      %3142 = vst.msk [vmem:[%s197 + $0x30] sm:$0xf] %vm3129, %v3077
      %3143 = vst.msk [vmem:[%s197 + $0x34] sm:$0xf] %vm3129, %v3078
      %3144 = vst.msk [vmem:[%s197 + $0x38] sm:$0xf] %vm3129, %v3079
      %3145 = vst.msk [vmem:[%s197 + $0x3c] sm:$0xf] %vm3129, %v3080
      %3146 = vst.msk [vmem:[%s197 + $0x40] sm:$0xf] %vm3129, %v3081
      %3147 = vst.msk [vmem:[%s197 + $0x44] sm:$0xf] %vm3129, %v3082
      %3148 = vst.msk [vmem:[%s197 + $0x48] sm:$0xf] %vm3129, %v3083
      %3149 = vst.msk [vmem:[%s197 + $0x4c] sm:$0xf] %vm3129, %v3084
      %3150 = vst.msk [vmem:[%s197 + $0x50] sm:$0xf] %vm3129, %v3085
      %3151 = vst.msk [vmem:[%s197 + $0x54] sm:$0xf] %vm3129, %v3086
      %3152 = vst.msk [vmem:[%s197 + $0x58] sm:$0xf] %vm3129, %v3087
      %3153 = vst.msk [vmem:[%s197 + $0x5c] sm:$0xf] %vm3129, %v3088
      %3154 = vst.msk [vmem:[%s197 + $0x60] sm:$0xf] %vm3129, %v3089
      %3155 = vst.msk [vmem:[%s197 + $0x64] sm:$0xf] %vm3129, %v3090
      %3156 = vst.msk [vmem:[%s197 + $0x68] sm:$0xf] %vm3129, %v3091
      %3157 = vst.msk [vmem:[%s197 + $0x6c] sm:$0xf] %vm3129, %v3092
      %3158 = vst.msk [vmem:[%s197 + $0x70] sm:$0xf] %vm3129, %v3093
      %3159 = vst.msk [vmem:[%s197 + $0x74] sm:$0xf] %vm3129, %v3094
      %3160 = vst.msk [vmem:[%s197 + $0x78] sm:$0xf] %vm3129, %v3095
      %3161 = vst.msk [vmem:[%s197 + $0x7c] sm:$0xf] %vm3129, %v3096
      %p3162 = scmp.lt.s32.totalorder %s15, 1
      %s3163 = scalar_select %p3162, %s15, 1
      %s3164 = smul.addr %s3163, 32
      %s3165 = smul.addr %s3164, 4
      %s3166 = scalar_lea.vmem %s4, %s3165
      // Predicated region
      $region37: #{_lambda_.6} parent=35 // pred_check
        %p3167 = pneg %p122
      $region38: #{_lambda_.6} parent=35 // pred_check_branch
        %3169 = sbr.rel (%p3167) target = $region40
      $region39: #{_lambda_.6} parent=35 // pred_region
        _
      $region40: #{_lambda_.6} parent=35 // pred_fallthru
        _
    $region36: #{_lambda_.6} parent=5 // pred_fallthru
      _
    %p3170 = scmp.le.s32.totalorder 2, %s10
    // Predicated region
    $region41: #{_lambda_.6} parent=5 // pred_check
      %p3171 = pneg %p3170
    $region42: #{_lambda_.6} parent=5 // pred_check_branch
      %3173 = sbr.rel (%p3171) target = $region44
    $region43: #{_lambda_.6} parent=5 // pred_region
      %s3174 = ssub.s32 %s10, 2
      // Predicated region
      $region45: #{_lambda_.6} parent=43 // pred_check
        %p3175 = pneg %p128
      $region46: #{_lambda_.6} parent=43 // pred_check_branch
        %3177 = sbr.rel (%p3175) target = $region48
      $region47: #{_lambda_.6} parent=43 // pred_region
        %p3178 = scmp.lt.s32.totalorder %s16, 1
        %s3179 = scalar_select %p3178, %s16, 1
        %s3180 = smul.addr %s3179, 32
        %s3181 = smul.addr %s3180, 4
        %s3182 = scalar_lea.vmem %s4, %s3181
      $region48: #{_lambda_.6} parent=43 // pred_fallthru
        _
    $region44: #{_lambda_.6} parent=5 // pred_fallthru
      _
  $region6: #{_lambda_.6} parent=0 // loop_footer
    %s14 = sadd.s32 1, %s10
  $region7: #{_lambda_.6} parent=0 // loop_footer_branch
    %9 = sbr.rel target = $region3
  $region8: #{_lambda_.6} parent=0 // loop_exit
    _

</llo_original>
